<compile_context>
chip_gen: v5e
topology: v5e:2x2
jax: 0.10.0
libtpu: 0.0.40
codegen_flags: <defaults>
</compile_context>

<pallas_src>
import numpy as np
import jax
import jax.numpy as jnp
from jax.experimental import pallas as pl

BN_EPS = 1e-5
_HI = jax.lax.Precision.HIGHEST     # only for tiny exact selector matmuls + reference
_F32 = jnp.float32
_BF16 = jnp.bfloat16


def _round_up(x, m):
    return (x + m - 1) // m * m


# ----------------------------------------------------------------------------
# Wrapper-side constant construction (traced once under jit / numpy constants).
# ----------------------------------------------------------------------------
def _banded_conv_weights(w, w_in, lanes_out):
    """HWIO (3,3,Cin,Cout) -> (w_in*Cin, 3*lanes_out) block-banded matrix.

    One lane-padded band per kernel row dy, concatenated along output columns:
    band_dy[(j+dx)*Cin + ci, j*Cout + co] = w[dy, dx, ci, co]; zero elsewhere
    (including the padding columns lanes >= w_out*Cout)."""
    kh, kw, cin, cout = w.shape
    w_out = w_in - kw + 1
    p = jnp.arange(w_in)
    j = jnp.arange(w_out)
    dx = jnp.arange(kw)
    sel = (p[None, :, None] == j[None, None, :] + dx[:, None, None]).astype(w.dtype)
    band = jnp.einsum("xpj,yxio->ypijo", sel, w, precision=_HI)   # (kh,w_in,cin,w_out,cout)
    band = band.reshape(kh, w_in * cin, w_out * cout)
    band = jnp.pad(band, ((0, 0), (0, 0), (0, lanes_out - w_out * cout)))
    return jnp.concatenate([band[y] for y in range(kh)], axis=1)  # (w_in*cin, kh*lanes_out)


def _hi_lo(b):
    """fp32 -> (bf16 hi, bf16 lo) split; hi+lo reconstructs ~16 mantissa bits."""
    hi = b.astype(_BF16)
    lo = (b - hi.astype(_F32)).astype(_BF16)
    return hi, lo


def _chan_selector(width, cout, lanes):
    """(lanes, cout) 0/1 matrix: sums the `width` same-channel lane blocks."""
    s = np.zeros((lanes, cout), np.float32)
    for j in range(width):
        s[j * cout:(j + 1) * cout, :] = np.eye(cout, dtype=np.float32)
    return s


def _pool_row_selectors(n, ho, hp):
    """(n*hp, n*ho) 0/1 matrices picking even / odd rows within each image block."""
    pe = np.zeros((n * hp, n * ho), np.float32)
    po = np.zeros((n * hp, n * ho), np.float32)
    for i in range(n):
        for r in range(hp):
            pe[i * hp + r, i * ho + 2 * r] = 1.0
            po[i * hp + r, i * ho + 2 * r + 1] = 1.0
    return pe, po


def _pool_col_selectors(wp, cout, lanes_in, lanes_out):
    """(lanes_in, lanes_out) 0/1 matrices gathering even / odd column blocks into a
    lane-dense (and zero-padded to lanes_out) pooled layout."""
    ge = np.zeros((lanes_in, lanes_out), np.float32)
    go = np.zeros((lanes_in, lanes_out), np.float32)
    for k in range(wp):
        for c in range(cout):
            ge[(2 * k) * cout + c, k * cout + c] = 1.0
            go[(2 * k + 1) * cout + c, k * cout + c] = 1.0
    return ge, go


# ----------------------------------------------------------------------------
# Single fused Pallas kernel: conv1 -> BN1/ReLU -> conv2 -> BN2/ReLU -> (fm, maxpool).
# ----------------------------------------------------------------------------
def _make_kernel(n, h, w, cin, cout):
    del cin  # only enters via the input's lane width
    ho1, wo1 = h - 2, w - 2
    ho2, wo2 = ho1 - 2, wo1 - 2
    hp = ho2 // 2
    wp = wo2 // 2
    lanes1 = _round_up(wo1 * cout, 128)
    lanes2 = _round_up(wo2 * cout, 128)
    lanesp = _round_up(wp * cout, 128)
    inv_cnt1 = 1.0 / float(n * ho1 * wo1)
    inv_cnt2 = 1.0 / float(n * ho2 * wo2)

    def split(x):
        hi = x.astype(_BF16)
        lo = (x - hi.astype(_F32)).astype(_BF16)
        return hi, lo

    def conv(x, wh, wl, h_in, ho, lanes):
        # bf16x3 ("HIGH"-equivalent) conv matmul: 3 single-pass bf16 MXU pushes over
        # the batch-folded (n*h_in, K) activation against the concatenated 3-band
        # weight matrix (K, 3*lanes).  ~f32 accurate; BN re-normalizes afterwards.
        xh, xl = split(x)
        y = (jnp.dot(xh, wh, preferred_element_type=_F32)
             + jnp.dot(xl, wh, preferred_element_type=_F32)
             + jnp.dot(xh, wl, preferred_element_type=_F32))       # (n*h_in, 3*lanes)
        y0 = y[:, 0 * lanes:1 * lanes]
        y1 = y[:, 1 * lanes:2 * lanes]
        y2 = y[:, 2 * lanes:3 * lanes]
        parts = []
        for i in range(n):                                         # static, tiny (n=2)
            b = i * h_in
            parts.append(y0[b:b + ho] + y1[b + 1:b + 1 + ho] + y2[b + 2:b + 2 + ho])
        return jnp.concatenate(parts, axis=0) if n > 1 else parts[0]   # (n*ho, lanes)

    def bn_relu(y, s_sel, sT_sel, gamma, beta, inv_cnt):
        # Training-mode BatchNorm2d (batch stats, biased variance) + affine, then ReLU.
        # Channel totals and the lane replication of scale/shift run as tiny EXACT 0/1
        # selector matmuls on the MXU (zero-padding lanes stay exactly zero).
        row_s = jnp.sum(y, axis=0, keepdims=True)                  # (1, lanes)
        row_ss = jnp.sum(y * y, axis=0, keepdims=True)             # (1, lanes)
        stats = jnp.dot(jnp.concatenate([row_s, row_ss], axis=0), s_sel,
                        preferred_element_type=_F32, precision=_HI)        # (2, cout)
        mean_c = stats[0:1] * inv_cnt
        var_c = stats[1:2] * inv_cnt - mean_c * mean_c             # biased variance
        scale_c = jax.lax.rsqrt(var_c + BN_EPS) * gamma
        shift_c = beta - mean_c * scale_c
        rep = jnp.dot(jnp.concatenate([scale_c, shift_c], axis=0), sT_sel,
                      preferred_element_type=_F32, precision=_HI)           # (2, lanes)
        return jnp.maximum(y * rep[0:1] + rep[1:2], 0.0)

    def kernel(x_ref, w1h_ref, w1l_ref, w2h_ref, w2l_ref,
               s1_ref, s1t_ref, s2_ref, s2t_ref,
               g1_ref, be1_ref, g2_ref, be2_ref,
               pre_ref, pro_ref, pce_ref, pco_ref,
               fm_ref, pool_ref):
        # Hoisted single loads of all invariant operands.
        x = x_ref[...]                                             # (n*h, w*cin)
        a1 = bn_relu(conv(x, w1h_ref[...], w1l_ref[...], h, ho1, lanes1),
                     s1_ref[...], s1t_ref[...], g1_ref[...], be1_ref[...], inv_cnt1)
        a2 = bn_relu(conv(a1, w2h_ref[...], w2l_ref[...], ho1, ho2, lanes2),
                     s2_ref[...], s2t_ref[...], g2_ref[...], be2_ref[...], inv_cnt2)

        # Lane-dense (128-wide, zero-padded by construction) feature-map writeback.
        fm_ref[...] = a2                                           # (n*ho2, lanes2)

        # 2x2 / stride-2 max pool: row-pair max via two exact row-selector matmuls,
        # then column-pair max + even-block gather + pad-to-128 via two exact
        # column-selector matmuls.  Everything runs on the MXU; no lane shuffles.
        r_e = jnp.dot(pre_ref[...], a2, preferred_element_type=_F32, precision=_HI)
        r_o = jnp.dot(pro_ref[...], a2, preferred_element_type=_F32, precision=_HI)
        rmax = jnp.maximum(r_e, r_o)                               # (n*hp, lanes2)
        c_e = jnp.dot(rmax, pce_ref[...], preferred_element_type=_F32, precision=_HI)
        c_o = jnp.dot(rmax, pco_ref[...], preferred_element_type=_F32, precision=_HI)
        pool_ref[...] = jnp.maximum(c_e, c_o)                      # (n*hp, lanesp)

    out_shapes = (jax.ShapeDtypeStruct((n * ho2, lanes2), _F32),
                  jax.ShapeDtypeStruct((n * hp, lanesp), _F32))
    return kernel, out_shapes


# ----------------------------------------------------------------------------
# Full UNet_DownBlock forward (NCHW in / NCHW out, matching the PyTorch module).
# ----------------------------------------------------------------------------
@jax.jit
def unet_down_block(x_nchw, params):
    n, cin, h, w = x_nchw.shape
    cout = params["w1"].shape[-1]
    ho1, wo1 = h - 2, w - 2
    ho2, wo2 = ho1 - 2, wo1 - 2
    hp, wp = ho2 // 2, wo2 // 2
    l2, lp = wo2 * cout, wp * cout
    lanes1 = _round_up(wo1 * cout, 128)
    lanes2 = _round_up(l2, 128)
    lanesp = _round_up(lp, 128)

    # NCHW -> batch-folded row layout (rows = N*H, lanes = W*Cin, channel fastest).
    x2d = jnp.transpose(x_nchw, (0, 2, 3, 1)).reshape(n * h, w * cin).astype(_F32)

    # Block-banded conv weights, lane-padded to 128-wide outputs, split into bf16
    # hi/lo halves for the 3-pass conv matmuls.
    b1 = _banded_conv_weights(params["w1"].astype(_F32), w, lanes1)       # (w*cin, 3*lanes1)
    b2 = _banded_conv_weights(params["w2"].astype(_F32), wo1, lanes2)     # (wo1*cout, 3*lanes2)
    b2 = jnp.pad(b2, ((0, lanes1 - wo1 * cout), (0, 0)))                  # K matches lanes1
    w1h, w1l = _hi_lo(b1)
    w2h, w2l = _hi_lo(b2)

    # Exact 0/1 selector matrices (compile-time numpy constants).
    s1 = _chan_selector(wo1, cout, lanes1)
    s2 = _chan_selector(wo2, cout, lanes2)
    pr_e, pr_o = _pool_row_selectors(n, ho2, hp)
    pc_e, pc_o = _pool_col_selectors(wp, cout, lanes2, lanesp)

    g1 = params["g1"].reshape(1, cout).astype(_F32)
    be1 = params["be1"].reshape(1, cout).astype(_F32)
    g2 = params["g2"].reshape(1, cout).astype(_F32)
    be2 = params["be2"].reshape(1, cout).astype(_F32)
    # params["b1"] / params["b2"] (conv biases) are exactly cancelled by the
    # training-mode BatchNorm mean subtraction, so they are not fed to the kernel.

    kernel, out_shapes = _make_kernel(n, h, w, cin, cout)
    # No grid: every operand is a single whole-array VMEM block (total << 1 MiB here).
    fm2d, pool2d = pl.pallas_call(kernel, out_shape=out_shapes)(
        x2d, w1h, w1l, w2h, w2l,
        s1, s1.T, s2, s2.T,
        g1, be1, g2, be2,
        pr_e, pr_o, pc_e, pc_o)

    fmap = jnp.transpose(fm2d[:, :l2].reshape(n, ho2, wo2, cout), (0, 3, 1, 2))    # NCHW
    pooled = jnp.transpose(pool2d[:, :lp].reshape(n, hp, wp, cout), (0, 3, 1, 2))  # NCHW
    return pooled, fmap


# ----------------------------------------------------------------------------
# Pure-JAX reference (faithful to the PyTorch module, incl. conv bias) for sanity.
# ----------------------------------------------------------------------------
def ref_forward(x_nchw, params):
    def conv(x, w, b):
        y = jax.lax.conv_general_dilated(
            x, w, window_strides=(1, 1), padding="VALID",
            dimension_numbers=("NHWC", "HWIO", "NHWC"), precision=_HI)
        return y + b

    def bn_relu(y, g, be):
        mean = jnp.mean(y, axis=(0, 1, 2), keepdims=True)
        var = jnp.mean(jnp.square(y - mean), axis=(0, 1, 2), keepdims=True)
        return jnp.maximum((y - mean) * jax.lax.rsqrt(var + BN_EPS) * g + be, 0.0)

    def pool(y):
        nn_, hh, ww, c = y.shape
        return jnp.max(y.reshape(nn_, hh // 2, 2, ww // 2, 2, c), axis=(2, 4))

    x = jnp.transpose(x_nchw, (0, 2, 3, 1))
    y = bn_relu(conv(x, params["w1"], params["b1"]), params["g1"], params["be1"])
    y = bn_relu(conv(y, params["w2"], params["b2"]), params["g2"], params["be2"])
    fm = y
    p = pool(y)
    return jnp.transpose(p, (0, 3, 1, 2)), jnp.transpose(fm, (0, 3, 1, 2))


if __name__ == "__main__":
    key = jax.random.PRNGKey(0)
    ks = jax.random.split(key, 9)

    N, Cin, H, W = 2, 4, 16, 16
    Cout = 8

    x = jax.random.normal(ks[0], (N, Cin, H, W), jnp.float32)

    params = {
        "w1": 0.2 * jax.random.normal(ks[1], (3, 3, Cin, Cout), jnp.float32),
        "b1": 0.1 * jax.random.normal(ks[2], (Cout,), jnp.float32),
        "g1": 1.0 + 0.1 * jax.random.normal(ks[3], (Cout,), jnp.float32),
        "be1": 0.1 * jax.random.normal(ks[4], (Cout,), jnp.float32),
        "w2": 0.2 * jax.random.normal(ks[5], (3, 3, Cout, Cout), jnp.float32),
        "b2": 0.1 * jax.random.normal(ks[6], (Cout,), jnp.float32),
        "g2": 1.0 + 0.1 * jax.random.normal(ks[7], (Cout,), jnp.float32),
        "be2": 0.1 * jax.random.normal(ks[8], (Cout,), jnp.float32),
    }

    pooled, fmap = unet_down_block(x, params)
    jax.block_until_ready((pooled, fmap))

    assert pooled.shape == (N, Cout, 6, 6), pooled.shape
    assert fmap.shape == (N, Cout, 12, 12), fmap.shape

    ref_pooled, ref_fmap = ref_forward(x, params)
    assert jnp.allclose(pooled, ref_pooled, atol=1e-3, rtol=1e-3)
    assert jnp.allclose(fmap, ref_fmap, atol=1e-3, rtol=1e-3)

    print("KERNEL_OK")
</pallas_src>

<mosaic_0001>
module attributes {stable_mosaic.version = 11 : i64} {
  func.func @kernel(%arg0: memref<32x64xf32, #tpu.memory_space<vmem>>, %arg1: memref<64x384xbf16, #tpu.memory_space<vmem>>, %arg2: memref<64x384xbf16, #tpu.memory_space<vmem>>, %arg3: memref<128x384xbf16, #tpu.memory_space<vmem>>, %arg4: memref<128x384xbf16, #tpu.memory_space<vmem>>, %arg5: memref<128x8xf32, #tpu.memory_space<vmem>>, %arg6: memref<8x128xf32, #tpu.memory_space<vmem>>, %arg7: memref<128x8xf32, #tpu.memory_space<vmem>>, %arg8: memref<8x128xf32, #tpu.memory_space<vmem>>, %arg9: memref<1x8xf32, #tpu.memory_space<vmem>>, %arg10: memref<1x8xf32, #tpu.memory_space<vmem>>, %arg11: memref<1x8xf32, #tpu.memory_space<vmem>>, %arg12: memref<1x8xf32, #tpu.memory_space<vmem>>, %arg13: memref<12x24xf32, #tpu.memory_space<vmem>>, %arg14: memref<12x24xf32, #tpu.memory_space<vmem>>, %arg15: memref<128x128xf32, #tpu.memory_space<vmem>>, %arg16: memref<128x128xf32, #tpu.memory_space<vmem>>, %arg17: memref<24x128xf32, #tpu.memory_space<vmem>>, %arg18: memref<12x128xf32, #tpu.memory_space<vmem>>) attributes {dimension_semantics = [], scalar_prefetch = 0 : i64, scratch_operands = 0 : i64, tpu.core_type = #tpu.core_type<tc>} {
    %c0 = arith.constant 0 : index
    %c0_0 = arith.constant 0 : index
    %0 = vector.load %arg0[%c0, %c0_0] : memref<32x64xf32, #tpu.memory_space<vmem>>, vector<32x64xf32>
    %c0_1 = arith.constant 0 : index
    %c0_2 = arith.constant 0 : index
    %1 = vector.load %arg1[%c0_1, %c0_2] : memref<64x384xbf16, #tpu.memory_space<vmem>>, vector<64x384xbf16>
    %c0_3 = arith.constant 0 : index
    %c0_4 = arith.constant 0 : index
    %2 = vector.load %arg2[%c0_3, %c0_4] : memref<64x384xbf16, #tpu.memory_space<vmem>>, vector<64x384xbf16>
    %3 = arith.truncf %0 : vector<32x64xf32> to vector<32x64xbf16>
    %4 = arith.extf %3 : vector<32x64xbf16> to vector<32x64xf32>
    %5 = arith.subf %0, %4 : vector<32x64xf32>
    %6 = arith.truncf %5 : vector<32x64xf32> to vector<32x64xbf16>
    %cst = arith.constant dense<0.000000e+00> : vector<32x384xf32>
    %7 = tpu.matmul %3, %1, %cst {dimension_numbers = #tpu.dot_dimension_numbers<[1], [0], [0], [1], [0, 0, 1, 1], [], []>} : vector<32x64xbf16>, vector<64x384xbf16>, vector<32x384xf32> -> vector<32x384xf32>
    %cst_5 = arith.constant dense<0.000000e+00> : vector<32x384xf32>
    %8 = tpu.matmul %6, %1, %cst_5 {dimension_numbers = #tpu.dot_dimension_numbers<[1], [0], [0], [1], [0, 0, 1, 1], [], []>} : vector<32x64xbf16>, vector<64x384xbf16>, vector<32x384xf32> -> vector<32x384xf32>
    %9 = arith.addf %7, %8 : vector<32x384xf32>
    %cst_6 = arith.constant dense<0.000000e+00> : vector<32x384xf32>
    %10 = tpu.matmul %3, %2, %cst_6 {dimension_numbers = #tpu.dot_dimension_numbers<[1], [0], [0], [1], [0, 0, 1, 1], [], []>} : vector<32x64xbf16>, vector<64x384xbf16>, vector<32x384xf32> -> vector<32x384xf32>
    %11 = arith.addf %9, %10 : vector<32x384xf32>
    %12 = vector.extract_strided_slice %11 {offsets = [0, 0], sizes = [32, 128], strides = [1, 1]} : vector<32x384xf32> to vector<32x128xf32>
    %13 = vector.extract_strided_slice %11 {offsets = [0, 128], sizes = [32, 128], strides = [1, 1]} : vector<32x384xf32> to vector<32x128xf32>
    %14 = vector.extract_strided_slice %11 {offsets = [0, 256], sizes = [32, 128], strides = [1, 1]} : vector<32x384xf32> to vector<32x128xf32>
    %15 = vector.extract_strided_slice %12 {offsets = [0, 0], sizes = [14, 128], strides = [1, 1]} : vector<32x128xf32> to vector<14x128xf32>
    %16 = vector.extract_strided_slice %13 {offsets = [1, 0], sizes = [14, 128], strides = [1, 1]} : vector<32x128xf32> to vector<14x128xf32>
    %17 = arith.addf %15, %16 : vector<14x128xf32>
    %18 = vector.extract_strided_slice %14 {offsets = [2, 0], sizes = [14, 128], strides = [1, 1]} : vector<32x128xf32> to vector<14x128xf32>
    %19 = arith.addf %17, %18 : vector<14x128xf32>
    %20 = vector.extract_strided_slice %12 {offsets = [16, 0], sizes = [14, 128], strides = [1, 1]} : vector<32x128xf32> to vector<14x128xf32>
    %21 = vector.extract_strided_slice %13 {offsets = [17, 0], sizes = [14, 128], strides = [1, 1]} : vector<32x128xf32> to vector<14x128xf32>
    %22 = arith.addf %20, %21 : vector<14x128xf32>
    %23 = vector.extract_strided_slice %14 {offsets = [18, 0], sizes = [14, 128], strides = [1, 1]} : vector<32x128xf32> to vector<14x128xf32>
    %24 = arith.addf %22, %23 : vector<14x128xf32>
    %25 = tpu.concatenate %19, %24 in 0 : vector<14x128xf32>, vector<14x128xf32> -> vector<28x128xf32>
    %c0_7 = arith.constant 0 : index
    %c0_8 = arith.constant 0 : index
    %26 = vector.load %arg5[%c0_7, %c0_8] : memref<128x8xf32, #tpu.memory_space<vmem>>, vector<128x8xf32>
    %c0_9 = arith.constant 0 : index
    %c0_10 = arith.constant 0 : index
    %27 = vector.load %arg6[%c0_9, %c0_10] : memref<8x128xf32, #tpu.memory_space<vmem>>, vector<8x128xf32>
    %c0_11 = arith.constant 0 : index
    %c0_12 = arith.constant 0 : index
    %28 = vector.load %arg9[%c0_11, %c0_12] : memref<1x8xf32, #tpu.memory_space<vmem>>, vector<1x8xf32>
    %c0_13 = arith.constant 0 : index
    %c0_14 = arith.constant 0 : index
    %29 = vector.load %arg10[%c0_13, %c0_14] : memref<1x8xf32, #tpu.memory_space<vmem>>, vector<1x8xf32>
    %cst_15 = arith.constant dense<0.000000e+00> : vector<128xf32>
    %30 = vector.multi_reduction <add>, %25, %cst_15 [0] : vector<28x128xf32> to vector<128xf32>
    %31 = vector.shape_cast %30 : vector<128xf32> to vector<1x128xf32>
    %32 = arith.mulf %25, %25 : vector<28x128xf32>
    %cst_16 = arith.constant dense<0.000000e+00> : vector<128xf32>
    %33 = vector.multi_reduction <add>, %32, %cst_16 [0] : vector<28x128xf32> to vector<128xf32>
    %34 = vector.shape_cast %33 : vector<128xf32> to vector<1x128xf32>
    %35 = tpu.concatenate %31, %34 in 0 : vector<1x128xf32>, vector<1x128xf32> -> vector<2x128xf32>
    %cst_17 = arith.constant dense<0.000000e+00> : vector<2x8xf32>
    %36 = tpu.matmul %35, %26, %cst_17 {dimension_numbers = #tpu.dot_dimension_numbers<[1], [0], [0], [1], [0, 0, 1, 1], [], []>, precision = #tpu.contract_precision<fp32>} : vector<2x128xf32>, vector<128x8xf32>, vector<2x8xf32> -> vector<2x8xf32>
    %37 = vector.extract_strided_slice %36 {offsets = [0, 0], sizes = [1, 8], strides = [1, 1]} : vector<2x8xf32> to vector<1x8xf32>
    %cst_18 = arith.constant 0.00255102036 : f32
    %38 = vector.broadcast %cst_18 : f32 to vector<1x8xf32>
    %39 = arith.mulf %37, %38 : vector<1x8xf32>
    %40 = vector.extract_strided_slice %36 {offsets = [1, 0], sizes = [1, 8], strides = [1, 1]} : vector<2x8xf32> to vector<1x8xf32>
    %cst_19 = arith.constant 0.00255102036 : f32
    %41 = vector.broadcast %cst_19 : f32 to vector<1x8xf32>
    %42 = arith.mulf %40, %41 : vector<1x8xf32>
    %43 = arith.mulf %39, %39 : vector<1x8xf32>
    %44 = arith.subf %42, %43 : vector<1x8xf32>
    %cst_20 = arith.constant 9.99999974E-6 : f32
    %45 = vector.broadcast %cst_20 : f32 to vector<1x8xf32>
    %46 = arith.addf %44, %45 : vector<1x8xf32>
    %47 = math.rsqrt %46 : vector<1x8xf32>
    %48 = arith.mulf %47, %28 : vector<1x8xf32>
    %49 = arith.mulf %39, %48 : vector<1x8xf32>
    %50 = arith.subf %29, %49 : vector<1x8xf32>
    %51 = tpu.concatenate %48, %50 in 0 : vector<1x8xf32>, vector<1x8xf32> -> vector<2x8xf32>
    %cst_21 = arith.constant dense<0.000000e+00> : vector<2x128xf32>
    %52 = tpu.matmul %51, %27, %cst_21 {dimension_numbers = #tpu.dot_dimension_numbers<[1], [0], [0], [1], [0, 0, 1, 1], [], []>, precision = #tpu.contract_precision<fp32>} : vector<2x8xf32>, vector<8x128xf32>, vector<2x128xf32> -> vector<2x128xf32>
    %53 = vector.extract_strided_slice %52 {offsets = [0, 0], sizes = [1, 128], strides = [1, 1]} : vector<2x128xf32> to vector<1x128xf32>
    %54 = vector.broadcast %53 : vector<1x128xf32> to vector<28x128xf32>
    %55 = arith.mulf %25, %54 : vector<28x128xf32>
    %56 = vector.extract_strided_slice %52 {offsets = [1, 0], sizes = [1, 128], strides = [1, 1]} : vector<2x128xf32> to vector<1x128xf32>
    %57 = vector.broadcast %56 : vector<1x128xf32> to vector<28x128xf32>
    %58 = arith.addf %55, %57 : vector<28x128xf32>
    %cst_22 = arith.constant 0.000000e+00 : f32
    %59 = vector.broadcast %cst_22 : f32 to vector<28x128xf32>
    %60 = arith.maximumf %58, %59 : vector<28x128xf32>
    %c0_23 = arith.constant 0 : index
    %c0_24 = arith.constant 0 : index
    %61 = vector.load %arg3[%c0_23, %c0_24] : memref<128x384xbf16, #tpu.memory_space<vmem>>, vector<128x384xbf16>
    %c0_25 = arith.constant 0 : index
    %c0_26 = arith.constant 0 : index
    %62 = vector.load %arg4[%c0_25, %c0_26] : memref<128x384xbf16, #tpu.memory_space<vmem>>, vector<128x384xbf16>
    %63 = arith.truncf %60 : vector<28x128xf32> to vector<28x128xbf16>
    %64 = arith.extf %63 : vector<28x128xbf16> to vector<28x128xf32>
    %65 = arith.subf %60, %64 : vector<28x128xf32>
    %66 = arith.truncf %65 : vector<28x128xf32> to vector<28x128xbf16>
    %cst_27 = arith.constant dense<0.000000e+00> : vector<28x384xf32>
    %67 = tpu.matmul %63, %61, %cst_27 {dimension_numbers = #tpu.dot_dimension_numbers<[1], [0], [0], [1], [0, 0, 1, 1], [], []>} : vector<28x128xbf16>, vector<128x384xbf16>, vector<28x384xf32> -> vector<28x384xf32>
    %cst_28 = arith.constant dense<0.000000e+00> : vector<28x384xf32>
    %68 = tpu.matmul %66, %61, %cst_28 {dimension_numbers = #tpu.dot_dimension_numbers<[1], [0], [0], [1], [0, 0, 1, 1], [], []>} : vector<28x128xbf16>, vector<128x384xbf16>, vector<28x384xf32> -> vector<28x384xf32>
    %69 = arith.addf %67, %68 : vector<28x384xf32>
    %cst_29 = arith.constant dense<0.000000e+00> : vector<28x384xf32>
    %70 = tpu.matmul %63, %62, %cst_29 {dimension_numbers = #tpu.dot_dimension_numbers<[1], [0], [0], [1], [0, 0, 1, 1], [], []>} : vector<28x128xbf16>, vector<128x384xbf16>, vector<28x384xf32> -> vector<28x384xf32>
    %71 = arith.addf %69, %70 : vector<28x384xf32>
    %72 = vector.extract_strided_slice %71 {offsets = [0, 0], sizes = [28, 128], strides = [1, 1]} : vector<28x384xf32> to vector<28x128xf32>
    %73 = vector.extract_strided_slice %71 {offsets = [0, 128], sizes = [28, 128], strides = [1, 1]} : vector<28x384xf32> to vector<28x128xf32>
    %74 = vector.extract_strided_slice %71 {offsets = [0, 256], sizes = [28, 128], strides = [1, 1]} : vector<28x384xf32> to vector<28x128xf32>
    %75 = vector.extract_strided_slice %72 {offsets = [0, 0], sizes = [12, 128], strides = [1, 1]} : vector<28x128xf32> to vector<12x128xf32>
    %76 = vector.extract_strided_slice %73 {offsets = [1, 0], sizes = [12, 128], strides = [1, 1]} : vector<28x128xf32> to vector<12x128xf32>
    %77 = arith.addf %75, %76 : vector<12x128xf32>
    %78 = vector.extract_strided_slice %74 {offsets = [2, 0], sizes = [12, 128], strides = [1, 1]} : vector<28x128xf32> to vector<12x128xf32>
    %79 = arith.addf %77, %78 : vector<12x128xf32>
    %80 = vector.extract_strided_slice %72 {offsets = [14, 0], sizes = [12, 128], strides = [1, 1]} : vector<28x128xf32> to vector<12x128xf32>
    %81 = vector.extract_strided_slice %73 {offsets = [15, 0], sizes = [12, 128], strides = [1, 1]} : vector<28x128xf32> to vector<12x128xf32>
    %82 = arith.addf %80, %81 : vector<12x128xf32>
    %83 = vector.extract_strided_slice %74 {offsets = [16, 0], sizes = [12, 128], strides = [1, 1]} : vector<28x128xf32> to vector<12x128xf32>
    %84 = arith.addf %82, %83 : vector<12x128xf32>
    %85 = tpu.concatenate %79, %84 in 0 : vector<12x128xf32>, vector<12x128xf32> -> vector<24x128xf32>
    %c0_30 = arith.constant 0 : index
    %c0_31 = arith.constant 0 : index
    %86 = vector.load %arg7[%c0_30, %c0_31] : memref<128x8xf32, #tpu.memory_space<vmem>>, vector<128x8xf32>
    %c0_32 = arith.constant 0 : index
    %c0_33 = arith.constant 0 : index
    %87 = vector.load %arg8[%c0_32, %c0_33] : memref<8x128xf32, #tpu.memory_space<vmem>>, vector<8x128xf32>
    %c0_34 = arith.constant 0 : index
    %c0_35 = arith.constant 0 : index
    %88 = vector.load %arg11[%c0_34, %c0_35] : memref<1x8xf32, #tpu.memory_space<vmem>>, vector<1x8xf32>
    %c0_36 = arith.constant 0 : index
    %c0_37 = arith.constant 0 : index
    %89 = vector.load %arg12[%c0_36, %c0_37] : memref<1x8xf32, #tpu.memory_space<vmem>>, vector<1x8xf32>
    %cst_38 = arith.constant dense<0.000000e+00> : vector<128xf32>
    %90 = vector.multi_reduction <add>, %85, %cst_38 [0] : vector<24x128xf32> to vector<128xf32>
    %91 = vector.shape_cast %90 : vector<128xf32> to vector<1x128xf32>
    %92 = arith.mulf %85, %85 : vector<24x128xf32>
    %cst_39 = arith.constant dense<0.000000e+00> : vector<128xf32>
    %93 = vector.multi_reduction <add>, %92, %cst_39 [0] : vector<24x128xf32> to vector<128xf32>
    %94 = vector.shape_cast %93 : vector<128xf32> to vector<1x128xf32>
    %95 = tpu.concatenate %91, %94 in 0 : vector<1x128xf32>, vector<1x128xf32> -> vector<2x128xf32>
    %cst_40 = arith.constant dense<0.000000e+00> : vector<2x8xf32>
    %96 = tpu.matmul %95, %86, %cst_40 {dimension_numbers = #tpu.dot_dimension_numbers<[1], [0], [0], [1], [0, 0, 1, 1], [], []>, precision = #tpu.contract_precision<fp32>} : vector<2x128xf32>, vector<128x8xf32>, vector<2x8xf32> -> vector<2x8xf32>
    %97 = vector.extract_strided_slice %96 {offsets = [0, 0], sizes = [1, 8], strides = [1, 1]} : vector<2x8xf32> to vector<1x8xf32>
    %cst_41 = arith.constant 0.00347222225 : f32
    %98 = vector.broadcast %cst_41 : f32 to vector<1x8xf32>
    %99 = arith.mulf %97, %98 : vector<1x8xf32>
    %100 = vector.extract_strided_slice %96 {offsets = [1, 0], sizes = [1, 8], strides = [1, 1]} : vector<2x8xf32> to vector<1x8xf32>
    %cst_42 = arith.constant 0.00347222225 : f32
    %101 = vector.broadcast %cst_42 : f32 to vector<1x8xf32>
    %102 = arith.mulf %100, %101 : vector<1x8xf32>
    %103 = arith.mulf %99, %99 : vector<1x8xf32>
    %104 = arith.subf %102, %103 : vector<1x8xf32>
    %cst_43 = arith.constant 9.99999974E-6 : f32
    %105 = vector.broadcast %cst_43 : f32 to vector<1x8xf32>
    %106 = arith.addf %104, %105 : vector<1x8xf32>
    %107 = math.rsqrt %106 : vector<1x8xf32>
    %108 = arith.mulf %107, %88 : vector<1x8xf32>
    %109 = arith.mulf %99, %108 : vector<1x8xf32>
    %110 = arith.subf %89, %109 : vector<1x8xf32>
    %111 = tpu.concatenate %108, %110 in 0 : vector<1x8xf32>, vector<1x8xf32> -> vector<2x8xf32>
    %cst_44 = arith.constant dense<0.000000e+00> : vector<2x128xf32>
    %112 = tpu.matmul %111, %87, %cst_44 {dimension_numbers = #tpu.dot_dimension_numbers<[1], [0], [0], [1], [0, 0, 1, 1], [], []>, precision = #tpu.contract_precision<fp32>} : vector<2x8xf32>, vector<8x128xf32>, vector<2x128xf32> -> vector<2x128xf32>
    %113 = vector.extract_strided_slice %112 {offsets = [0, 0], sizes = [1, 128], strides = [1, 1]} : vector<2x128xf32> to vector<1x128xf32>
    %114 = vector.broadcast %113 : vector<1x128xf32> to vector<24x128xf32>
    %115 = arith.mulf %85, %114 : vector<24x128xf32>
    %116 = vector.extract_strided_slice %112 {offsets = [1, 0], sizes = [1, 128], strides = [1, 1]} : vector<2x128xf32> to vector<1x128xf32>
    %117 = vector.broadcast %116 : vector<1x128xf32> to vector<24x128xf32>
    %118 = arith.addf %115, %117 : vector<24x128xf32>
    %cst_45 = arith.constant 0.000000e+00 : f32
    %119 = vector.broadcast %cst_45 : f32 to vector<24x128xf32>
    %120 = arith.maximumf %118, %119 : vector<24x128xf32>
    %c0_46 = arith.constant 0 : index
    %c0_47 = arith.constant 0 : index
    %121 = vector.load %arg17[%c0_46, %c0_47] : memref<24x128xf32, #tpu.memory_space<vmem>>, vector<24x128xf32>
    tpu.vector_store %arg17[%c0_46, %c0_47], %120 {strides = array<i32>} : memref<24x128xf32, #tpu.memory_space<vmem>>, vector<24x128xf32>,
    %c0_48 = arith.constant 0 : index
    %c0_49 = arith.constant 0 : index
    %122 = vector.load %arg13[%c0_48, %c0_49] : memref<12x24xf32, #tpu.memory_space<vmem>>, vector<12x24xf32>
    %cst_50 = arith.constant dense<0.000000e+00> : vector<12x128xf32>
    %123 = tpu.matmul %122, %120, %cst_50 {dimension_numbers = #tpu.dot_dimension_numbers<[1], [0], [0], [1], [0, 0, 1, 1], [], []>, precision = #tpu.contract_precision<fp32>} : vector<12x24xf32>, vector<24x128xf32>, vector<12x128xf32> -> vector<12x128xf32>
    %c0_51 = arith.constant 0 : index
    %c0_52 = arith.constant 0 : index
    %124 = vector.load %arg14[%c0_51, %c0_52] : memref<12x24xf32, #tpu.memory_space<vmem>>, vector<12x24xf32>
    %cst_53 = arith.constant dense<0.000000e+00> : vector<12x128xf32>
    %125 = tpu.matmul %124, %120, %cst_53 {dimension_numbers = #tpu.dot_dimension_numbers<[1], [0], [0], [1], [0, 0, 1, 1], [], []>, precision = #tpu.contract_precision<fp32>} : vector<12x24xf32>, vector<24x128xf32>, vector<12x128xf32> -> vector<12x128xf32>
    %126 = arith.maximumf %123, %125 : vector<12x128xf32>
    %c0_54 = arith.constant 0 : index
    %c0_55 = arith.constant 0 : index
    %127 = vector.load %arg15[%c0_54, %c0_55] : memref<128x128xf32, #tpu.memory_space<vmem>>, vector<128x128xf32>
    %cst_56 = arith.constant dense<0.000000e+00> : vector<12x128xf32>
    %128 = tpu.matmul %126, %127, %cst_56 {dimension_numbers = #tpu.dot_dimension_numbers<[1], [0], [0], [1], [0, 0, 1, 1], [], []>, precision = #tpu.contract_precision<fp32>} : vector<12x128xf32>, vector<128x128xf32>, vector<12x128xf32> -> vector<12x128xf32>
    %c0_57 = arith.constant 0 : index
    %c0_58 = arith.constant 0 : index
    %129 = vector.load %arg16[%c0_57, %c0_58] : memref<128x128xf32, #tpu.memory_space<vmem>>, vector<128x128xf32>
    %cst_59 = arith.constant dense<0.000000e+00> : vector<12x128xf32>
    %130 = tpu.matmul %126, %129, %cst_59 {dimension_numbers = #tpu.dot_dimension_numbers<[1], [0], [0], [1], [0, 0, 1, 1], [], []>, precision = #tpu.contract_precision<fp32>} : vector<12x128xf32>, vector<128x128xf32>, vector<12x128xf32> -> vector<12x128xf32>
    %131 = arith.maximumf %128, %130 : vector<12x128xf32>
    %c0_60 = arith.constant 0 : index
    %c0_61 = arith.constant 0 : index
    %132 = vector.load %arg18[%c0_60, %c0_61] : memref<12x128xf32, #tpu.memory_space<vmem>>, vector<12x128xf32>
    tpu.vector_store %arg18[%c0_60, %c0_61], %131 {strides = array<i32>} : memref<12x128xf32, #tpu.memory_space<vmem>>, vector<12x128xf32>,
    return
  }
}

</mosaic_0001>

<llo_original>
// kernel: unet_down_block.1
$region0: #{unet_down_block.1}
  #allocation0 [shape = 'u32[]', space=smem, size = 0x4, offset = 0x4, fixed_abs, tag = 'smem constant byte address 0x4 - core index']
  #allocation1 [shape = 'u32[72,128]{1,0:T(1,128)}', space=vmem, size = 0x9000, scoped, tag = 'internal scratch']
  %s0 = inlined_call_operand.vmem [shape: f32[32,64], index: 0, kind: input, shape index: {}]
  %s1 = inlined_call_operand.vmem [shape: bf16[64,384], index: 1, kind: input, shape index: {}]
  %s2 = inlined_call_operand.vmem [shape: bf16[64,384], index: 2, kind: input, shape index: {}]
  %s3 = inlined_call_operand.vmem [shape: bf16[128,384], index: 3, kind: input, shape index: {}]
  %s4 = inlined_call_operand.vmem [shape: bf16[128,384], index: 4, kind: input, shape index: {}]
  %s5 = inlined_call_operand.vmem [shape: f32[128,8], index: 5, kind: input, shape index: {}]
  %s6 = inlined_call_operand.vmem [shape: f32[8,128], index: 6, kind: input, shape index: {}]
  %s7 = inlined_call_operand.vmem [shape: f32[128,8], index: 7, kind: input, shape index: {}]
  %s8 = inlined_call_operand.vmem [shape: f32[8,128], index: 8, kind: input, shape index: {}]
  %s9 = inlined_call_operand.vmem [shape: f32[1,8], index: 9, kind: input, shape index: {}]
  %s10 = inlined_call_operand.vmem [shape: f32[1,8], index: 10, kind: input, shape index: {}]
  %s11 = inlined_call_operand.vmem [shape: f32[1,8], index: 11, kind: input, shape index: {}]
  %s12 = inlined_call_operand.vmem [shape: f32[1,8], index: 12, kind: input, shape index: {}]
  %s13 = inlined_call_operand.vmem [shape: f32[12,24], index: 13, kind: input, shape index: {}]
  %s14 = inlined_call_operand.vmem [shape: f32[12,24], index: 14, kind: input, shape index: {}]
  %s15 = inlined_call_operand.vmem [shape: f32[128,128], index: 15, kind: input, shape index: {}]
  %s16 = inlined_call_operand.vmem [shape: f32[128,128], index: 16, kind: input, shape index: {}]
  %s17 = inlined_call_operand.vmem [shape: f32[24,128], index: 17, kind: output, shape index: {0}]
  %s18 = inlined_call_operand.vmem [shape: f32[12,128], index: 18, kind: output, shape index: {1}]
  %19 = xla_tuple %s17, %s18
  %s20 = sld [smem:[#allocation0]]
  $region86: #{unet_down_block.1} parent=0
    _
  %s22 = ssub.s32 1, %s20
  %s23 = scalar_select 0, %s22, %s20
  // Predicated region
  $region2: #{unet_down_block.1} parent=0 // pred_check
    _
  $region3: #{unet_down_block.1} parent=0 // pred_check_branch
    %25 = sbr.rel (0) target = $region5
  $region4: #{unet_down_block.1} parent=0 // pred_region
    _
  $region5: #{unet_down_block.1} parent=0 // pred_fallthru
    _
  // Predicated region
  $region6: #{unet_down_block.1} parent=0 // pred_check
    _
  $region7: #{unet_down_block.1} parent=0 // pred_check_branch
    %27 = sbr.rel (0) target = $region9
  $region8: #{unet_down_block.1} parent=0 // pred_region
    _
  $region9: #{unet_down_block.1} parent=0 // pred_fallthru
    _
  // Predicated region
  $region10: #{unet_down_block.1} parent=0 // pred_check
    _
  $region11: #{unet_down_block.1} parent=0 // pred_check_branch
    %29 = sbr.rel (0) target = $region13
  $region12: #{unet_down_block.1} parent=0 // pred_region
    _
  $region13: #{unet_down_block.1} parent=0 // pred_fallthru
    _
  // Predicated region
  $region14: #{unet_down_block.1} parent=0 // pred_check
    _
  $region15: #{unet_down_block.1} parent=0 // pred_check_branch
    %31 = sbr.rel (0) target = $region17
  $region16: #{unet_down_block.1} parent=0 // pred_region
    _
  $region17: #{unet_down_block.1} parent=0 // pred_fallthru
    _
  // Predicated region
  $region18: #{unet_down_block.1} parent=0 // pred_check
    _
  $region19: #{unet_down_block.1} parent=0 // pred_check_branch
    %33 = sbr.rel (0) target = $region21
  $region20: #{unet_down_block.1} parent=0 // pred_region
    _
  $region21: #{unet_down_block.1} parent=0 // pred_fallthru
    _
  // Predicated region
  $region22: #{unet_down_block.1} parent=0 // pred_check
    _
  $region23: #{unet_down_block.1} parent=0 // pred_check_branch
    %35 = sbr.rel (0) target = $region25
  $region24: #{unet_down_block.1} parent=0 // pred_region
    _
  $region25: #{unet_down_block.1} parent=0 // pred_fallthru
    _
  // Predicated region
  $region26: #{unet_down_block.1} parent=0 // pred_check
    _
  $region27: #{unet_down_block.1} parent=0 // pred_check_branch
    %37 = sbr.rel (0) target = $region29
  $region28: #{unet_down_block.1} parent=0 // pred_region
    _
  $region29: #{unet_down_block.1} parent=0 // pred_fallthru
    _
  // Predicated region
  $region30: #{unet_down_block.1} parent=0 // pred_check
    _
  $region31: #{unet_down_block.1} parent=0 // pred_check_branch
    %39 = sbr.rel (0) target = $region33
  $region32: #{unet_down_block.1} parent=0 // pred_region
    _
  $region33: #{unet_down_block.1} parent=0 // pred_fallthru
    _
  // Predicated region
  $region34: #{unet_down_block.1} parent=0 // pred_check
    _
  $region35: #{unet_down_block.1} parent=0 // pred_check_branch
    %41 = sbr.rel (0) target = $region37
  $region36: #{unet_down_block.1} parent=0 // pred_region
    _
  $region37: #{unet_down_block.1} parent=0 // pred_fallthru
    _
  // Predicated region
  $region38: #{unet_down_block.1} parent=0 // pred_check
    _
  $region39: #{unet_down_block.1} parent=0 // pred_check_branch
    %43 = sbr.rel (0) target = $region41
  $region40: #{unet_down_block.1} parent=0 // pred_region
    _
  $region41: #{unet_down_block.1} parent=0 // pred_fallthru
    _
  // Predicated region
  $region42: #{unet_down_block.1} parent=0 // pred_check
    _
  $region43: #{unet_down_block.1} parent=0 // pred_check_branch
    %45 = sbr.rel (0) target = $region45
  $region44: #{unet_down_block.1} parent=0 // pred_region
    _
  $region45: #{unet_down_block.1} parent=0 // pred_fallthru
    _
  // Predicated region
  $region46: #{unet_down_block.1} parent=0 // pred_check
    _
  $region47: #{unet_down_block.1} parent=0 // pred_check_branch
    %47 = sbr.rel (0) target = $region49
  $region48: #{unet_down_block.1} parent=0 // pred_region
    _
  $region49: #{unet_down_block.1} parent=0 // pred_fallthru
    _
  // Predicated region
  $region50: #{unet_down_block.1} parent=0 // pred_check
    _
  $region51: #{unet_down_block.1} parent=0 // pred_check_branch
    %49 = sbr.rel (0) target = $region53
  $region52: #{unet_down_block.1} parent=0 // pred_region
    _
  $region53: #{unet_down_block.1} parent=0 // pred_fallthru
    _
  // Predicated region
  $region54: #{unet_down_block.1} parent=0 // pred_check
    _
  $region55: #{unet_down_block.1} parent=0 // pred_check_branch
    %51 = sbr.rel (0) target = $region57
  $region56: #{unet_down_block.1} parent=0 // pred_region
    _
  $region57: #{unet_down_block.1} parent=0 // pred_fallthru
    _
  // Predicated region
  $region58: #{unet_down_block.1} parent=0 // pred_check
    _
  $region59: #{unet_down_block.1} parent=0 // pred_check_branch
    %53 = sbr.rel (0) target = $region61
  $region60: #{unet_down_block.1} parent=0 // pred_region
    _
  $region61: #{unet_down_block.1} parent=0 // pred_fallthru
    _
  // Predicated region
  $region62: #{unet_down_block.1} parent=0 // pred_check
    _
  $region63: #{unet_down_block.1} parent=0 // pred_check_branch
    %55 = sbr.rel (0) target = $region65
  $region64: #{unet_down_block.1} parent=0 // pred_region
    _
  $region65: #{unet_down_block.1} parent=0 // pred_fallthru
    _
  // Predicated region
  $region66: #{unet_down_block.1} parent=0 // pred_check
    _
  $region67: #{unet_down_block.1} parent=0 // pred_check_branch
    %57 = sbr.rel (0) target = $region69
  $region68: #{unet_down_block.1} parent=0 // pred_region
    _
  $region69: #{unet_down_block.1} parent=0 // pred_fallthru
    _
  %v59 = vld [vmem:[%s0] sm:$0xff]
  %v60 = vld [vmem:[%s0 + $0x8] sm:$0xff]
  %v61 = vld [vmem:[%s0 + $0x10] sm:$0xff]
  %v62 = vld [vmem:[%s0 + $0x18] sm:$0xff]
  %v63 = vld [vmem:[%s1] sm:$0xff]
  %v64 = vld [vmem:[%s1 + $0x8] sm:$0xf]
  %v65 = vld [vmem:[%s1 + $0xc] sm:$0xff]
  %v66 = vld [vmem:[%s1 + $0x14] sm:$0xf]
  %v67 = vld [vmem:[%s1 + $0x18] sm:$0xff]
  %v68 = vld [vmem:[%s1 + $0x20] sm:$0xf]
  %v69 = vld [vmem:[%s1 + $0x24] sm:$0xff]
  %v70 = vld [vmem:[%s1 + $0x2c] sm:$0xf]
  %v71 = vld [vmem:[%s1 + $0x30] sm:$0xff]
  %v72 = vld [vmem:[%s1 + $0x38] sm:$0xf]
  %v73 = vld [vmem:[%s1 + $0x3c] sm:$0xff]
  %v74 = vld [vmem:[%s1 + $0x44] sm:$0xf]
  %v75 = vld [vmem:[%s1 + $0x48] sm:$0xff]
  %v76 = vld [vmem:[%s1 + $0x50] sm:$0xf]
  %v77 = vld [vmem:[%s1 + $0x54] sm:$0xff]
  %v78 = vld [vmem:[%s1 + $0x5c] sm:$0xf]
  %v79 = vld [vmem:[%s2] sm:$0xff]
  %v80 = vld [vmem:[%s2 + $0x8] sm:$0xf]
  %v81 = vld [vmem:[%s2 + $0xc] sm:$0xff]
  %v82 = vld [vmem:[%s2 + $0x14] sm:$0xf]
  %v83 = vld [vmem:[%s2 + $0x18] sm:$0xff]
  %v84 = vld [vmem:[%s2 + $0x20] sm:$0xf]
  %v85 = vld [vmem:[%s2 + $0x24] sm:$0xff]
  %v86 = vld [vmem:[%s2 + $0x2c] sm:$0xf]
  %v87 = vld [vmem:[%s2 + $0x30] sm:$0xff]
  %v88 = vld [vmem:[%s2 + $0x38] sm:$0xf]
  %v89 = vld [vmem:[%s2 + $0x3c] sm:$0xff]
  %v90 = vld [vmem:[%s2 + $0x44] sm:$0xf]
  %v91 = vld [vmem:[%s2 + $0x48] sm:$0xff]
  %v92 = vld [vmem:[%s2 + $0x50] sm:$0xf]
  %v93 = vld [vmem:[%s2 + $0x54] sm:$0xff]
  %v94 = vld [vmem:[%s2 + $0x5c] sm:$0xf]
  %v95 = vpack.c.bf16 %v59, %v59
  %v96 = vpack.c.bf16 %v60, %v60
  %v97 = vpack.c.bf16 %v61, %v61
  %v98 = vpack.c.bf16 %v62, %v62
  %v99 = vunpack.c.l.bf16 %v95
  %v100 = vunpack.c.l.bf16 %v96
  %v101 = vunpack.c.l.bf16 %v97
  %v102 = vunpack.c.l.bf16 %v98
  %v103 = vsub.f32 %v59, %v99
  %v104 = vsub.f32 %v60, %v100
  %v105 = vsub.f32 %v61, %v101
  %v106 = vsub.f32 %v62, %v102
  %v107 = vpack.c.bf16 %v104, %v103
  %v108 = vpack.c.bf16 %v106, %v105
  %v125 = vunpack.c.l.b16 %v63
  %v126 = vunpack.c.h.b16 %v63
  %v127 = vunpack.c.l.b16 %v64
  %v128 = vunpack.c.l.b16 %v65
  %v129 = vunpack.c.h.b16 %v65
  %v130 = vunpack.c.l.b16 %v66
  %v131 = vunpack.c.l.b16 %v67
  %v132 = vunpack.c.h.b16 %v67
  %v133 = vunpack.c.l.b16 %v68
  %v134 = vunpack.c.l.b16 %v69
  %v135 = vunpack.c.h.b16 %v69
  %v136 = vunpack.c.l.b16 %v70
  %v137 = vunpack.c.l.b16 %v71
  %v138 = vunpack.c.h.b16 %v71
  %v139 = vunpack.c.l.b16 %v72
  %v140 = vunpack.c.l.b16 %v73
  %v141 = vunpack.c.h.b16 %v73
  %v142 = vunpack.c.l.b16 %v74
  %v143 = vunpack.c.l.b16 %v75
  %v144 = vunpack.c.h.b16 %v75
  %v145 = vunpack.c.l.b16 %v76
  %v146 = vunpack.c.l.b16 %v77
  %v147 = vunpack.c.h.b16 %v77
  %v148 = vunpack.c.l.b16 %v78
  %v149 = vpack.c.b16 %v128, %v125
  %v150 = vpack.c.b16 %v129, %v126
  %v151 = vpack.c.b16 %v130, %v127
  %v152 = vpack.c.b16 %v134, %v131
  %v153 = vpack.c.b16 %v135, %v132
  %v154 = vpack.c.b16 %v136, %v133
  %v155 = vpack.c.b16 %v140, %v137
  %v156 = vpack.c.b16 %v141, %v138
  %v157 = vpack.c.b16 %v142, %v139
  %v158 = vpack.c.b16 %v146, %v143
  %v159 = vpack.c.b16 %v147, %v144
  %v160 = vpack.c.b16 %v148, %v145
  %vm173 = vcmask 523264
  %v175 = vsel %vm173, %v107, 0
  %v178 = vsel %vm173, %v108, 0
  %180 = vmatpush.bf16.msra.mxu0 0
  %181 = vmatpush.bf16.msra.mxu0 0
  %182 = vmatpush.bf16.msra.mxu0 0
  %183 = vmatpush.bf16.msra.mxu0 0
  %184 = vmatpush.bf16.msra.mxu0 %v158
  %185 = vmatpush.bf16.msra.mxu0 %v155
  %186 = vmatpush.bf16.msra.mxu0 %v152
  %187 = vmatpush.bf16.msra.mxu0 %v149
  %188 = vmatmul.bf16.gmra.mxu0 %v175
  %v189 = vpop.f32.mrf.mxu0
  %v190 = vadd.f32 0.0, %v189
  %v191 = vpop.f32.mrf.mxu0
  %v192 = vadd.f32 0.0, %v191
  %193 = vmatmul.bf16.gmra.mxu0 %v178
  %v194 = vpop.f32.mrf.mxu0
  %v195 = vadd.f32 0.0, %v194
  %v196 = vpop.f32.mrf.mxu0
  %v197 = vadd.f32 0.0, %v196
  %198 = vdwg.mxu0
  %199 = vmatpush.bf16.msra.mxu0 0
  %200 = vmatpush.bf16.msra.mxu0 0
  %201 = vmatpush.bf16.msra.mxu0 0
  %202 = vmatpush.bf16.msra.mxu0 0
  %203 = vmatpush.bf16.msra.mxu0 %v159
  %204 = vmatpush.bf16.msra.mxu0 %v156
  %205 = vmatpush.bf16.msra.mxu0 %v153
  %206 = vmatpush.bf16.msra.mxu0 %v150
  %207 = vmatmul.bf16.gmra.mxu0 %v175
  %v208 = vpop.f32.mrf.mxu0
  %v209 = vadd.f32 0.0, %v208
  %v210 = vpop.f32.mrf.mxu0
  %v211 = vadd.f32 0.0, %v210
  %212 = vmatmul.bf16.gmra.mxu0 %v178
  %v213 = vpop.f32.mrf.mxu0
  %v214 = vadd.f32 0.0, %v213
  %v215 = vpop.f32.mrf.mxu0
  %v216 = vadd.f32 0.0, %v215
  %217 = vdwg.mxu0
  %218 = vmatpush.bf16.msra.mxu0 0
  %219 = vmatpush.bf16.msra.mxu0 0
  %220 = vmatpush.bf16.msra.mxu0 0
  %221 = vmatpush.bf16.msra.mxu0 0
  %222 = vmatpush.bf16.msra.mxu0 %v160
  %223 = vmatpush.bf16.msra.mxu0 %v157
  %224 = vmatpush.bf16.msra.mxu0 %v154
  %225 = vmatpush.bf16.msra.mxu0 %v151
  %226 = vmatmul.bf16.gmra.mxu0 %v175
  %v227 = vpop.f32.mrf.mxu0
  %v228 = vadd.f32 0.0, %v227
  %v229 = vpop.f32.mrf.mxu0
  %v230 = vadd.f32 0.0, %v229
  %231 = vmatmul.bf16.gmra.mxu0 %v178
  %v232 = vpop.f32.mrf.mxu0
  %v233 = vadd.f32 0.0, %v232
  %v234 = vpop.f32.mrf.mxu0
  %v235 = vadd.f32 0.0, %v234
  %236 = vdwg.mxu0
  %v241 = vunpack.c.l.b16 %v95
  %v242 = vunpack.c.l.b16 %v96
  %v243 = vunpack.c.l.b16 %v97
  %v244 = vunpack.c.l.b16 %v98
  %v245 = vpack.c.b16 %v242, %v241
  %v246 = vpack.c.b16 %v244, %v243
  %v248 = vsel %vm173, %v245, 0
  %v251 = vsel %vm173, %v246, 0
  %253 = vmatpush.bf16.msra.mxu0 0
  %254 = vmatpush.bf16.msra.mxu0 0
  %255 = vmatpush.bf16.msra.mxu0 0
  %256 = vmatpush.bf16.msra.mxu0 0
  %257 = vmatpush.bf16.msra.mxu0 %v158
  %258 = vmatpush.bf16.msra.mxu0 %v155
  %259 = vmatpush.bf16.msra.mxu0 %v152
  %260 = vmatpush.bf16.msra.mxu0 %v149
  %261 = vmatmul.bf16.gmra.mxu0 %v248
  %v262 = vpop.f32.mrf.mxu0
  %v263 = vadd.f32 %v190, %v262
  %v264 = vpop.f32.mrf.mxu0
  %v265 = vadd.f32 %v192, %v264
  %266 = vmatmul.bf16.gmra.mxu0 %v251
  %v267 = vpop.f32.mrf.mxu0
  %v268 = vadd.f32 %v195, %v267
  %v269 = vpop.f32.mrf.mxu0
  %v270 = vadd.f32 %v197, %v269
  %271 = vdwg.mxu0
  %272 = vmatpush.bf16.msra.mxu0 0
  %273 = vmatpush.bf16.msra.mxu0 0
  %274 = vmatpush.bf16.msra.mxu0 0
  %275 = vmatpush.bf16.msra.mxu0 0
  %276 = vmatpush.bf16.msra.mxu0 %v159
  %277 = vmatpush.bf16.msra.mxu0 %v156
  %278 = vmatpush.bf16.msra.mxu0 %v153
  %279 = vmatpush.bf16.msra.mxu0 %v150
  %280 = vmatmul.bf16.gmra.mxu0 %v248
  %v281 = vpop.f32.mrf.mxu0
  %v282 = vadd.f32 %v209, %v281
  %v283 = vpop.f32.mrf.mxu0
  %v284 = vadd.f32 %v211, %v283
  %285 = vmatmul.bf16.gmra.mxu0 %v251
  %v286 = vpop.f32.mrf.mxu0
  %v287 = vadd.f32 %v214, %v286
  %v288 = vpop.f32.mrf.mxu0
  %v289 = vadd.f32 %v216, %v288
  %290 = vdwg.mxu0
  %291 = vmatpush.bf16.msra.mxu0 0
  %292 = vmatpush.bf16.msra.mxu0 0
  %293 = vmatpush.bf16.msra.mxu0 0
  %294 = vmatpush.bf16.msra.mxu0 0
  %295 = vmatpush.bf16.msra.mxu0 %v160
  %296 = vmatpush.bf16.msra.mxu0 %v157
  %297 = vmatpush.bf16.msra.mxu0 %v154
  %298 = vmatpush.bf16.msra.mxu0 %v151
  %299 = vmatmul.bf16.gmra.mxu0 %v248
  %v300 = vpop.f32.mrf.mxu0
  %v301 = vadd.f32 %v228, %v300
  %v302 = vpop.f32.mrf.mxu0
  %v303 = vadd.f32 %v230, %v302
  %304 = vmatmul.bf16.gmra.mxu0 %v251
  %v305 = vpop.f32.mrf.mxu0
  %v306 = vadd.f32 %v233, %v305
  %v307 = vpop.f32.mrf.mxu0
  %v308 = vadd.f32 %v235, %v307
  %309 = vdwg.mxu0
  %v326 = vunpack.c.l.b16 %v79
  %v327 = vunpack.c.h.b16 %v79
  %v328 = vunpack.c.l.b16 %v80
  %v329 = vunpack.c.l.b16 %v81
  %v330 = vunpack.c.h.b16 %v81
  %v331 = vunpack.c.l.b16 %v82
  %v332 = vunpack.c.l.b16 %v83
  %v333 = vunpack.c.h.b16 %v83
  %v334 = vunpack.c.l.b16 %v84
  %v335 = vunpack.c.l.b16 %v85
  %v336 = vunpack.c.h.b16 %v85
  %v337 = vunpack.c.l.b16 %v86
  %v338 = vunpack.c.l.b16 %v87
  %v339 = vunpack.c.h.b16 %v87
  %v340 = vunpack.c.l.b16 %v88
  %v341 = vunpack.c.l.b16 %v89
  %v342 = vunpack.c.h.b16 %v89
  %v343 = vunpack.c.l.b16 %v90
  %v344 = vunpack.c.l.b16 %v91
  %v345 = vunpack.c.h.b16 %v91
  %v346 = vunpack.c.l.b16 %v92
  %v347 = vunpack.c.l.b16 %v93
  %v348 = vunpack.c.h.b16 %v93
  %v349 = vunpack.c.l.b16 %v94
  %v350 = vpack.c.b16 %v329, %v326
  %v351 = vpack.c.b16 %v330, %v327
  %v352 = vpack.c.b16 %v331, %v328
  %v353 = vpack.c.b16 %v335, %v332
  %v354 = vpack.c.b16 %v336, %v333
  %v355 = vpack.c.b16 %v337, %v334
  %v356 = vpack.c.b16 %v341, %v338
  %v357 = vpack.c.b16 %v342, %v339
  %v358 = vpack.c.b16 %v343, %v340
  %v359 = vpack.c.b16 %v347, %v344
  %v360 = vpack.c.b16 %v348, %v345
  %v361 = vpack.c.b16 %v349, %v346
  %374 = vmatpush.bf16.msra.mxu0 0
  %375 = vmatpush.bf16.msra.mxu0 0
  %376 = vmatpush.bf16.msra.mxu0 0
  %377 = vmatpush.bf16.msra.mxu0 0
  %378 = vmatpush.bf16.msra.mxu0 %v359
  %379 = vmatpush.bf16.msra.mxu0 %v356
  %380 = vmatpush.bf16.msra.mxu0 %v353
  %381 = vmatpush.bf16.msra.mxu0 %v350
  %382 = vmatmul.bf16.gmra.mxu0 %v248
  %v383 = vpop.f32.mrf.mxu0
  %v384 = vadd.f32 0.0, %v383
  %v385 = vpop.f32.mrf.mxu0
  %v386 = vadd.f32 0.0, %v385
  %387 = vmatmul.bf16.gmra.mxu0 %v251
  %v388 = vpop.f32.mrf.mxu0
  %v389 = vadd.f32 0.0, %v388
  %v390 = vpop.f32.mrf.mxu0
  %v391 = vadd.f32 0.0, %v390
  %392 = vdwg.mxu0
  %393 = vmatpush.bf16.msra.mxu0 0
  %394 = vmatpush.bf16.msra.mxu0 0
  %395 = vmatpush.bf16.msra.mxu0 0
  %396 = vmatpush.bf16.msra.mxu0 0
  %397 = vmatpush.bf16.msra.mxu0 %v360
  %398 = vmatpush.bf16.msra.mxu0 %v357
  %399 = vmatpush.bf16.msra.mxu0 %v354
  %400 = vmatpush.bf16.msra.mxu0 %v351
  %401 = vmatmul.bf16.gmra.mxu0 %v248
  %v402 = vpop.f32.mrf.mxu0
  %v403 = vadd.f32 0.0, %v402
  %v404 = vpop.f32.mrf.mxu0
  %v405 = vadd.f32 0.0, %v404
  %406 = vmatmul.bf16.gmra.mxu0 %v251
  %v407 = vpop.f32.mrf.mxu0
  %v408 = vadd.f32 0.0, %v407
  %v409 = vpop.f32.mrf.mxu0
  %v410 = vadd.f32 0.0, %v409
  %411 = vdwg.mxu0
  %412 = vmatpush.bf16.msra.mxu0 0
  %413 = vmatpush.bf16.msra.mxu0 0
  %414 = vmatpush.bf16.msra.mxu0 0
  %415 = vmatpush.bf16.msra.mxu0 0
  %416 = vmatpush.bf16.msra.mxu0 %v361
  %417 = vmatpush.bf16.msra.mxu0 %v358
  %418 = vmatpush.bf16.msra.mxu0 %v355
  %419 = vmatpush.bf16.msra.mxu0 %v352
  %420 = vmatmul.bf16.gmra.mxu0 %v248
  %v421 = vpop.f32.mrf.mxu0
  %v422 = vadd.f32 0.0, %v421
  %v423 = vpop.f32.mrf.mxu0
  %v424 = vadd.f32 0.0, %v423
  %425 = vmatmul.bf16.gmra.mxu0 %v251
  %v426 = vpop.f32.mrf.mxu0
  %v427 = vadd.f32 0.0, %v426
  %v428 = vpop.f32.mrf.mxu0
  %v429 = vadd.f32 0.0, %v428
  %430 = vdwg.mxu0
  %v431 = vadd.f32 %v263, %v384
  %v432 = vadd.f32 %v282, %v403
  %v433 = vadd.f32 %v301, %v422
  %v434 = vadd.f32 %v265, %v386
  %v435 = vadd.f32 %v284, %v405
  %v436 = vadd.f32 %v303, %v424
  %v437 = vadd.f32 %v268, %v389
  %v438 = vadd.f32 %v287, %v408
  %v439 = vadd.f32 %v306, %v427
  %v440 = vadd.f32 %v270, %v391
  %v441 = vadd.f32 %v289, %v410
  %v442 = vadd.f32 %v308, %v429
  %vm445 = vcmask 1046528
  %v446 = vrot.slane %v432, 1
  %v447 = vrot.slane %v435, 1
  %v448 = vsel %vm445, %v446, %v447
  %v451 = vadd.f32 %v431, %v448
  %v452 = vadd.f32 %v434, %v447
  %vm455 = vcmask 1045504
  %v456 = vrot.slane %v433, 2
  %v457 = vrot.slane %v436, 2
  %v458 = vsel %vm455, %v456, %v457
  %v461 = vadd.f32 %v451, %v458
  %v462 = vadd.f32 %v452, %v457
  %v465 = vrot.slane %v438, 1
  %v466 = vrot.slane %v441, 1
  %v467 = vsel %vm445, %v465, %v466
  %v470 = vadd.f32 %v437, %v467
  %v471 = vadd.f32 %v440, %v466
  %v474 = vrot.slane %v439, 2
  %v475 = vrot.slane %v442, 2
  %v476 = vsel %vm455, %v474, %v475
  %v479 = vadd.f32 %v470, %v476
  %v480 = vadd.f32 %v471, %v475
  %v483 = vrot.slane %v479, 2
  %v484 = vrot.slane %v480, 2
  %v485 = vsel %vm455, %v483, %v484
  %v489 = vsel %vm455, %v462, %v483
  %v490 = vld [vmem:[%s5] sm:$0xff]
  %v491 = vld [vmem:[%s5 + $0x8] sm:$0xff]
  %v492 = vld [vmem:[%s5 + $0x10] sm:$0xff]
  %v493 = vld [vmem:[%s5 + $0x18] sm:$0xff]
  %v494 = vld [vmem:[%s5 + $0x20] sm:$0xff]
  %v495 = vld [vmem:[%s5 + $0x28] sm:$0xff]
  %v496 = vld [vmem:[%s5 + $0x30] sm:$0xff]
  %v497 = vld [vmem:[%s5 + $0x38] sm:$0xff]
  %v498 = vld [vmem:[%s5 + $0x40] sm:$0xff]
  %v499 = vld [vmem:[%s5 + $0x48] sm:$0xff]
  %v500 = vld [vmem:[%s5 + $0x50] sm:$0xff]
  %v501 = vld [vmem:[%s5 + $0x58] sm:$0xff]
  %v502 = vld [vmem:[%s5 + $0x60] sm:$0xff]
  %v503 = vld [vmem:[%s5 + $0x68] sm:$0xff]
  %v504 = vld [vmem:[%s5 + $0x70] sm:$0xff]
  %v505 = vld [vmem:[%s5 + $0x78] sm:$0xff]
  %v506 = vld [vmem:[%s6] sm:$0xff]
  %v507 = vld [vmem:[%s9] sm:$0x1]
  %v508 = vld [vmem:[%s10] sm:$0x1]
  %v509 = vadd.f32 %v461, %v489
  %v510 = vadd.f32 %v509, %v485
  %vm511 = vcmask 1043456
  %v512 = vsel %vm511, %v484, 0.0
  %v513 = vadd.f32 %v510, %v512
  %v514 = vrot.slane %v513, 4
  %v515 = vadd.f32 %v513, %v514
  %v516 = vrot.slane %v515, 2
  %v517 = vadd.f32 %v515, %v516
  %v518 = vrot.slane %v517, 1
  %v519 = vadd.f32 %v517, %v518
  %v520 = vmul.f32 %v461, %v461
  %v521 = vmul.f32 %v489, %v489
  %v522 = vmul.f32 %v485, %v485
  %v523 = vmul.f32 %v484, %v484
  %v524 = vadd.f32 %v520, %v521
  %v525 = vadd.f32 %v524, %v522
  %v526 = vsel %vm511, %v523, 0.0
  %v527 = vadd.f32 %v525, %v526
  %v528 = vrot.slane %v527, 4
  %v529 = vadd.f32 %v527, %v528
  %v530 = vrot.slane %v529, 2
  %v531 = vadd.f32 %v529, %v530
  %v532 = vrot.slane %v531, 1
  %v533 = vadd.f32 %v531, %v532
  %vm534 = vcmask 1040384
  %v535 = vsel %vm534, %v519, %v533
  %v536 = vand.u32 %v505, 4294901760
  %537 = vmatpush.msra.mxu0 %v536
  %v538 = vand.u32 %v504, 4294901760
  %539 = vmatpush.msra.mxu0 %v538
  %v540 = vand.u32 %v503, 4294901760
  %541 = vmatpush.msra.mxu0 %v540
  %v542 = vand.u32 %v502, 4294901760
  %543 = vmatpush.msra.mxu0 %v542
  %v544 = vand.u32 %v501, 4294901760
  %545 = vmatpush.msra.mxu0 %v544
  %v546 = vand.u32 %v500, 4294901760
  %547 = vmatpush.msra.mxu0 %v546
  %v548 = vand.u32 %v499, 4294901760
  %549 = vmatpush.msra.mxu0 %v548
  %v550 = vand.u32 %v498, 4294901760
  %551 = vmatpush.msra.mxu0 %v550
  %v552 = vand.u32 %v497, 4294901760
  %553 = vmatpush.msra.mxu0 %v552
  %v554 = vand.u32 %v496, 4294901760
  %555 = vmatpush.msra.mxu0 %v554
  %v556 = vand.u32 %v495, 4294901760
  %557 = vmatpush.msra.mxu0 %v556
  %v558 = vand.u32 %v494, 4294901760
  %559 = vmatpush.msra.mxu0 %v558
  %v560 = vand.u32 %v493, 4294901760
  %561 = vmatpush.msra.mxu0 %v560
  %v562 = vand.u32 %v492, 4294901760
  %563 = vmatpush.msra.mxu0 %v562
  %v564 = vand.u32 %v491, 4294901760
  %565 = vmatpush.msra.mxu0 %v564
  %v566 = vand.u32 %v490, 4294901760
  %567 = vmatpush.msra.mxu0 %v566
  %v568 = vand.u32 %v535, 4294901760
  %v569 = vsub.f32 %v535, %v568
  %v570 = vand.u32 %v569, 4294901760
  %v571 = vsub.f32 %v569, %v570
  %v572 = vand.u32 %v571, 4294901760
  %573 = vmatmul.f32.gmra.mxu0 %v572
  %v574 = vpop.f32.mrf.mxu0
  %v575 = vadd.f32 0.0, %v574
  %576 = vdwg.mxu0
  %v577 = vand.u32 %v505, 4294901760
  %v578 = vsub.f32 %v505, %v577
  %v579 = vand.u32 %v578, 4294901760
  %v580 = vsub.f32 %v578, %v579
  %v581 = vand.u32 %v580, 4294901760
  %582 = vmatpush.msra.mxu0 %v581
  %v583 = vand.u32 %v504, 4294901760
  %v584 = vsub.f32 %v504, %v583
  %v585 = vand.u32 %v584, 4294901760
  %v586 = vsub.f32 %v584, %v585
  %v587 = vand.u32 %v586, 4294901760
  %588 = vmatpush.msra.mxu0 %v587
  %v589 = vand.u32 %v503, 4294901760
  %v590 = vsub.f32 %v503, %v589
  %v591 = vand.u32 %v590, 4294901760
  %v592 = vsub.f32 %v590, %v591
  %v593 = vand.u32 %v592, 4294901760
  %594 = vmatpush.msra.mxu0 %v593
  %v595 = vand.u32 %v502, 4294901760
  %v596 = vsub.f32 %v502, %v595
  %v597 = vand.u32 %v596, 4294901760
  %v598 = vsub.f32 %v596, %v597
  %v599 = vand.u32 %v598, 4294901760
  %600 = vmatpush.msra.mxu0 %v599
  %v601 = vand.u32 %v501, 4294901760
  %v602 = vsub.f32 %v501, %v601
  %v603 = vand.u32 %v602, 4294901760
  %v604 = vsub.f32 %v602, %v603
  %v605 = vand.u32 %v604, 4294901760
  %606 = vmatpush.msra.mxu0 %v605
  %v607 = vand.u32 %v500, 4294901760
  %v608 = vsub.f32 %v500, %v607
  %v609 = vand.u32 %v608, 4294901760
  %v610 = vsub.f32 %v608, %v609
  %v611 = vand.u32 %v610, 4294901760
  %612 = vmatpush.msra.mxu0 %v611
  %v613 = vand.u32 %v499, 4294901760
  %v614 = vsub.f32 %v499, %v613
  %v615 = vand.u32 %v614, 4294901760
  %v616 = vsub.f32 %v614, %v615
  %v617 = vand.u32 %v616, 4294901760
  %618 = vmatpush.msra.mxu0 %v617
  %v619 = vand.u32 %v498, 4294901760
  %v620 = vsub.f32 %v498, %v619
  %v621 = vand.u32 %v620, 4294901760
  %v622 = vsub.f32 %v620, %v621
  %v623 = vand.u32 %v622, 4294901760
  %624 = vmatpush.msra.mxu0 %v623
  %v625 = vand.u32 %v497, 4294901760
  %v626 = vsub.f32 %v497, %v625
  %v627 = vand.u32 %v626, 4294901760
  %v628 = vsub.f32 %v626, %v627
  %v629 = vand.u32 %v628, 4294901760
  %630 = vmatpush.msra.mxu0 %v629
  %v631 = vand.u32 %v496, 4294901760
  %v632 = vsub.f32 %v496, %v631
  %v633 = vand.u32 %v632, 4294901760
  %v634 = vsub.f32 %v632, %v633
  %v635 = vand.u32 %v634, 4294901760
  %636 = vmatpush.msra.mxu0 %v635
  %v637 = vand.u32 %v495, 4294901760
  %v638 = vsub.f32 %v495, %v637
  %v639 = vand.u32 %v638, 4294901760
  %v640 = vsub.f32 %v638, %v639
  %v641 = vand.u32 %v640, 4294901760
  %642 = vmatpush.msra.mxu0 %v641
  %v643 = vand.u32 %v494, 4294901760
  %v644 = vsub.f32 %v494, %v643
  %v645 = vand.u32 %v644, 4294901760
  %v646 = vsub.f32 %v644, %v645
  %v647 = vand.u32 %v646, 4294901760
  %648 = vmatpush.msra.mxu0 %v647
  %v649 = vand.u32 %v493, 4294901760
  %v650 = vsub.f32 %v493, %v649
  %v651 = vand.u32 %v650, 4294901760
  %v652 = vsub.f32 %v650, %v651
  %v653 = vand.u32 %v652, 4294901760
  %654 = vmatpush.msra.mxu0 %v653
  %v655 = vand.u32 %v492, 4294901760
  %v656 = vsub.f32 %v492, %v655
  %v657 = vand.u32 %v656, 4294901760
  %v658 = vsub.f32 %v656, %v657
  %v659 = vand.u32 %v658, 4294901760
  %660 = vmatpush.msra.mxu0 %v659
  %v661 = vand.u32 %v491, 4294901760
  %v662 = vsub.f32 %v491, %v661
  %v663 = vand.u32 %v662, 4294901760
  %v664 = vsub.f32 %v662, %v663
  %v665 = vand.u32 %v664, 4294901760
  %666 = vmatpush.msra.mxu0 %v665
  %v667 = vand.u32 %v490, 4294901760
  %v668 = vsub.f32 %v490, %v667
  %v669 = vand.u32 %v668, 4294901760
  %v670 = vsub.f32 %v668, %v669
  %v671 = vand.u32 %v670, 4294901760
  %672 = vmatpush.msra.mxu0 %v671
  %v673 = vand.u32 %v535, 4294901760
  %674 = vmatmul.f32.gmra.mxu0 %v673
  %v675 = vpop.f32.mrf.mxu0
  %v676 = vadd.f32 %v575, %v675
  %677 = vdwg.mxu0
  %v678 = vand.u32 %v505, 4294901760
  %v679 = vsub.f32 %v505, %v678
  %680 = vmatpush.msra.mxu0 %v679
  %v681 = vand.u32 %v504, 4294901760
  %v682 = vsub.f32 %v504, %v681
  %683 = vmatpush.msra.mxu0 %v682
  %v684 = vand.u32 %v503, 4294901760
  %v685 = vsub.f32 %v503, %v684
  %686 = vmatpush.msra.mxu0 %v685
  %v687 = vand.u32 %v502, 4294901760
  %v688 = vsub.f32 %v502, %v687
  %689 = vmatpush.msra.mxu0 %v688
  %v690 = vand.u32 %v501, 4294901760
  %v691 = vsub.f32 %v501, %v690
  %692 = vmatpush.msra.mxu0 %v691
  %v693 = vand.u32 %v500, 4294901760
  %v694 = vsub.f32 %v500, %v693
  %695 = vmatpush.msra.mxu0 %v694
  %v696 = vand.u32 %v499, 4294901760
  %v697 = vsub.f32 %v499, %v696
  %698 = vmatpush.msra.mxu0 %v697
  %v699 = vand.u32 %v498, 4294901760
  %v700 = vsub.f32 %v498, %v699
  %701 = vmatpush.msra.mxu0 %v700
  %v702 = vand.u32 %v497, 4294901760
  %v703 = vsub.f32 %v497, %v702
  %704 = vmatpush.msra.mxu0 %v703
  %v705 = vand.u32 %v496, 4294901760
  %v706 = vsub.f32 %v496, %v705
  %707 = vmatpush.msra.mxu0 %v706
  %v708 = vand.u32 %v495, 4294901760
  %v709 = vsub.f32 %v495, %v708
  %710 = vmatpush.msra.mxu0 %v709
  %v711 = vand.u32 %v494, 4294901760
  %v712 = vsub.f32 %v494, %v711
  %713 = vmatpush.msra.mxu0 %v712
  %v714 = vand.u32 %v493, 4294901760
  %v715 = vsub.f32 %v493, %v714
  %716 = vmatpush.msra.mxu0 %v715
  %v717 = vand.u32 %v492, 4294901760
  %v718 = vsub.f32 %v492, %v717
  %719 = vmatpush.msra.mxu0 %v718
  %v720 = vand.u32 %v491, 4294901760
  %v721 = vsub.f32 %v491, %v720
  %722 = vmatpush.msra.mxu0 %v721
  %v723 = vand.u32 %v490, 4294901760
  %v724 = vsub.f32 %v490, %v723
  %725 = vmatpush.msra.mxu0 %v724
  %v726 = vand.u32 %v535, 4294901760
  %v727 = vsub.f32 %v535, %v726
  %728 = vmatmul.f32.gmra.mxu0 %v727
  %v729 = vpop.f32.mrf.mxu0
  %v730 = vadd.f32 %v676, %v729
  %731 = vdwg.mxu0
  %v732 = vand.u32 %v505, 4294901760
  %733 = vmatpush.msra.mxu0 %v732
  %v734 = vand.u32 %v504, 4294901760
  %735 = vmatpush.msra.mxu0 %v734
  %v736 = vand.u32 %v503, 4294901760
  %737 = vmatpush.msra.mxu0 %v736
  %v738 = vand.u32 %v502, 4294901760
  %739 = vmatpush.msra.mxu0 %v738
  %v740 = vand.u32 %v501, 4294901760
  %741 = vmatpush.msra.mxu0 %v740
  %v742 = vand.u32 %v500, 4294901760
  %743 = vmatpush.msra.mxu0 %v742
  %v744 = vand.u32 %v499, 4294901760
  %745 = vmatpush.msra.mxu0 %v744
  %v746 = vand.u32 %v498, 4294901760
  %747 = vmatpush.msra.mxu0 %v746
  %v748 = vand.u32 %v497, 4294901760
  %749 = vmatpush.msra.mxu0 %v748
  %v750 = vand.u32 %v496, 4294901760
  %751 = vmatpush.msra.mxu0 %v750
  %v752 = vand.u32 %v495, 4294901760
  %753 = vmatpush.msra.mxu0 %v752
  %v754 = vand.u32 %v494, 4294901760
  %755 = vmatpush.msra.mxu0 %v754
  %v756 = vand.u32 %v493, 4294901760
  %757 = vmatpush.msra.mxu0 %v756
  %v758 = vand.u32 %v492, 4294901760
  %759 = vmatpush.msra.mxu0 %v758
  %v760 = vand.u32 %v491, 4294901760
  %761 = vmatpush.msra.mxu0 %v760
  %v762 = vand.u32 %v490, 4294901760
  %763 = vmatpush.msra.mxu0 %v762
  %v764 = vand.u32 %v535, 4294901760
  %v765 = vsub.f32 %v535, %v764
  %v766 = vand.u32 %v765, 4294901760
  %767 = vmatmul.f32.gmra.mxu0 %v766
  %v768 = vpop.f32.mrf.mxu0
  %v769 = vadd.f32 %v730, %v768
  %770 = vdwg.mxu0
  %v771 = vand.u32 %v505, 4294901760
  %v772 = vsub.f32 %v505, %v771
  %v773 = vand.u32 %v772, 4294901760
  %774 = vmatpush.msra.mxu0 %v773
  %v775 = vand.u32 %v504, 4294901760
  %v776 = vsub.f32 %v504, %v775
  %v777 = vand.u32 %v776, 4294901760
  %778 = vmatpush.msra.mxu0 %v777
  %v779 = vand.u32 %v503, 4294901760
  %v780 = vsub.f32 %v503, %v779
  %v781 = vand.u32 %v780, 4294901760
  %782 = vmatpush.msra.mxu0 %v781
  %v783 = vand.u32 %v502, 4294901760
  %v784 = vsub.f32 %v502, %v783
  %v785 = vand.u32 %v784, 4294901760
  %786 = vmatpush.msra.mxu0 %v785
  %v787 = vand.u32 %v501, 4294901760
  %v788 = vsub.f32 %v501, %v787
  %v789 = vand.u32 %v788, 4294901760
  %790 = vmatpush.msra.mxu0 %v789
  %v791 = vand.u32 %v500, 4294901760
  %v792 = vsub.f32 %v500, %v791
  %v793 = vand.u32 %v792, 4294901760
  %794 = vmatpush.msra.mxu0 %v793
  %v795 = vand.u32 %v499, 4294901760
  %v796 = vsub.f32 %v499, %v795
  %v797 = vand.u32 %v796, 4294901760
  %798 = vmatpush.msra.mxu0 %v797
  %v799 = vand.u32 %v498, 4294901760
  %v800 = vsub.f32 %v498, %v799
  %v801 = vand.u32 %v800, 4294901760
  %802 = vmatpush.msra.mxu0 %v801
  %v803 = vand.u32 %v497, 4294901760
  %v804 = vsub.f32 %v497, %v803
  %v805 = vand.u32 %v804, 4294901760
  %806 = vmatpush.msra.mxu0 %v805
  %v807 = vand.u32 %v496, 4294901760
  %v808 = vsub.f32 %v496, %v807
  %v809 = vand.u32 %v808, 4294901760
  %810 = vmatpush.msra.mxu0 %v809
  %v811 = vand.u32 %v495, 4294901760
  %v812 = vsub.f32 %v495, %v811
  %v813 = vand.u32 %v812, 4294901760
  %814 = vmatpush.msra.mxu0 %v813
  %v815 = vand.u32 %v494, 4294901760
  %v816 = vsub.f32 %v494, %v815
  %v817 = vand.u32 %v816, 4294901760
  %818 = vmatpush.msra.mxu0 %v817
  %v819 = vand.u32 %v493, 4294901760
  %v820 = vsub.f32 %v493, %v819
  %v821 = vand.u32 %v820, 4294901760
  %822 = vmatpush.msra.mxu0 %v821
  %v823 = vand.u32 %v492, 4294901760
  %v824 = vsub.f32 %v492, %v823
  %v825 = vand.u32 %v824, 4294901760
  %826 = vmatpush.msra.mxu0 %v825
  %v827 = vand.u32 %v491, 4294901760
  %v828 = vsub.f32 %v491, %v827
  %v829 = vand.u32 %v828, 4294901760
  %830 = vmatpush.msra.mxu0 %v829
  %v831 = vand.u32 %v490, 4294901760
  %v832 = vsub.f32 %v490, %v831
  %v833 = vand.u32 %v832, 4294901760
  %834 = vmatpush.msra.mxu0 %v833
  %v835 = vand.u32 %v535, 4294901760
  %836 = vmatmul.f32.gmra.mxu0 %v835
  %v837 = vpop.f32.mrf.mxu0
  %v838 = vadd.f32 %v769, %v837
  %839 = vdwg.mxu0
  %v840 = vand.u32 %v505, 4294901760
  %841 = vmatpush.msra.mxu0 %v840
  %v842 = vand.u32 %v504, 4294901760
  %843 = vmatpush.msra.mxu0 %v842
  %v844 = vand.u32 %v503, 4294901760
  %845 = vmatpush.msra.mxu0 %v844
  %v846 = vand.u32 %v502, 4294901760
  %847 = vmatpush.msra.mxu0 %v846
  %v848 = vand.u32 %v501, 4294901760
  %849 = vmatpush.msra.mxu0 %v848
  %v850 = vand.u32 %v500, 4294901760
  %851 = vmatpush.msra.mxu0 %v850
  %v852 = vand.u32 %v499, 4294901760
  %853 = vmatpush.msra.mxu0 %v852
  %v854 = vand.u32 %v498, 4294901760
  %855 = vmatpush.msra.mxu0 %v854
  %v856 = vand.u32 %v497, 4294901760
  %857 = vmatpush.msra.mxu0 %v856
  %v858 = vand.u32 %v496, 4294901760
  %859 = vmatpush.msra.mxu0 %v858
  %v860 = vand.u32 %v495, 4294901760
  %861 = vmatpush.msra.mxu0 %v860
  %v862 = vand.u32 %v494, 4294901760
  %863 = vmatpush.msra.mxu0 %v862
  %v864 = vand.u32 %v493, 4294901760
  %865 = vmatpush.msra.mxu0 %v864
  %v866 = vand.u32 %v492, 4294901760
  %867 = vmatpush.msra.mxu0 %v866
  %v868 = vand.u32 %v491, 4294901760
  %869 = vmatpush.msra.mxu0 %v868
  %v870 = vand.u32 %v490, 4294901760
  %871 = vmatpush.msra.mxu0 %v870
  %v872 = vand.u32 %v535, 4294901760
  %873 = vmatmul.f32.gmra.mxu0 %v872
  %v874 = vpop.f32.mrf.mxu0
  %v875 = vadd.f32 %v838, %v874
  %876 = vdwg.mxu0
  %v877 = vmul.f32 %v875, 0.0025510204
  %v878 = vmul.f32 %v877, %v877
  %v880 = vrot.slane %v878, 7
  %v882 = vsub.f32 %v877, %v880
  %v883 = vadd.f32 %v882, 1e-05
  %v884 = vrsqrt.pop %v883
  %v885 = vmul.f32 %v884, %v883
  %v886 = vmul.f32 %v885, %v884
  %v887 = vmul.f32 0.5, %v886
  %v888 = vsub.f32 1.5, %v887
  %v889 = vmul.f32 %v884, %v888
  %vm890 = vweird.f32 %v883
  %vm891 = vweird.f32 %v884
  %vm892 = vmor %vm890, %vm891
  %v893 = vsel %vm892, %v884, %v889
  %v895 = vperm.slane %v507, 0
  %v897 = vmul.f32 %v893, %v895
  %v899 = vrot.slane %v897, 1
  %v901 = vmul.f32 %v877, %v899
  %v902 = vsub.f32 %v508, %v901
  %v904 = vperm.slane %v902, 0
  %v906 = vsel %vm534, %v899, %v904
  %vm907 = vcmask 64512
  %v909 = vsel %vm907, %v906, 0
  %911 = vmatpush.msra.mxu0 0.0
  %912 = vmatpush.msra.mxu0 0.0
  %913 = vmatpush.msra.mxu0 0.0
  %914 = vmatpush.msra.mxu0 0.0
  %915 = vmatpush.msra.mxu0 0.0
  %916 = vmatpush.msra.mxu0 0.0
  %917 = vmatpush.msra.mxu0 0.0
  %918 = vmatpush.msra.mxu0 0.0
  %919 = vmatpush.msra.mxu0 0.0
  %920 = vmatpush.msra.mxu0 0.0
  %921 = vmatpush.msra.mxu0 0.0
  %922 = vmatpush.msra.mxu0 0.0
  %923 = vmatpush.msra.mxu0 0.0
  %924 = vmatpush.msra.mxu0 0.0
  %925 = vmatpush.msra.mxu0 0.0
  %v926 = vand.u32 %v506, 4294901760
  %927 = vmatpush.msra.mxu0 %v926
  %v928 = vand.u32 %v909, 4294901760
  %v929 = vsub.f32 %v909, %v928
  %v930 = vand.u32 %v929, 4294901760
  %v931 = vsub.f32 %v929, %v930
  %v932 = vand.u32 %v931, 4294901760
  %933 = vmatmul.f32.gmra.mxu0 %v932
  %v934 = vpop.f32.mrf.mxu0
  %v935 = vadd.f32 0.0, %v934
  %936 = vdwg.mxu0
  %937 = vmatpush.msra.mxu0 0.0
  %938 = vmatpush.msra.mxu0 0.0
  %939 = vmatpush.msra.mxu0 0.0
  %940 = vmatpush.msra.mxu0 0.0
  %941 = vmatpush.msra.mxu0 0.0
  %942 = vmatpush.msra.mxu0 0.0
  %943 = vmatpush.msra.mxu0 0.0
  %944 = vmatpush.msra.mxu0 0.0
  %945 = vmatpush.msra.mxu0 0.0
  %946 = vmatpush.msra.mxu0 0.0
  %947 = vmatpush.msra.mxu0 0.0
  %948 = vmatpush.msra.mxu0 0.0
  %949 = vmatpush.msra.mxu0 0.0
  %950 = vmatpush.msra.mxu0 0.0
  %951 = vmatpush.msra.mxu0 0.0
  %v952 = vand.u32 %v506, 4294901760
  %v953 = vsub.f32 %v506, %v952
  %v954 = vand.u32 %v953, 4294901760
  %v955 = vsub.f32 %v953, %v954
  %v956 = vand.u32 %v955, 4294901760
  %957 = vmatpush.msra.mxu0 %v956
  %v958 = vand.u32 %v909, 4294901760
  %959 = vmatmul.f32.gmra.mxu0 %v958
  %v960 = vpop.f32.mrf.mxu0
  %v961 = vadd.f32 %v935, %v960
  %962 = vdwg.mxu0
  %963 = vmatpush.msra.mxu0 0.0
  %964 = vmatpush.msra.mxu0 0.0
  %965 = vmatpush.msra.mxu0 0.0
  %966 = vmatpush.msra.mxu0 0.0
  %967 = vmatpush.msra.mxu0 0.0
  %968 = vmatpush.msra.mxu0 0.0
  %969 = vmatpush.msra.mxu0 0.0
  %970 = vmatpush.msra.mxu0 0.0
  %971 = vmatpush.msra.mxu0 0.0
  %972 = vmatpush.msra.mxu0 0.0
  %973 = vmatpush.msra.mxu0 0.0
  %974 = vmatpush.msra.mxu0 0.0
  %975 = vmatpush.msra.mxu0 0.0
  %976 = vmatpush.msra.mxu0 0.0
  %977 = vmatpush.msra.mxu0 0.0
  %v978 = vand.u32 %v506, 4294901760
  %v979 = vsub.f32 %v506, %v978
  %980 = vmatpush.msra.mxu0 %v979
  %v981 = vand.u32 %v909, 4294901760
  %v982 = vsub.f32 %v909, %v981
  %983 = vmatmul.f32.gmra.mxu0 %v982
  %v984 = vpop.f32.mrf.mxu0
  %v985 = vadd.f32 %v961, %v984
  %986 = vdwg.mxu0
  %987 = vmatpush.msra.mxu0 0.0
  %988 = vmatpush.msra.mxu0 0.0
  %989 = vmatpush.msra.mxu0 0.0
  %990 = vmatpush.msra.mxu0 0.0
  %991 = vmatpush.msra.mxu0 0.0
  %992 = vmatpush.msra.mxu0 0.0
  %993 = vmatpush.msra.mxu0 0.0
  %994 = vmatpush.msra.mxu0 0.0
  %995 = vmatpush.msra.mxu0 0.0
  %996 = vmatpush.msra.mxu0 0.0
  %997 = vmatpush.msra.mxu0 0.0
  %998 = vmatpush.msra.mxu0 0.0
  %999 = vmatpush.msra.mxu0 0.0
  %1000 = vmatpush.msra.mxu0 0.0
  %1001 = vmatpush.msra.mxu0 0.0
  %v1002 = vand.u32 %v506, 4294901760
  %1003 = vmatpush.msra.mxu0 %v1002
  %v1004 = vand.u32 %v909, 4294901760
  %v1005 = vsub.f32 %v909, %v1004
  %v1006 = vand.u32 %v1005, 4294901760
  %1007 = vmatmul.f32.gmra.mxu0 %v1006
  %v1008 = vpop.f32.mrf.mxu0
  %v1009 = vadd.f32 %v985, %v1008
  %1010 = vdwg.mxu0
  %1011 = vmatpush.msra.mxu0 0.0
  %1012 = vmatpush.msra.mxu0 0.0
  %1013 = vmatpush.msra.mxu0 0.0
  %1014 = vmatpush.msra.mxu0 0.0
  %1015 = vmatpush.msra.mxu0 0.0
  %1016 = vmatpush.msra.mxu0 0.0
  %1017 = vmatpush.msra.mxu0 0.0
  %1018 = vmatpush.msra.mxu0 0.0
  %1019 = vmatpush.msra.mxu0 0.0
  %1020 = vmatpush.msra.mxu0 0.0
  %1021 = vmatpush.msra.mxu0 0.0
  %1022 = vmatpush.msra.mxu0 0.0
  %1023 = vmatpush.msra.mxu0 0.0
  %1024 = vmatpush.msra.mxu0 0.0
  %1025 = vmatpush.msra.mxu0 0.0
  %v1026 = vand.u32 %v506, 4294901760
  %v1027 = vsub.f32 %v506, %v1026
  %v1028 = vand.u32 %v1027, 4294901760
  %1029 = vmatpush.msra.mxu0 %v1028
  %v1030 = vand.u32 %v909, 4294901760
  %1031 = vmatmul.f32.gmra.mxu0 %v1030
  %v1032 = vpop.f32.mrf.mxu0
  %v1033 = vadd.f32 %v1009, %v1032
  %1034 = vdwg.mxu0
  %1035 = vmatpush.msra.mxu0 0.0
  %1036 = vmatpush.msra.mxu0 0.0
  %1037 = vmatpush.msra.mxu0 0.0
  %1038 = vmatpush.msra.mxu0 0.0
  %1039 = vmatpush.msra.mxu0 0.0
  %1040 = vmatpush.msra.mxu0 0.0
  %1041 = vmatpush.msra.mxu0 0.0
  %1042 = vmatpush.msra.mxu0 0.0
  %1043 = vmatpush.msra.mxu0 0.0
  %1044 = vmatpush.msra.mxu0 0.0
  %1045 = vmatpush.msra.mxu0 0.0
  %1046 = vmatpush.msra.mxu0 0.0
  %1047 = vmatpush.msra.mxu0 0.0
  %1048 = vmatpush.msra.mxu0 0.0
  %1049 = vmatpush.msra.mxu0 0.0
  %v1050 = vand.u32 %v506, 4294901760
  %1051 = vmatpush.msra.mxu0 %v1050
  %v1052 = vand.u32 %v909, 4294901760
  %1053 = vmatmul.f32.gmra.mxu0 %v1052
  %v1054 = vpop.f32.mrf.mxu0
  %v1055 = vadd.f32 %v1033, %v1054
  %1056 = vdwg.mxu0
  %v1057 = vperm.slane %v1055, 0
  %v1058 = vmul.f32 %v461, %v1057
  %v1059 = vmul.f32 %v489, %v1057
  %v1060 = vmul.f32 %v485, %v1057
  %v1061 = vmul.f32 %v484, %v1057
  %v1062 = vperm.slane %v1055, 1
  %v1063 = vadd.f32 %v1058, %v1062
  %v1064 = vadd.f32 %v1059, %v1062
  %v1065 = vadd.f32 %v1060, %v1062
  %v1066 = vadd.f32 %v1061, %v1062
  %v1067 = vmax.f32 %v1063, 0.0
  %v1068 = vmax.f32 %v1064, 0.0
  %v1069 = vmax.f32 %v1065, 0.0
  %v1070 = vmax.f32 %v1066, 0.0
  %v1071 = vld [vmem:[%s3] sm:$0xff]
  %v1072 = vld [vmem:[%s3 + $0x8] sm:$0xf]
  %v1073 = vld [vmem:[%s3 + $0xc] sm:$0xff]
  %v1074 = vld [vmem:[%s3 + $0x14] sm:$0xf]
  %v1075 = vld [vmem:[%s3 + $0x18] sm:$0xff]
  %v1076 = vld [vmem:[%s3 + $0x20] sm:$0xf]
  %v1077 = vld [vmem:[%s3 + $0x24] sm:$0xff]
  %v1078 = vld [vmem:[%s3 + $0x2c] sm:$0xf]
  %v1079 = vld [vmem:[%s3 + $0x30] sm:$0xff]
  %v1080 = vld [vmem:[%s3 + $0x38] sm:$0xf]
  %v1081 = vld [vmem:[%s3 + $0x3c] sm:$0xff]
  %v1082 = vld [vmem:[%s3 + $0x44] sm:$0xf]
  %v1083 = vld [vmem:[%s3 + $0x48] sm:$0xff]
  %v1084 = vld [vmem:[%s3 + $0x50] sm:$0xf]
  %v1085 = vld [vmem:[%s3 + $0x54] sm:$0xff]
  %v1086 = vld [vmem:[%s3 + $0x5c] sm:$0xf]
  %v1087 = vld [vmem:[%s3 + $0x60] sm:$0xff]
  %v1088 = vld [vmem:[%s3 + $0x68] sm:$0xf]
  %v1089 = vld [vmem:[%s3 + $0x6c] sm:$0xff]
  %v1090 = vld [vmem:[%s3 + $0x74] sm:$0xf]
  %v1091 = vld [vmem:[%s3 + $0x78] sm:$0xff]
  %v1092 = vld [vmem:[%s3 + $0x80] sm:$0xf]
  %v1093 = vld [vmem:[%s3 + $0x84] sm:$0xff]
  %v1094 = vld [vmem:[%s3 + $0x8c] sm:$0xf]
  %v1095 = vld [vmem:[%s3 + $0x90] sm:$0xff]
  %v1096 = vld [vmem:[%s3 + $0x98] sm:$0xf]
  %v1097 = vld [vmem:[%s3 + $0x9c] sm:$0xff]
  %v1098 = vld [vmem:[%s3 + $0xa4] sm:$0xf]
  %v1099 = vld [vmem:[%s3 + $0xa8] sm:$0xff]
  %v1100 = vld [vmem:[%s3 + $0xb0] sm:$0xf]
  %v1101 = vld [vmem:[%s3 + $0xb4] sm:$0xff]
  %v1102 = vld [vmem:[%s3 + $0xbc] sm:$0xf]
  %v1103 = vld [vmem:[%s4] sm:$0xff]
  %v1104 = vld [vmem:[%s4 + $0x8] sm:$0xf]
  %v1105 = vld [vmem:[%s4 + $0xc] sm:$0xff]
  %v1106 = vld [vmem:[%s4 + $0x14] sm:$0xf]
  %v1107 = vld [vmem:[%s4 + $0x18] sm:$0xff]
  %v1108 = vld [vmem:[%s4 + $0x20] sm:$0xf]
  %v1109 = vld [vmem:[%s4 + $0x24] sm:$0xff]
  %v1110 = vld [vmem:[%s4 + $0x2c] sm:$0xf]
  %v1111 = vld [vmem:[%s4 + $0x30] sm:$0xff]
  %v1112 = vld [vmem:[%s4 + $0x38] sm:$0xf]
  %v1113 = vld [vmem:[%s4 + $0x3c] sm:$0xff]
  %v1114 = vld [vmem:[%s4 + $0x44] sm:$0xf]
  %v1115 = vld [vmem:[%s4 + $0x48] sm:$0xff]
  %v1116 = vld [vmem:[%s4 + $0x50] sm:$0xf]
  %v1117 = vld [vmem:[%s4 + $0x54] sm:$0xff]
  %v1118 = vld [vmem:[%s4 + $0x5c] sm:$0xf]
  %v1119 = vld [vmem:[%s4 + $0x60] sm:$0xff]
  %v1120 = vld [vmem:[%s4 + $0x68] sm:$0xf]
  %v1121 = vld [vmem:[%s4 + $0x6c] sm:$0xff]
  %v1122 = vld [vmem:[%s4 + $0x74] sm:$0xf]
  %v1123 = vld [vmem:[%s4 + $0x78] sm:$0xff]
  %v1124 = vld [vmem:[%s4 + $0x80] sm:$0xf]
  %v1125 = vld [vmem:[%s4 + $0x84] sm:$0xff]
  %v1126 = vld [vmem:[%s4 + $0x8c] sm:$0xf]
  %v1127 = vld [vmem:[%s4 + $0x90] sm:$0xff]
  %v1128 = vld [vmem:[%s4 + $0x98] sm:$0xf]
  %v1129 = vld [vmem:[%s4 + $0x9c] sm:$0xff]
  %v1130 = vld [vmem:[%s4 + $0xa4] sm:$0xf]
  %v1131 = vld [vmem:[%s4 + $0xa8] sm:$0xff]
  %v1132 = vld [vmem:[%s4 + $0xb0] sm:$0xf]
  %v1133 = vld [vmem:[%s4 + $0xb4] sm:$0xff]
  %v1134 = vld [vmem:[%s4 + $0xbc] sm:$0xf]
  %v1135 = vpack.c.bf16 %v1067, %v1067
  %v1136 = vpack.c.bf16 %v1068, %v1068
  %v1137 = vpack.c.bf16 %v1069, %v1069
  %v1138 = vpack.c.bf16 %v1070, %v1070
  %v1139 = vunpack.c.l.bf16 %v1135
  %v1140 = vunpack.c.l.bf16 %v1136
  %v1141 = vunpack.c.l.bf16 %v1137
  %v1142 = vunpack.c.l.bf16 %v1138
  %v1143 = vsub.f32 %v1067, %v1139
  %v1144 = vsub.f32 %v1068, %v1140
  %v1145 = vsub.f32 %v1069, %v1141
  %v1146 = vsub.f32 %v1070, %v1142
  %v1147 = vpack.c.bf16 %v1144, %v1143
  %v1148 = vpack.c.bf16 %v1146, %v1145
  %v1181 = vunpack.c.l.b16 %v1071
  %v1182 = vunpack.c.h.b16 %v1071
  %v1183 = vunpack.c.l.b16 %v1072
  %v1184 = vunpack.c.l.b16 %v1073
  %v1185 = vunpack.c.h.b16 %v1073
  %v1186 = vunpack.c.l.b16 %v1074
  %v1187 = vunpack.c.l.b16 %v1075
  %v1188 = vunpack.c.h.b16 %v1075
  %v1189 = vunpack.c.l.b16 %v1076
  %v1190 = vunpack.c.l.b16 %v1077
  %v1191 = vunpack.c.h.b16 %v1077
  %v1192 = vunpack.c.l.b16 %v1078
  %v1193 = vunpack.c.l.b16 %v1079
  %v1194 = vunpack.c.h.b16 %v1079
  %v1195 = vunpack.c.l.b16 %v1080
  %v1196 = vunpack.c.l.b16 %v1081
  %v1197 = vunpack.c.h.b16 %v1081
  %v1198 = vunpack.c.l.b16 %v1082
  %v1199 = vunpack.c.l.b16 %v1083
  %v1200 = vunpack.c.h.b16 %v1083
  %v1201 = vunpack.c.l.b16 %v1084
  %v1202 = vunpack.c.l.b16 %v1085
  %v1203 = vunpack.c.h.b16 %v1085
  %v1204 = vunpack.c.l.b16 %v1086
  %v1205 = vunpack.c.l.b16 %v1087
  %v1206 = vunpack.c.h.b16 %v1087
  %v1207 = vunpack.c.l.b16 %v1088
  %v1208 = vunpack.c.l.b16 %v1089
  %v1209 = vunpack.c.h.b16 %v1089
  %v1210 = vunpack.c.l.b16 %v1090
  %v1211 = vunpack.c.l.b16 %v1091
  %v1212 = vunpack.c.h.b16 %v1091
  %v1213 = vunpack.c.l.b16 %v1092
  %v1214 = vunpack.c.l.b16 %v1093
  %v1215 = vunpack.c.h.b16 %v1093
  %v1216 = vunpack.c.l.b16 %v1094
  %v1217 = vunpack.c.l.b16 %v1095
  %v1218 = vunpack.c.h.b16 %v1095
  %v1219 = vunpack.c.l.b16 %v1096
  %v1220 = vunpack.c.l.b16 %v1097
  %v1221 = vunpack.c.h.b16 %v1097
  %v1222 = vunpack.c.l.b16 %v1098
  %v1223 = vunpack.c.l.b16 %v1099
  %v1224 = vunpack.c.h.b16 %v1099
  %v1225 = vunpack.c.l.b16 %v1100
  %v1226 = vunpack.c.l.b16 %v1101
  %v1227 = vunpack.c.h.b16 %v1101
  %v1228 = vunpack.c.l.b16 %v1102
  %v1229 = vpack.c.b16 %v1184, %v1181
  %v1230 = vpack.c.b16 %v1185, %v1182
  %v1231 = vpack.c.b16 %v1186, %v1183
  %v1232 = vpack.c.b16 %v1190, %v1187
  %v1233 = vpack.c.b16 %v1191, %v1188
  %v1234 = vpack.c.b16 %v1192, %v1189
  %v1235 = vpack.c.b16 %v1196, %v1193
  %v1236 = vpack.c.b16 %v1197, %v1194
  %v1237 = vpack.c.b16 %v1198, %v1195
  %v1238 = vpack.c.b16 %v1202, %v1199
  %v1239 = vpack.c.b16 %v1203, %v1200
  %v1240 = vpack.c.b16 %v1204, %v1201
  %v1241 = vpack.c.b16 %v1208, %v1205
  %v1242 = vpack.c.b16 %v1209, %v1206
  %v1243 = vpack.c.b16 %v1210, %v1207
  %v1244 = vpack.c.b16 %v1214, %v1211
  %v1245 = vpack.c.b16 %v1215, %v1212
  %v1246 = vpack.c.b16 %v1216, %v1213
  %v1247 = vpack.c.b16 %v1220, %v1217
  %v1248 = vpack.c.b16 %v1221, %v1218
  %v1249 = vpack.c.b16 %v1222, %v1219
  %v1250 = vpack.c.b16 %v1226, %v1223
  %v1251 = vpack.c.b16 %v1227, %v1224
  %v1252 = vpack.c.b16 %v1228, %v1225
  %1277 = vmatpush.bf16.msra.mxu0 %v1250
  %1278 = vmatpush.bf16.msra.mxu0 %v1247
  %1279 = vmatpush.bf16.msra.mxu0 %v1244
  %1280 = vmatpush.bf16.msra.mxu0 %v1241
  %1281 = vmatpush.bf16.msra.mxu0 %v1238
  %1282 = vmatpush.bf16.msra.mxu0 %v1235
  %1283 = vmatpush.bf16.msra.mxu0 %v1232
  %1284 = vmatpush.bf16.msra.mxu0 %v1229
  %1285 = vmatmul.bf16.gmra.mxu0 %v1147
  %v1286 = vpop.f32.mrf.mxu0
  %v1287 = vadd.f32 0.0, %v1286
  %v1288 = vpop.f32.mrf.mxu0
  %v1289 = vadd.f32 0.0, %v1288
  %1290 = vmatmul.bf16.gmra.mxu0 %v1148
  %v1291 = vpop.f32.mrf.mxu0
  %v1292 = vadd.f32 0.0, %v1291
  %v1293 = vpop.f32.mrf.mxu0
  %v1294 = vadd.f32 0.0, %v1293
  %1295 = vdwg.mxu0
  %1296 = vmatpush.bf16.msra.mxu0 %v1251
  %1297 = vmatpush.bf16.msra.mxu0 %v1248
  %1298 = vmatpush.bf16.msra.mxu0 %v1245
  %1299 = vmatpush.bf16.msra.mxu0 %v1242
  %1300 = vmatpush.bf16.msra.mxu0 %v1239
  %1301 = vmatpush.bf16.msra.mxu0 %v1236
  %1302 = vmatpush.bf16.msra.mxu0 %v1233
  %1303 = vmatpush.bf16.msra.mxu0 %v1230
  %1304 = vmatmul.bf16.gmra.mxu0 %v1147
  %v1305 = vpop.f32.mrf.mxu0
  %v1306 = vadd.f32 0.0, %v1305
  %v1307 = vpop.f32.mrf.mxu0
  %v1308 = vadd.f32 0.0, %v1307
  %1309 = vmatmul.bf16.gmra.mxu0 %v1148
  %v1310 = vpop.f32.mrf.mxu0
  %v1311 = vadd.f32 0.0, %v1310
  %v1312 = vpop.f32.mrf.mxu0
  %v1313 = vadd.f32 0.0, %v1312
  %1314 = vdwg.mxu0
  %1315 = vmatpush.bf16.msra.mxu0 %v1252
  %1316 = vmatpush.bf16.msra.mxu0 %v1249
  %1317 = vmatpush.bf16.msra.mxu0 %v1246
  %1318 = vmatpush.bf16.msra.mxu0 %v1243
  %1319 = vmatpush.bf16.msra.mxu0 %v1240
  %1320 = vmatpush.bf16.msra.mxu0 %v1237
  %1321 = vmatpush.bf16.msra.mxu0 %v1234
  %1322 = vmatpush.bf16.msra.mxu0 %v1231
  %1323 = vmatmul.bf16.gmra.mxu0 %v1147
  %v1324 = vpop.f32.mrf.mxu0
  %v1325 = vadd.f32 0.0, %v1324
  %v1326 = vpop.f32.mrf.mxu0
  %v1327 = vadd.f32 0.0, %v1326
  %1328 = vmatmul.bf16.gmra.mxu0 %v1148
  %v1329 = vpop.f32.mrf.mxu0
  %v1330 = vadd.f32 0.0, %v1329
  %v1331 = vpop.f32.mrf.mxu0
  %v1332 = vadd.f32 0.0, %v1331
  %1333 = vdwg.mxu0
  %v1338 = vunpack.c.l.b16 %v1135
  %v1339 = vunpack.c.l.b16 %v1136
  %v1340 = vunpack.c.l.b16 %v1137
  %v1341 = vunpack.c.l.b16 %v1138
  %v1342 = vpack.c.b16 %v1339, %v1338
  %v1343 = vpack.c.b16 %v1341, %v1340
  %1346 = vmatpush.bf16.msra.mxu0 %v1250
  %1347 = vmatpush.bf16.msra.mxu0 %v1247
  %1348 = vmatpush.bf16.msra.mxu0 %v1244
  %1349 = vmatpush.bf16.msra.mxu0 %v1241
  %1350 = vmatpush.bf16.msra.mxu0 %v1238
  %1351 = vmatpush.bf16.msra.mxu0 %v1235
  %1352 = vmatpush.bf16.msra.mxu0 %v1232
  %1353 = vmatpush.bf16.msra.mxu0 %v1229
  %1354 = vmatmul.bf16.gmra.mxu0 %v1342
  %v1355 = vpop.f32.mrf.mxu0
  %v1356 = vadd.f32 %v1287, %v1355
  %v1357 = vpop.f32.mrf.mxu0
  %v1358 = vadd.f32 %v1289, %v1357
  %1359 = vmatmul.bf16.gmra.mxu0 %v1343
  %v1360 = vpop.f32.mrf.mxu0
  %v1361 = vadd.f32 %v1292, %v1360
  %v1362 = vpop.f32.mrf.mxu0
  %v1363 = vadd.f32 %v1294, %v1362
  %1364 = vdwg.mxu0
  %1365 = vmatpush.bf16.msra.mxu0 %v1251
  %1366 = vmatpush.bf16.msra.mxu0 %v1248
  %1367 = vmatpush.bf16.msra.mxu0 %v1245
  %1368 = vmatpush.bf16.msra.mxu0 %v1242
  %1369 = vmatpush.bf16.msra.mxu0 %v1239
  %1370 = vmatpush.bf16.msra.mxu0 %v1236
  %1371 = vmatpush.bf16.msra.mxu0 %v1233
  %1372 = vmatpush.bf16.msra.mxu0 %v1230
  %1373 = vmatmul.bf16.gmra.mxu0 %v1342
  %v1374 = vpop.f32.mrf.mxu0
  %v1375 = vadd.f32 %v1306, %v1374
  %v1376 = vpop.f32.mrf.mxu0
  %v1377 = vadd.f32 %v1308, %v1376
  %1378 = vmatmul.bf16.gmra.mxu0 %v1343
  %v1379 = vpop.f32.mrf.mxu0
  %v1380 = vadd.f32 %v1311, %v1379
  %v1381 = vpop.f32.mrf.mxu0
  %v1382 = vadd.f32 %v1313, %v1381
  %1383 = vdwg.mxu0
  %1384 = vmatpush.bf16.msra.mxu0 %v1252
  %1385 = vmatpush.bf16.msra.mxu0 %v1249
  %1386 = vmatpush.bf16.msra.mxu0 %v1246
  %1387 = vmatpush.bf16.msra.mxu0 %v1243
  %1388 = vmatpush.bf16.msra.mxu0 %v1240
  %1389 = vmatpush.bf16.msra.mxu0 %v1237
  %1390 = vmatpush.bf16.msra.mxu0 %v1234
  %1391 = vmatpush.bf16.msra.mxu0 %v1231
  %1392 = vmatmul.bf16.gmra.mxu0 %v1342
  %v1393 = vpop.f32.mrf.mxu0
  %v1394 = vadd.f32 %v1325, %v1393
  %v1395 = vpop.f32.mrf.mxu0
  %v1396 = vadd.f32 %v1327, %v1395
  %1397 = vmatmul.bf16.gmra.mxu0 %v1343
  %v1398 = vpop.f32.mrf.mxu0
  %v1399 = vadd.f32 %v1330, %v1398
  %v1400 = vpop.f32.mrf.mxu0
  %v1401 = vadd.f32 %v1332, %v1400
  %1402 = vdwg.mxu0
  %v1435 = vunpack.c.l.b16 %v1103
  %v1436 = vunpack.c.h.b16 %v1103
  %v1437 = vunpack.c.l.b16 %v1104
  %v1438 = vunpack.c.l.b16 %v1105
  %v1439 = vunpack.c.h.b16 %v1105
  %v1440 = vunpack.c.l.b16 %v1106
  %v1441 = vunpack.c.l.b16 %v1107
  %v1442 = vunpack.c.h.b16 %v1107
  %v1443 = vunpack.c.l.b16 %v1108
  %v1444 = vunpack.c.l.b16 %v1109
  %v1445 = vunpack.c.h.b16 %v1109
  %v1446 = vunpack.c.l.b16 %v1110
  %v1447 = vunpack.c.l.b16 %v1111
  %v1448 = vunpack.c.h.b16 %v1111
  %v1449 = vunpack.c.l.b16 %v1112
  %v1450 = vunpack.c.l.b16 %v1113
  %v1451 = vunpack.c.h.b16 %v1113
  %v1452 = vunpack.c.l.b16 %v1114
  %v1453 = vunpack.c.l.b16 %v1115
  %v1454 = vunpack.c.h.b16 %v1115
  %v1455 = vunpack.c.l.b16 %v1116
  %v1456 = vunpack.c.l.b16 %v1117
  %v1457 = vunpack.c.h.b16 %v1117
  %v1458 = vunpack.c.l.b16 %v1118
  %v1459 = vunpack.c.l.b16 %v1119
  %v1460 = vunpack.c.h.b16 %v1119
  %v1461 = vunpack.c.l.b16 %v1120
  %v1462 = vunpack.c.l.b16 %v1121
  %v1463 = vunpack.c.h.b16 %v1121
  %v1464 = vunpack.c.l.b16 %v1122
  %v1465 = vunpack.c.l.b16 %v1123
  %v1466 = vunpack.c.h.b16 %v1123
  %v1467 = vunpack.c.l.b16 %v1124
  %v1468 = vunpack.c.l.b16 %v1125
  %v1469 = vunpack.c.h.b16 %v1125
  %v1470 = vunpack.c.l.b16 %v1126
  %v1471 = vunpack.c.l.b16 %v1127
  %v1472 = vunpack.c.h.b16 %v1127
  %v1473 = vunpack.c.l.b16 %v1128
  %v1474 = vunpack.c.l.b16 %v1129
  %v1475 = vunpack.c.h.b16 %v1129
  %v1476 = vunpack.c.l.b16 %v1130
  %v1477 = vunpack.c.l.b16 %v1131
  %v1478 = vunpack.c.h.b16 %v1131
  %v1479 = vunpack.c.l.b16 %v1132
  %v1480 = vunpack.c.l.b16 %v1133
  %v1481 = vunpack.c.h.b16 %v1133
  %v1482 = vunpack.c.l.b16 %v1134
  %v1483 = vpack.c.b16 %v1438, %v1435
  %v1484 = vpack.c.b16 %v1439, %v1436
  %v1485 = vpack.c.b16 %v1440, %v1437
  %v1486 = vpack.c.b16 %v1444, %v1441
  %v1487 = vpack.c.b16 %v1445, %v1442
  %v1488 = vpack.c.b16 %v1446, %v1443
  %v1489 = vpack.c.b16 %v1450, %v1447
  %v1490 = vpack.c.b16 %v1451, %v1448
  %v1491 = vpack.c.b16 %v1452, %v1449
  %v1492 = vpack.c.b16 %v1456, %v1453
  %v1493 = vpack.c.b16 %v1457, %v1454
  %v1494 = vpack.c.b16 %v1458, %v1455
  %v1495 = vpack.c.b16 %v1462, %v1459
  %v1496 = vpack.c.b16 %v1463, %v1460
  %v1497 = vpack.c.b16 %v1464, %v1461
  %v1498 = vpack.c.b16 %v1468, %v1465
  %v1499 = vpack.c.b16 %v1469, %v1466
  %v1500 = vpack.c.b16 %v1470, %v1467
  %v1501 = vpack.c.b16 %v1474, %v1471
  %v1502 = vpack.c.b16 %v1475, %v1472
  %v1503 = vpack.c.b16 %v1476, %v1473
  %v1504 = vpack.c.b16 %v1480, %v1477
  %v1505 = vpack.c.b16 %v1481, %v1478
  %v1506 = vpack.c.b16 %v1482, %v1479
  %1531 = vmatpush.bf16.msra.mxu0 %v1504
  %1532 = vmatpush.bf16.msra.mxu0 %v1501
  %1533 = vmatpush.bf16.msra.mxu0 %v1498
  %1534 = vmatpush.bf16.msra.mxu0 %v1495
  %1535 = vmatpush.bf16.msra.mxu0 %v1492
  %1536 = vmatpush.bf16.msra.mxu0 %v1489
  %1537 = vmatpush.bf16.msra.mxu0 %v1486
  %1538 = vmatpush.bf16.msra.mxu0 %v1483
  %1539 = vmatmul.bf16.gmra.mxu0 %v1342
  %v1540 = vpop.f32.mrf.mxu0
  %v1541 = vadd.f32 0.0, %v1540
  %v1542 = vpop.f32.mrf.mxu0
  %v1543 = vadd.f32 0.0, %v1542
  %1544 = vmatmul.bf16.gmra.mxu0 %v1343
  %v1545 = vpop.f32.mrf.mxu0
  %v1546 = vadd.f32 0.0, %v1545
  %v1547 = vpop.f32.mrf.mxu0
  %v1548 = vadd.f32 0.0, %v1547
  %1549 = vdwg.mxu0
  %1550 = vmatpush.bf16.msra.mxu0 %v1505
  %1551 = vmatpush.bf16.msra.mxu0 %v1502
  %1552 = vmatpush.bf16.msra.mxu0 %v1499
  %1553 = vmatpush.bf16.msra.mxu0 %v1496
  %1554 = vmatpush.bf16.msra.mxu0 %v1493
  %1555 = vmatpush.bf16.msra.mxu0 %v1490
  %1556 = vmatpush.bf16.msra.mxu0 %v1487
  %1557 = vmatpush.bf16.msra.mxu0 %v1484
  %1558 = vmatmul.bf16.gmra.mxu0 %v1342
  %v1559 = vpop.f32.mrf.mxu0
  %v1560 = vadd.f32 0.0, %v1559
  %v1561 = vpop.f32.mrf.mxu0
  %v1562 = vadd.f32 0.0, %v1561
  %1563 = vmatmul.bf16.gmra.mxu0 %v1343
  %v1564 = vpop.f32.mrf.mxu0
  %v1565 = vadd.f32 0.0, %v1564
  %v1566 = vpop.f32.mrf.mxu0
  %v1567 = vadd.f32 0.0, %v1566
  %1568 = vdwg.mxu0
  %1569 = vmatpush.bf16.msra.mxu0 %v1506
  %1570 = vmatpush.bf16.msra.mxu0 %v1503
  %1571 = vmatpush.bf16.msra.mxu0 %v1500
  %1572 = vmatpush.bf16.msra.mxu0 %v1497
  %1573 = vmatpush.bf16.msra.mxu0 %v1494
  %1574 = vmatpush.bf16.msra.mxu0 %v1491
  %1575 = vmatpush.bf16.msra.mxu0 %v1488
  %1576 = vmatpush.bf16.msra.mxu0 %v1485
  %1577 = vmatmul.bf16.gmra.mxu0 %v1342
  %v1578 = vpop.f32.mrf.mxu0
  %v1579 = vadd.f32 0.0, %v1578
  %v1580 = vpop.f32.mrf.mxu0
  %v1581 = vadd.f32 0.0, %v1580
  %1582 = vmatmul.bf16.gmra.mxu0 %v1343
  %v1583 = vpop.f32.mrf.mxu0
  %v1584 = vadd.f32 0.0, %v1583
  %v1585 = vpop.f32.mrf.mxu0
  %v1586 = vadd.f32 0.0, %v1585
  %1587 = vdwg.mxu0
  %v1588 = vadd.f32 %v1356, %v1541
  %v1589 = vadd.f32 %v1375, %v1560
  %v1590 = vadd.f32 %v1394, %v1579
  %v1591 = vadd.f32 %v1358, %v1543
  %v1592 = vadd.f32 %v1377, %v1562
  %v1593 = vadd.f32 %v1396, %v1581
  %v1594 = vadd.f32 %v1361, %v1546
  %v1595 = vadd.f32 %v1380, %v1565
  %v1596 = vadd.f32 %v1399, %v1584
  %v1597 = vadd.f32 %v1363, %v1548
  %v1598 = vadd.f32 %v1382, %v1567
  %v1599 = vadd.f32 %v1401, %v1586
  %v1602 = vrot.slane %v1589, 1
  %v1603 = vrot.slane %v1592, 1
  %v1604 = vsel %vm445, %v1602, %v1603
  %v1607 = vadd.f32 %v1588, %v1604
  %v1608 = vadd.f32 %v1591, %v1603
  %v1611 = vrot.slane %v1590, 2
  %v1612 = vrot.slane %v1593, 2
  %v1613 = vsel %vm455, %v1611, %v1612
  %v1616 = vadd.f32 %v1607, %v1613
  %v1617 = vadd.f32 %v1608, %v1612
  %v1620 = vrot.slane %v1595, 1
  %v1621 = vsel %vm445, %v1603, %v1620
  %v1622 = vrot.slane %v1598, 1
  %v1623 = vsel %vm445, %v1620, %v1622
  %v1627 = vadd.f32 %v1591, %v1621
  %v1628 = vadd.f32 %v1594, %v1623
  %v1629 = vadd.f32 %v1597, %v1622
  %v1632 = vrot.slane %v1596, 2
  %v1633 = vrot.slane %v1599, 2
  %v1634 = vsel %vm455, %v1632, %v1633
  %v1638 = vadd.f32 %v1627, %v1632
  %v1639 = vadd.f32 %v1628, %v1634
  %v1640 = vadd.f32 %v1629, %v1633
  %v1644 = vrot.slane %v1638, 2
  %v1645 = vrot.slane %v1639, 2
  %v1646 = vsel %vm455, %v1644, %v1645
  %v1647 = vrot.slane %v1640, 2
  %v1648 = vsel %vm455, %v1645, %v1647
  %v1651 = vsel %vm511, %v1617, %v1646
  %v1652 = vld [vmem:[%s7] sm:$0xff]
  %v1653 = vld [vmem:[%s7 + $0x8] sm:$0xff]
  %v1654 = vld [vmem:[%s7 + $0x10] sm:$0xff]
  %v1655 = vld [vmem:[%s7 + $0x18] sm:$0xff]
  %v1656 = vld [vmem:[%s7 + $0x20] sm:$0xff]
  %v1657 = vld [vmem:[%s7 + $0x28] sm:$0xff]
  %v1658 = vld [vmem:[%s7 + $0x30] sm:$0xff]
  %v1659 = vld [vmem:[%s7 + $0x38] sm:$0xff]
  %v1660 = vld [vmem:[%s7 + $0x40] sm:$0xff]
  %v1661 = vld [vmem:[%s7 + $0x48] sm:$0xff]
  %v1662 = vld [vmem:[%s7 + $0x50] sm:$0xff]
  %v1663 = vld [vmem:[%s7 + $0x58] sm:$0xff]
  %v1664 = vld [vmem:[%s7 + $0x60] sm:$0xff]
  %v1665 = vld [vmem:[%s7 + $0x68] sm:$0xff]
  %v1666 = vld [vmem:[%s7 + $0x70] sm:$0xff]
  %v1667 = vld [vmem:[%s7 + $0x78] sm:$0xff]
  %v1668 = vld [vmem:[%s8] sm:$0xff]
  %v1669 = vld [vmem:[%s11] sm:$0x1]
  %v1670 = vld [vmem:[%s12] sm:$0x1]
  %v1671 = vadd.f32 %v1616, %v1651
  %v1672 = vadd.f32 %v1671, %v1648
  %v1673 = vrot.slane %v1672, 4
  %v1674 = vadd.f32 %v1672, %v1673
  %v1675 = vrot.slane %v1674, 2
  %v1676 = vadd.f32 %v1674, %v1675
  %v1677 = vrot.slane %v1676, 1
  %v1678 = vadd.f32 %v1676, %v1677
  %v1679 = vmul.f32 %v1616, %v1616
  %v1680 = vmul.f32 %v1651, %v1651
  %v1681 = vmul.f32 %v1648, %v1648
  %v1682 = vadd.f32 %v1679, %v1680
  %v1683 = vadd.f32 %v1682, %v1681
  %v1684 = vrot.slane %v1683, 4
  %v1685 = vadd.f32 %v1683, %v1684
  %v1686 = vrot.slane %v1685, 2
  %v1687 = vadd.f32 %v1685, %v1686
  %v1688 = vrot.slane %v1687, 1
  %v1689 = vadd.f32 %v1687, %v1688
  %v1690 = vsel %vm534, %v1678, %v1689
  %v1691 = vand.u32 %v1667, 4294901760
  %1692 = vmatpush.msra.mxu0 %v1691
  %v1693 = vand.u32 %v1666, 4294901760
  %1694 = vmatpush.msra.mxu0 %v1693
  %v1695 = vand.u32 %v1665, 4294901760
  %1696 = vmatpush.msra.mxu0 %v1695
  %v1697 = vand.u32 %v1664, 4294901760
  %1698 = vmatpush.msra.mxu0 %v1697
  %v1699 = vand.u32 %v1663, 4294901760
  %1700 = vmatpush.msra.mxu0 %v1699
  %v1701 = vand.u32 %v1662, 4294901760
  %1702 = vmatpush.msra.mxu0 %v1701
  %v1703 = vand.u32 %v1661, 4294901760
  %1704 = vmatpush.msra.mxu0 %v1703
  %v1705 = vand.u32 %v1660, 4294901760
  %1706 = vmatpush.msra.mxu0 %v1705
  %v1707 = vand.u32 %v1659, 4294901760
  %1708 = vmatpush.msra.mxu0 %v1707
  %v1709 = vand.u32 %v1658, 4294901760
  %1710 = vmatpush.msra.mxu0 %v1709
  %v1711 = vand.u32 %v1657, 4294901760
  %1712 = vmatpush.msra.mxu0 %v1711
  %v1713 = vand.u32 %v1656, 4294901760
  %1714 = vmatpush.msra.mxu0 %v1713
  %v1715 = vand.u32 %v1655, 4294901760
  %1716 = vmatpush.msra.mxu0 %v1715
  %v1717 = vand.u32 %v1654, 4294901760
  %1718 = vmatpush.msra.mxu0 %v1717
  %v1719 = vand.u32 %v1653, 4294901760
  %1720 = vmatpush.msra.mxu0 %v1719
  %v1721 = vand.u32 %v1652, 4294901760
  %1722 = vmatpush.msra.mxu0 %v1721
  %v1723 = vand.u32 %v1690, 4294901760
  %v1724 = vsub.f32 %v1690, %v1723
  %v1725 = vand.u32 %v1724, 4294901760
  %v1726 = vsub.f32 %v1724, %v1725
  %v1727 = vand.u32 %v1726, 4294901760
  %1728 = vmatmul.f32.gmra.mxu0 %v1727
  %v1729 = vpop.f32.mrf.mxu0
  %v1730 = vadd.f32 0.0, %v1729
  %1731 = vdwg.mxu0
  %v1732 = vand.u32 %v1667, 4294901760
  %v1733 = vsub.f32 %v1667, %v1732
  %v1734 = vand.u32 %v1733, 4294901760
  %v1735 = vsub.f32 %v1733, %v1734
  %v1736 = vand.u32 %v1735, 4294901760
  %1737 = vmatpush.msra.mxu0 %v1736
  %v1738 = vand.u32 %v1666, 4294901760
  %v1739 = vsub.f32 %v1666, %v1738
  %v1740 = vand.u32 %v1739, 4294901760
  %v1741 = vsub.f32 %v1739, %v1740
  %v1742 = vand.u32 %v1741, 4294901760
  %1743 = vmatpush.msra.mxu0 %v1742
  %v1744 = vand.u32 %v1665, 4294901760
  %v1745 = vsub.f32 %v1665, %v1744
  %v1746 = vand.u32 %v1745, 4294901760
  %v1747 = vsub.f32 %v1745, %v1746
  %v1748 = vand.u32 %v1747, 4294901760
  %1749 = vmatpush.msra.mxu0 %v1748
  %v1750 = vand.u32 %v1664, 4294901760
  %v1751 = vsub.f32 %v1664, %v1750
  %v1752 = vand.u32 %v1751, 4294901760
  %v1753 = vsub.f32 %v1751, %v1752
  %v1754 = vand.u32 %v1753, 4294901760
  %1755 = vmatpush.msra.mxu0 %v1754
  %v1756 = vand.u32 %v1663, 4294901760
  %v1757 = vsub.f32 %v1663, %v1756
  %v1758 = vand.u32 %v1757, 4294901760
  %v1759 = vsub.f32 %v1757, %v1758
  %v1760 = vand.u32 %v1759, 4294901760
  %1761 = vmatpush.msra.mxu0 %v1760
  %v1762 = vand.u32 %v1662, 4294901760
  %v1763 = vsub.f32 %v1662, %v1762
  %v1764 = vand.u32 %v1763, 4294901760
  %v1765 = vsub.f32 %v1763, %v1764
  %v1766 = vand.u32 %v1765, 4294901760
  %1767 = vmatpush.msra.mxu0 %v1766
  %v1768 = vand.u32 %v1661, 4294901760
  %v1769 = vsub.f32 %v1661, %v1768
  %v1770 = vand.u32 %v1769, 4294901760
  %v1771 = vsub.f32 %v1769, %v1770
  %v1772 = vand.u32 %v1771, 4294901760
  %1773 = vmatpush.msra.mxu0 %v1772
  %v1774 = vand.u32 %v1660, 4294901760
  %v1775 = vsub.f32 %v1660, %v1774
  %v1776 = vand.u32 %v1775, 4294901760
  %v1777 = vsub.f32 %v1775, %v1776
  %v1778 = vand.u32 %v1777, 4294901760
  %1779 = vmatpush.msra.mxu0 %v1778
  %v1780 = vand.u32 %v1659, 4294901760
  %v1781 = vsub.f32 %v1659, %v1780
  %v1782 = vand.u32 %v1781, 4294901760
  %v1783 = vsub.f32 %v1781, %v1782
  %v1784 = vand.u32 %v1783, 4294901760
  %1785 = vmatpush.msra.mxu0 %v1784
  %v1786 = vand.u32 %v1658, 4294901760
  %v1787 = vsub.f32 %v1658, %v1786
  %v1788 = vand.u32 %v1787, 4294901760
  %v1789 = vsub.f32 %v1787, %v1788
  %v1790 = vand.u32 %v1789, 4294901760
  %1791 = vmatpush.msra.mxu0 %v1790
  %v1792 = vand.u32 %v1657, 4294901760
  %v1793 = vsub.f32 %v1657, %v1792
  %v1794 = vand.u32 %v1793, 4294901760
  %v1795 = vsub.f32 %v1793, %v1794
  %v1796 = vand.u32 %v1795, 4294901760
  %1797 = vmatpush.msra.mxu0 %v1796
  %v1798 = vand.u32 %v1656, 4294901760
  %v1799 = vsub.f32 %v1656, %v1798
  %v1800 = vand.u32 %v1799, 4294901760
  %v1801 = vsub.f32 %v1799, %v1800
  %v1802 = vand.u32 %v1801, 4294901760
  %1803 = vmatpush.msra.mxu0 %v1802
  %v1804 = vand.u32 %v1655, 4294901760
  %v1805 = vsub.f32 %v1655, %v1804
  %v1806 = vand.u32 %v1805, 4294901760
  %v1807 = vsub.f32 %v1805, %v1806
  %v1808 = vand.u32 %v1807, 4294901760
  %1809 = vmatpush.msra.mxu0 %v1808
  %v1810 = vand.u32 %v1654, 4294901760
  %v1811 = vsub.f32 %v1654, %v1810
  %v1812 = vand.u32 %v1811, 4294901760
  %v1813 = vsub.f32 %v1811, %v1812
  %v1814 = vand.u32 %v1813, 4294901760
  %1815 = vmatpush.msra.mxu0 %v1814
  %v1816 = vand.u32 %v1653, 4294901760
  %v1817 = vsub.f32 %v1653, %v1816
  %v1818 = vand.u32 %v1817, 4294901760
  %v1819 = vsub.f32 %v1817, %v1818
  %v1820 = vand.u32 %v1819, 4294901760
  %1821 = vmatpush.msra.mxu0 %v1820
  %v1822 = vand.u32 %v1652, 4294901760
  %v1823 = vsub.f32 %v1652, %v1822
  %v1824 = vand.u32 %v1823, 4294901760
  %v1825 = vsub.f32 %v1823, %v1824
  %v1826 = vand.u32 %v1825, 4294901760
  %1827 = vmatpush.msra.mxu0 %v1826
  %v1828 = vand.u32 %v1690, 4294901760
  %1829 = vmatmul.f32.gmra.mxu0 %v1828
  %v1830 = vpop.f32.mrf.mxu0
  %v1831 = vadd.f32 %v1730, %v1830
  %1832 = vdwg.mxu0
  %v1833 = vand.u32 %v1667, 4294901760
  %v1834 = vsub.f32 %v1667, %v1833
  %1835 = vmatpush.msra.mxu0 %v1834
  %v1836 = vand.u32 %v1666, 4294901760
  %v1837 = vsub.f32 %v1666, %v1836
  %1838 = vmatpush.msra.mxu0 %v1837
  %v1839 = vand.u32 %v1665, 4294901760
  %v1840 = vsub.f32 %v1665, %v1839
  %1841 = vmatpush.msra.mxu0 %v1840
  %v1842 = vand.u32 %v1664, 4294901760
  %v1843 = vsub.f32 %v1664, %v1842
  %1844 = vmatpush.msra.mxu0 %v1843
  %v1845 = vand.u32 %v1663, 4294901760
  %v1846 = vsub.f32 %v1663, %v1845
  %1847 = vmatpush.msra.mxu0 %v1846
  %v1848 = vand.u32 %v1662, 4294901760
  %v1849 = vsub.f32 %v1662, %v1848
  %1850 = vmatpush.msra.mxu0 %v1849
  %v1851 = vand.u32 %v1661, 4294901760
  %v1852 = vsub.f32 %v1661, %v1851
  %1853 = vmatpush.msra.mxu0 %v1852
  %v1854 = vand.u32 %v1660, 4294901760
  %v1855 = vsub.f32 %v1660, %v1854
  %1856 = vmatpush.msra.mxu0 %v1855
  %v1857 = vand.u32 %v1659, 4294901760
  %v1858 = vsub.f32 %v1659, %v1857
  %1859 = vmatpush.msra.mxu0 %v1858
  %v1860 = vand.u32 %v1658, 4294901760
  %v1861 = vsub.f32 %v1658, %v1860
  %1862 = vmatpush.msra.mxu0 %v1861
  %v1863 = vand.u32 %v1657, 4294901760
  %v1864 = vsub.f32 %v1657, %v1863
  %1865 = vmatpush.msra.mxu0 %v1864
  %v1866 = vand.u32 %v1656, 4294901760
  %v1867 = vsub.f32 %v1656, %v1866
  %1868 = vmatpush.msra.mxu0 %v1867
  %v1869 = vand.u32 %v1655, 4294901760
  %v1870 = vsub.f32 %v1655, %v1869
  %1871 = vmatpush.msra.mxu0 %v1870
  %v1872 = vand.u32 %v1654, 4294901760
  %v1873 = vsub.f32 %v1654, %v1872
  %1874 = vmatpush.msra.mxu0 %v1873
  %v1875 = vand.u32 %v1653, 4294901760
  %v1876 = vsub.f32 %v1653, %v1875
  %1877 = vmatpush.msra.mxu0 %v1876
  %v1878 = vand.u32 %v1652, 4294901760
  %v1879 = vsub.f32 %v1652, %v1878
  %1880 = vmatpush.msra.mxu0 %v1879
  %v1881 = vand.u32 %v1690, 4294901760
  %v1882 = vsub.f32 %v1690, %v1881
  %1883 = vmatmul.f32.gmra.mxu0 %v1882
  %v1884 = vpop.f32.mrf.mxu0
  %v1885 = vadd.f32 %v1831, %v1884
  %1886 = vdwg.mxu0
  %v1887 = vand.u32 %v1667, 4294901760
  %1888 = vmatpush.msra.mxu0 %v1887
  %v1889 = vand.u32 %v1666, 4294901760
  %1890 = vmatpush.msra.mxu0 %v1889
  %v1891 = vand.u32 %v1665, 4294901760
  %1892 = vmatpush.msra.mxu0 %v1891
  %v1893 = vand.u32 %v1664, 4294901760
  %1894 = vmatpush.msra.mxu0 %v1893
  %v1895 = vand.u32 %v1663, 4294901760
  %1896 = vmatpush.msra.mxu0 %v1895
  %v1897 = vand.u32 %v1662, 4294901760
  %1898 = vmatpush.msra.mxu0 %v1897
  %v1899 = vand.u32 %v1661, 4294901760
  %1900 = vmatpush.msra.mxu0 %v1899
  %v1901 = vand.u32 %v1660, 4294901760
  %1902 = vmatpush.msra.mxu0 %v1901
  %v1903 = vand.u32 %v1659, 4294901760
  %1904 = vmatpush.msra.mxu0 %v1903
  %v1905 = vand.u32 %v1658, 4294901760
  %1906 = vmatpush.msra.mxu0 %v1905
  %v1907 = vand.u32 %v1657, 4294901760
  %1908 = vmatpush.msra.mxu0 %v1907
  %v1909 = vand.u32 %v1656, 4294901760
  %1910 = vmatpush.msra.mxu0 %v1909
  %v1911 = vand.u32 %v1655, 4294901760
  %1912 = vmatpush.msra.mxu0 %v1911
  %v1913 = vand.u32 %v1654, 4294901760
  %1914 = vmatpush.msra.mxu0 %v1913
  %v1915 = vand.u32 %v1653, 4294901760
  %1916 = vmatpush.msra.mxu0 %v1915
  %v1917 = vand.u32 %v1652, 4294901760
  %1918 = vmatpush.msra.mxu0 %v1917
  %v1919 = vand.u32 %v1690, 4294901760
  %v1920 = vsub.f32 %v1690, %v1919
  %v1921 = vand.u32 %v1920, 4294901760
  %1922 = vmatmul.f32.gmra.mxu0 %v1921
  %v1923 = vpop.f32.mrf.mxu0
  %v1924 = vadd.f32 %v1885, %v1923
  %1925 = vdwg.mxu0
  %v1926 = vand.u32 %v1667, 4294901760
  %v1927 = vsub.f32 %v1667, %v1926
  %v1928 = vand.u32 %v1927, 4294901760
  %1929 = vmatpush.msra.mxu0 %v1928
  %v1930 = vand.u32 %v1666, 4294901760
  %v1931 = vsub.f32 %v1666, %v1930
  %v1932 = vand.u32 %v1931, 4294901760
  %1933 = vmatpush.msra.mxu0 %v1932
  %v1934 = vand.u32 %v1665, 4294901760
  %v1935 = vsub.f32 %v1665, %v1934
  %v1936 = vand.u32 %v1935, 4294901760
  %1937 = vmatpush.msra.mxu0 %v1936
  %v1938 = vand.u32 %v1664, 4294901760
  %v1939 = vsub.f32 %v1664, %v1938
  %v1940 = vand.u32 %v1939, 4294901760
  %1941 = vmatpush.msra.mxu0 %v1940
  %v1942 = vand.u32 %v1663, 4294901760
  %v1943 = vsub.f32 %v1663, %v1942
  %v1944 = vand.u32 %v1943, 4294901760
  %1945 = vmatpush.msra.mxu0 %v1944
  %v1946 = vand.u32 %v1662, 4294901760
  %v1947 = vsub.f32 %v1662, %v1946
  %v1948 = vand.u32 %v1947, 4294901760
  %1949 = vmatpush.msra.mxu0 %v1948
  %v1950 = vand.u32 %v1661, 4294901760
  %v1951 = vsub.f32 %v1661, %v1950
  %v1952 = vand.u32 %v1951, 4294901760
  %1953 = vmatpush.msra.mxu0 %v1952
  %v1954 = vand.u32 %v1660, 4294901760
  %v1955 = vsub.f32 %v1660, %v1954
  %v1956 = vand.u32 %v1955, 4294901760
  %1957 = vmatpush.msra.mxu0 %v1956
  %v1958 = vand.u32 %v1659, 4294901760
  %v1959 = vsub.f32 %v1659, %v1958
  %v1960 = vand.u32 %v1959, 4294901760
  %1961 = vmatpush.msra.mxu0 %v1960
  %v1962 = vand.u32 %v1658, 4294901760
  %v1963 = vsub.f32 %v1658, %v1962
  %v1964 = vand.u32 %v1963, 4294901760
  %1965 = vmatpush.msra.mxu0 %v1964
  %v1966 = vand.u32 %v1657, 4294901760
  %v1967 = vsub.f32 %v1657, %v1966
  %v1968 = vand.u32 %v1967, 4294901760
  %1969 = vmatpush.msra.mxu0 %v1968
  %v1970 = vand.u32 %v1656, 4294901760
  %v1971 = vsub.f32 %v1656, %v1970
  %v1972 = vand.u32 %v1971, 4294901760
  %1973 = vmatpush.msra.mxu0 %v1972
  %v1974 = vand.u32 %v1655, 4294901760
  %v1975 = vsub.f32 %v1655, %v1974
  %v1976 = vand.u32 %v1975, 4294901760
  %1977 = vmatpush.msra.mxu0 %v1976
  %v1978 = vand.u32 %v1654, 4294901760
  %v1979 = vsub.f32 %v1654, %v1978
  %v1980 = vand.u32 %v1979, 4294901760
  %1981 = vmatpush.msra.mxu0 %v1980
  %v1982 = vand.u32 %v1653, 4294901760
  %v1983 = vsub.f32 %v1653, %v1982
  %v1984 = vand.u32 %v1983, 4294901760
  %1985 = vmatpush.msra.mxu0 %v1984
  %v1986 = vand.u32 %v1652, 4294901760
  %v1987 = vsub.f32 %v1652, %v1986
  %v1988 = vand.u32 %v1987, 4294901760
  %1989 = vmatpush.msra.mxu0 %v1988
  %v1990 = vand.u32 %v1690, 4294901760
  %1991 = vmatmul.f32.gmra.mxu0 %v1990
  %v1992 = vpop.f32.mrf.mxu0
  %v1993 = vadd.f32 %v1924, %v1992
  %1994 = vdwg.mxu0
  %v1995 = vand.u32 %v1667, 4294901760
  %1996 = vmatpush.msra.mxu0 %v1995
  %v1997 = vand.u32 %v1666, 4294901760
  %1998 = vmatpush.msra.mxu0 %v1997
  %v1999 = vand.u32 %v1665, 4294901760
  %2000 = vmatpush.msra.mxu0 %v1999
  %v2001 = vand.u32 %v1664, 4294901760
  %2002 = vmatpush.msra.mxu0 %v2001
  %v2003 = vand.u32 %v1663, 4294901760
  %2004 = vmatpush.msra.mxu0 %v2003
  %v2005 = vand.u32 %v1662, 4294901760
  %2006 = vmatpush.msra.mxu0 %v2005
  %v2007 = vand.u32 %v1661, 4294901760
  %2008 = vmatpush.msra.mxu0 %v2007
  %v2009 = vand.u32 %v1660, 4294901760
  %2010 = vmatpush.msra.mxu0 %v2009
  %v2011 = vand.u32 %v1659, 4294901760
  %2012 = vmatpush.msra.mxu0 %v2011
  %v2013 = vand.u32 %v1658, 4294901760
  %2014 = vmatpush.msra.mxu0 %v2013
  %v2015 = vand.u32 %v1657, 4294901760
  %2016 = vmatpush.msra.mxu0 %v2015
  %v2017 = vand.u32 %v1656, 4294901760
  %2018 = vmatpush.msra.mxu0 %v2017
  %v2019 = vand.u32 %v1655, 4294901760
  %2020 = vmatpush.msra.mxu0 %v2019
  %v2021 = vand.u32 %v1654, 4294901760
  %2022 = vmatpush.msra.mxu0 %v2021
  %v2023 = vand.u32 %v1653, 4294901760
  %2024 = vmatpush.msra.mxu0 %v2023
  %v2025 = vand.u32 %v1652, 4294901760
  %2026 = vmatpush.msra.mxu0 %v2025
  %v2027 = vand.u32 %v1690, 4294901760
  %2028 = vmatmul.f32.gmra.mxu0 %v2027
  %v2029 = vpop.f32.mrf.mxu0
  %v2030 = vadd.f32 %v1993, %v2029
  %2031 = vdwg.mxu0
  %v2032 = vmul.f32 %v2030, 0.0034722222
  %v2033 = vmul.f32 %v2032, %v2032
  %v2035 = vrot.slane %v2033, 7
  %v2037 = vsub.f32 %v2032, %v2035
  %v2038 = vadd.f32 %v2037, 1e-05
  %v2039 = vrsqrt.pop %v2038
  %v2040 = vmul.f32 %v2039, %v2038
  %v2041 = vmul.f32 %v2040, %v2039
  %v2042 = vmul.f32 0.5, %v2041
  %v2043 = vsub.f32 1.5, %v2042
  %v2044 = vmul.f32 %v2039, %v2043
  %vm2045 = vweird.f32 %v2038
  %vm2046 = vweird.f32 %v2039
  %vm2047 = vmor %vm2045, %vm2046
  %v2048 = vsel %vm2047, %v2039, %v2044
  %v2050 = vperm.slane %v1669, 0
  %v2052 = vmul.f32 %v2048, %v2050
  %v2054 = vrot.slane %v2052, 1
  %v2056 = vmul.f32 %v2032, %v2054
  %v2057 = vsub.f32 %v1670, %v2056
  %v2059 = vperm.slane %v2057, 0
  %v2061 = vsel %vm534, %v2054, %v2059
  %v2063 = vsel %vm907, %v2061, 0
  %2065 = vmatpush.msra.mxu0 0.0
  %2066 = vmatpush.msra.mxu0 0.0
  %2067 = vmatpush.msra.mxu0 0.0
  %2068 = vmatpush.msra.mxu0 0.0
  %2069 = vmatpush.msra.mxu0 0.0
  %2070 = vmatpush.msra.mxu0 0.0
  %2071 = vmatpush.msra.mxu0 0.0
  %2072 = vmatpush.msra.mxu0 0.0
  %2073 = vmatpush.msra.mxu0 0.0
  %2074 = vmatpush.msra.mxu0 0.0
  %2075 = vmatpush.msra.mxu0 0.0
  %2076 = vmatpush.msra.mxu0 0.0
  %2077 = vmatpush.msra.mxu0 0.0
  %2078 = vmatpush.msra.mxu0 0.0
  %2079 = vmatpush.msra.mxu0 0.0
  %v2080 = vand.u32 %v1668, 4294901760
  %2081 = vmatpush.msra.mxu0 %v2080
  %v2082 = vand.u32 %v2063, 4294901760
  %v2083 = vsub.f32 %v2063, %v2082
  %v2084 = vand.u32 %v2083, 4294901760
  %v2085 = vsub.f32 %v2083, %v2084
  %v2086 = vand.u32 %v2085, 4294901760
  %2087 = vmatmul.f32.gmra.mxu0 %v2086
  %v2088 = vpop.f32.mrf.mxu0
  %v2089 = vadd.f32 0.0, %v2088
  %2090 = vdwg.mxu0
  %2091 = vmatpush.msra.mxu0 0.0
  %2092 = vmatpush.msra.mxu0 0.0
  %2093 = vmatpush.msra.mxu0 0.0
  %2094 = vmatpush.msra.mxu0 0.0
  %2095 = vmatpush.msra.mxu0 0.0
  %2096 = vmatpush.msra.mxu0 0.0
  %2097 = vmatpush.msra.mxu0 0.0
  %2098 = vmatpush.msra.mxu0 0.0
  %2099 = vmatpush.msra.mxu0 0.0
  %2100 = vmatpush.msra.mxu0 0.0
  %2101 = vmatpush.msra.mxu0 0.0
  %2102 = vmatpush.msra.mxu0 0.0
  %2103 = vmatpush.msra.mxu0 0.0
  %2104 = vmatpush.msra.mxu0 0.0
  %2105 = vmatpush.msra.mxu0 0.0
  %v2106 = vand.u32 %v1668, 4294901760
  %v2107 = vsub.f32 %v1668, %v2106
  %v2108 = vand.u32 %v2107, 4294901760
  %v2109 = vsub.f32 %v2107, %v2108
  %v2110 = vand.u32 %v2109, 4294901760
  %2111 = vmatpush.msra.mxu0 %v2110
  %v2112 = vand.u32 %v2063, 4294901760
  %2113 = vmatmul.f32.gmra.mxu0 %v2112
  %v2114 = vpop.f32.mrf.mxu0
  %v2115 = vadd.f32 %v2089, %v2114
  %2116 = vdwg.mxu0
  %2117 = vmatpush.msra.mxu0 0.0
  %2118 = vmatpush.msra.mxu0 0.0
  %2119 = vmatpush.msra.mxu0 0.0
  %2120 = vmatpush.msra.mxu0 0.0
  %2121 = vmatpush.msra.mxu0 0.0
  %2122 = vmatpush.msra.mxu0 0.0
  %2123 = vmatpush.msra.mxu0 0.0
  %2124 = vmatpush.msra.mxu0 0.0
  %2125 = vmatpush.msra.mxu0 0.0
  %2126 = vmatpush.msra.mxu0 0.0
  %2127 = vmatpush.msra.mxu0 0.0
  %2128 = vmatpush.msra.mxu0 0.0
  %2129 = vmatpush.msra.mxu0 0.0
  %2130 = vmatpush.msra.mxu0 0.0
  %2131 = vmatpush.msra.mxu0 0.0
  %v2132 = vand.u32 %v1668, 4294901760
  %v2133 = vsub.f32 %v1668, %v2132
  %2134 = vmatpush.msra.mxu0 %v2133
  %v2135 = vand.u32 %v2063, 4294901760
  %v2136 = vsub.f32 %v2063, %v2135
  %2137 = vmatmul.f32.gmra.mxu0 %v2136
  %v2138 = vpop.f32.mrf.mxu0
  %v2139 = vadd.f32 %v2115, %v2138
  %2140 = vdwg.mxu0
  %2141 = vmatpush.msra.mxu0 0.0
  %2142 = vmatpush.msra.mxu0 0.0
  %2143 = vmatpush.msra.mxu0 0.0
  %2144 = vmatpush.msra.mxu0 0.0
  %2145 = vmatpush.msra.mxu0 0.0
  %2146 = vmatpush.msra.mxu0 0.0
  %2147 = vmatpush.msra.mxu0 0.0
  %2148 = vmatpush.msra.mxu0 0.0
  %2149 = vmatpush.msra.mxu0 0.0
  %2150 = vmatpush.msra.mxu0 0.0
  %2151 = vmatpush.msra.mxu0 0.0
  %2152 = vmatpush.msra.mxu0 0.0
  %2153 = vmatpush.msra.mxu0 0.0
  %2154 = vmatpush.msra.mxu0 0.0
  %2155 = vmatpush.msra.mxu0 0.0
  %v2156 = vand.u32 %v1668, 4294901760
  %2157 = vmatpush.msra.mxu0 %v2156
  %v2158 = vand.u32 %v2063, 4294901760
  %v2159 = vsub.f32 %v2063, %v2158
  %v2160 = vand.u32 %v2159, 4294901760
  %2161 = vmatmul.f32.gmra.mxu0 %v2160
  %v2162 = vpop.f32.mrf.mxu0
  %v2163 = vadd.f32 %v2139, %v2162
  %2164 = vdwg.mxu0
  %2165 = vmatpush.msra.mxu0 0.0
  %2166 = vmatpush.msra.mxu0 0.0
  %2167 = vmatpush.msra.mxu0 0.0
  %2168 = vmatpush.msra.mxu0 0.0
  %2169 = vmatpush.msra.mxu0 0.0
  %2170 = vmatpush.msra.mxu0 0.0
  %2171 = vmatpush.msra.mxu0 0.0
  %2172 = vmatpush.msra.mxu0 0.0
  %2173 = vmatpush.msra.mxu0 0.0
  %2174 = vmatpush.msra.mxu0 0.0
  %2175 = vmatpush.msra.mxu0 0.0
  %2176 = vmatpush.msra.mxu0 0.0
  %2177 = vmatpush.msra.mxu0 0.0
  %2178 = vmatpush.msra.mxu0 0.0
  %2179 = vmatpush.msra.mxu0 0.0
  %v2180 = vand.u32 %v1668, 4294901760
  %v2181 = vsub.f32 %v1668, %v2180
  %v2182 = vand.u32 %v2181, 4294901760
  %2183 = vmatpush.msra.mxu0 %v2182
  %v2184 = vand.u32 %v2063, 4294901760
  %2185 = vmatmul.f32.gmra.mxu0 %v2184
  %v2186 = vpop.f32.mrf.mxu0
  %v2187 = vadd.f32 %v2163, %v2186
  %2188 = vdwg.mxu0
  %2189 = vmatpush.msra.mxu0 0.0
  %2190 = vmatpush.msra.mxu0 0.0
  %2191 = vmatpush.msra.mxu0 0.0
  %2192 = vmatpush.msra.mxu0 0.0
  %2193 = vmatpush.msra.mxu0 0.0
  %2194 = vmatpush.msra.mxu0 0.0
  %2195 = vmatpush.msra.mxu0 0.0
  %2196 = vmatpush.msra.mxu0 0.0
  %2197 = vmatpush.msra.mxu0 0.0
  %2198 = vmatpush.msra.mxu0 0.0
  %2199 = vmatpush.msra.mxu0 0.0
  %2200 = vmatpush.msra.mxu0 0.0
  %2201 = vmatpush.msra.mxu0 0.0
  %2202 = vmatpush.msra.mxu0 0.0
  %2203 = vmatpush.msra.mxu0 0.0
  %v2204 = vand.u32 %v1668, 4294901760
  %2205 = vmatpush.msra.mxu0 %v2204
  %v2206 = vand.u32 %v2063, 4294901760
  %2207 = vmatmul.f32.gmra.mxu0 %v2206
  %v2208 = vpop.f32.mrf.mxu0
  %v2209 = vadd.f32 %v2187, %v2208
  %2210 = vdwg.mxu0
  %v2211 = vperm.slane %v2209, 0
  %v2212 = vmul.f32 %v1616, %v2211
  %v2213 = vmul.f32 %v1651, %v2211
  %v2214 = vmul.f32 %v1648, %v2211
  %v2215 = vperm.slane %v2209, 1
  %v2216 = vadd.f32 %v2212, %v2215
  %v2217 = vadd.f32 %v2213, %v2215
  %v2218 = vadd.f32 %v2214, %v2215
  %v2219 = vmax.f32 %v2216, 0.0
  %v2220 = vmax.f32 %v2217, 0.0
  %v2221 = vmax.f32 %v2218, 0.0
  %2222 = vst [vmem:[%s17] sm:$0xff] %v2219
  %2223 = vst [vmem:[%s17 + $0x8] sm:$0xff] %v2220
  %2224 = vst [vmem:[%s17 + $0x10] sm:$0xff] %v2221
  %v2225 = vld [vmem:[%s13] sm:$0xff]
  %v2226 = vld [vmem:[%s13 + $0x8] sm:$0xf]
  %vm2227 = vcmask 195584
  %v2229 = vsel %vm2227, %v2225, 0
  %v2232 = vsel %vm2227, %v2226, 0
  %2234 = vmatpush.msra.mxu0 0.0
  %2235 = vmatpush.msra.mxu0 0.0
  %2236 = vmatpush.msra.mxu0 0.0
  %2237 = vmatpush.msra.mxu0 0.0
  %2238 = vmatpush.msra.mxu0 0.0
  %2239 = vmatpush.msra.mxu0 0.0
  %2240 = vmatpush.msra.mxu0 0.0
  %2241 = vmatpush.msra.mxu0 0.0
  %2242 = vmatpush.msra.mxu0 0.0
  %2243 = vmatpush.msra.mxu0 0.0
  %2244 = vmatpush.msra.mxu0 0.0
  %2245 = vmatpush.msra.mxu0 0.0
  %2246 = vmatpush.msra.mxu0 0.0
  %v2247 = vand.u32 %v2221, 4294901760
  %2248 = vmatpush.msra.mxu0 %v2247
  %v2249 = vand.u32 %v2220, 4294901760
  %2250 = vmatpush.msra.mxu0 %v2249
  %v2251 = vand.u32 %v2219, 4294901760
  %2252 = vmatpush.msra.mxu0 %v2251
  %v2253 = vand.u32 %v2229, 4294901760
  %v2254 = vsub.f32 %v2229, %v2253
  %v2255 = vand.u32 %v2254, 4294901760
  %v2256 = vsub.f32 %v2254, %v2255
  %v2257 = vand.u32 %v2256, 4294901760
  %2258 = vmatmul.f32.gmra.mxu0 %v2257
  %v2259 = vpop.f32.mrf.mxu0
  %v2260 = vadd.f32 0.0, %v2259
  %v2261 = vand.u32 %v2232, 4294901760
  %v2262 = vsub.f32 %v2232, %v2261
  %v2263 = vand.u32 %v2262, 4294901760
  %v2264 = vsub.f32 %v2262, %v2263
  %v2265 = vand.u32 %v2264, 4294901760
  %2266 = vmatmul.f32.gmra.mxu0 %v2265
  %v2267 = vpop.f32.mrf.mxu0
  %v2268 = vadd.f32 0.0, %v2267
  %2269 = vdwg.mxu0
  %2270 = vmatpush.msra.mxu0 0.0
  %2271 = vmatpush.msra.mxu0 0.0
  %2272 = vmatpush.msra.mxu0 0.0
  %2273 = vmatpush.msra.mxu0 0.0
  %2274 = vmatpush.msra.mxu0 0.0
  %2275 = vmatpush.msra.mxu0 0.0
  %2276 = vmatpush.msra.mxu0 0.0
  %2277 = vmatpush.msra.mxu0 0.0
  %2278 = vmatpush.msra.mxu0 0.0
  %2279 = vmatpush.msra.mxu0 0.0
  %2280 = vmatpush.msra.mxu0 0.0
  %2281 = vmatpush.msra.mxu0 0.0
  %2282 = vmatpush.msra.mxu0 0.0
  %v2283 = vand.u32 %v2221, 4294901760
  %v2284 = vsub.f32 %v2221, %v2283
  %v2285 = vand.u32 %v2284, 4294901760
  %v2286 = vsub.f32 %v2284, %v2285
  %v2287 = vand.u32 %v2286, 4294901760
  %2288 = vmatpush.msra.mxu0 %v2287
  %v2289 = vand.u32 %v2220, 4294901760
  %v2290 = vsub.f32 %v2220, %v2289
  %v2291 = vand.u32 %v2290, 4294901760
  %v2292 = vsub.f32 %v2290, %v2291
  %v2293 = vand.u32 %v2292, 4294901760
  %2294 = vmatpush.msra.mxu0 %v2293
  %v2295 = vand.u32 %v2219, 4294901760
  %v2296 = vsub.f32 %v2219, %v2295
  %v2297 = vand.u32 %v2296, 4294901760
  %v2298 = vsub.f32 %v2296, %v2297
  %v2299 = vand.u32 %v2298, 4294901760
  %2300 = vmatpush.msra.mxu0 %v2299
  %v2301 = vand.u32 %v2229, 4294901760
  %2302 = vmatmul.f32.gmra.mxu0 %v2301
  %v2303 = vpop.f32.mrf.mxu0
  %v2304 = vadd.f32 %v2260, %v2303
  %v2305 = vand.u32 %v2232, 4294901760
  %2306 = vmatmul.f32.gmra.mxu0 %v2305
  %v2307 = vpop.f32.mrf.mxu0
  %v2308 = vadd.f32 %v2268, %v2307
  %2309 = vdwg.mxu0
  %2310 = vmatpush.msra.mxu0 0.0
  %2311 = vmatpush.msra.mxu0 0.0
  %2312 = vmatpush.msra.mxu0 0.0
  %2313 = vmatpush.msra.mxu0 0.0
  %2314 = vmatpush.msra.mxu0 0.0
  %2315 = vmatpush.msra.mxu0 0.0
  %2316 = vmatpush.msra.mxu0 0.0
  %2317 = vmatpush.msra.mxu0 0.0
  %2318 = vmatpush.msra.mxu0 0.0
  %2319 = vmatpush.msra.mxu0 0.0
  %2320 = vmatpush.msra.mxu0 0.0
  %2321 = vmatpush.msra.mxu0 0.0
  %2322 = vmatpush.msra.mxu0 0.0
  %v2323 = vand.u32 %v2221, 4294901760
  %v2324 = vsub.f32 %v2221, %v2323
  %2325 = vmatpush.msra.mxu0 %v2324
  %v2326 = vand.u32 %v2220, 4294901760
  %v2327 = vsub.f32 %v2220, %v2326
  %2328 = vmatpush.msra.mxu0 %v2327
  %v2329 = vand.u32 %v2219, 4294901760
  %v2330 = vsub.f32 %v2219, %v2329
  %2331 = vmatpush.msra.mxu0 %v2330
  %v2332 = vand.u32 %v2229, 4294901760
  %v2333 = vsub.f32 %v2229, %v2332
  %2334 = vmatmul.f32.gmra.mxu0 %v2333
  %v2335 = vpop.f32.mrf.mxu0
  %v2336 = vadd.f32 %v2304, %v2335
  %v2337 = vand.u32 %v2232, 4294901760
  %v2338 = vsub.f32 %v2232, %v2337
  %2339 = vmatmul.f32.gmra.mxu0 %v2338
  %v2340 = vpop.f32.mrf.mxu0
  %v2341 = vadd.f32 %v2308, %v2340
  %2342 = vdwg.mxu0
  %2343 = vmatpush.msra.mxu0 0.0
  %2344 = vmatpush.msra.mxu0 0.0
  %2345 = vmatpush.msra.mxu0 0.0
  %2346 = vmatpush.msra.mxu0 0.0
  %2347 = vmatpush.msra.mxu0 0.0
  %2348 = vmatpush.msra.mxu0 0.0
  %2349 = vmatpush.msra.mxu0 0.0
  %2350 = vmatpush.msra.mxu0 0.0
  %2351 = vmatpush.msra.mxu0 0.0
  %2352 = vmatpush.msra.mxu0 0.0
  %2353 = vmatpush.msra.mxu0 0.0
  %2354 = vmatpush.msra.mxu0 0.0
  %2355 = vmatpush.msra.mxu0 0.0
  %v2356 = vand.u32 %v2221, 4294901760
  %2357 = vmatpush.msra.mxu0 %v2356
  %v2358 = vand.u32 %v2220, 4294901760
  %2359 = vmatpush.msra.mxu0 %v2358
  %v2360 = vand.u32 %v2219, 4294901760
  %2361 = vmatpush.msra.mxu0 %v2360
  %v2362 = vand.u32 %v2229, 4294901760
  %v2363 = vsub.f32 %v2229, %v2362
  %v2364 = vand.u32 %v2363, 4294901760
  %2365 = vmatmul.f32.gmra.mxu0 %v2364
  %v2366 = vpop.f32.mrf.mxu0
  %v2367 = vadd.f32 %v2336, %v2366
  %v2368 = vand.u32 %v2232, 4294901760
  %v2369 = vsub.f32 %v2232, %v2368
  %v2370 = vand.u32 %v2369, 4294901760
  %2371 = vmatmul.f32.gmra.mxu0 %v2370
  %v2372 = vpop.f32.mrf.mxu0
  %v2373 = vadd.f32 %v2341, %v2372
  %2374 = vdwg.mxu0
  %2375 = vmatpush.msra.mxu0 0.0
  %2376 = vmatpush.msra.mxu0 0.0
  %2377 = vmatpush.msra.mxu0 0.0
  %2378 = vmatpush.msra.mxu0 0.0
  %2379 = vmatpush.msra.mxu0 0.0
  %2380 = vmatpush.msra.mxu0 0.0
  %2381 = vmatpush.msra.mxu0 0.0
  %2382 = vmatpush.msra.mxu0 0.0
  %2383 = vmatpush.msra.mxu0 0.0
  %2384 = vmatpush.msra.mxu0 0.0
  %2385 = vmatpush.msra.mxu0 0.0
  %2386 = vmatpush.msra.mxu0 0.0
  %2387 = vmatpush.msra.mxu0 0.0
  %v2388 = vand.u32 %v2221, 4294901760
  %v2389 = vsub.f32 %v2221, %v2388
  %v2390 = vand.u32 %v2389, 4294901760
  %2391 = vmatpush.msra.mxu0 %v2390
  %v2392 = vand.u32 %v2220, 4294901760
  %v2393 = vsub.f32 %v2220, %v2392
  %v2394 = vand.u32 %v2393, 4294901760
  %2395 = vmatpush.msra.mxu0 %v2394
  %v2396 = vand.u32 %v2219, 4294901760
  %v2397 = vsub.f32 %v2219, %v2396
  %v2398 = vand.u32 %v2397, 4294901760
  %2399 = vmatpush.msra.mxu0 %v2398
  %v2400 = vand.u32 %v2229, 4294901760
  %2401 = vmatmul.f32.gmra.mxu0 %v2400
  %v2402 = vpop.f32.mrf.mxu0
  %v2403 = vadd.f32 %v2367, %v2402
  %v2404 = vand.u32 %v2232, 4294901760
  %2405 = vmatmul.f32.gmra.mxu0 %v2404
  %v2406 = vpop.f32.mrf.mxu0
  %v2407 = vadd.f32 %v2373, %v2406
  %2408 = vdwg.mxu0
  %2409 = vmatpush.msra.mxu0 0.0
  %2410 = vmatpush.msra.mxu0 0.0
  %2411 = vmatpush.msra.mxu0 0.0
  %2412 = vmatpush.msra.mxu0 0.0
  %2413 = vmatpush.msra.mxu0 0.0
  %2414 = vmatpush.msra.mxu0 0.0
  %2415 = vmatpush.msra.mxu0 0.0
  %2416 = vmatpush.msra.mxu0 0.0
  %2417 = vmatpush.msra.mxu0 0.0
  %2418 = vmatpush.msra.mxu0 0.0
  %2419 = vmatpush.msra.mxu0 0.0
  %2420 = vmatpush.msra.mxu0 0.0
  %2421 = vmatpush.msra.mxu0 0.0
  %v2422 = vand.u32 %v2221, 4294901760
  %2423 = vmatpush.msra.mxu0 %v2422
  %v2424 = vand.u32 %v2220, 4294901760
  %2425 = vmatpush.msra.mxu0 %v2424
  %v2426 = vand.u32 %v2219, 4294901760
  %2427 = vmatpush.msra.mxu0 %v2426
  %v2428 = vand.u32 %v2229, 4294901760
  %2429 = vmatmul.f32.gmra.mxu0 %v2428
  %v2430 = vpop.f32.mrf.mxu0
  %v2431 = vadd.f32 %v2403, %v2430
  %v2432 = vand.u32 %v2232, 4294901760
  %2433 = vmatmul.f32.gmra.mxu0 %v2432
  %v2434 = vpop.f32.mrf.mxu0
  %v2435 = vadd.f32 %v2407, %v2434
  %2436 = vdwg.mxu0
  %v2437 = vld [vmem:[%s14] sm:$0xff]
  %v2438 = vld [vmem:[%s14 + $0x8] sm:$0xf]
  %v2440 = vsel %vm2227, %v2437, 0
  %v2443 = vsel %vm2227, %v2438, 0
  %2445 = vmatpush.msra.mxu0 0.0
  %2446 = vmatpush.msra.mxu0 0.0
  %2447 = vmatpush.msra.mxu0 0.0
  %2448 = vmatpush.msra.mxu0 0.0
  %2449 = vmatpush.msra.mxu0 0.0
  %2450 = vmatpush.msra.mxu0 0.0
  %2451 = vmatpush.msra.mxu0 0.0
  %2452 = vmatpush.msra.mxu0 0.0
  %2453 = vmatpush.msra.mxu0 0.0
  %2454 = vmatpush.msra.mxu0 0.0
  %2455 = vmatpush.msra.mxu0 0.0
  %2456 = vmatpush.msra.mxu0 0.0
  %2457 = vmatpush.msra.mxu0 0.0
  %v2458 = vand.u32 %v2221, 4294901760
  %2459 = vmatpush.msra.mxu0 %v2458
  %v2460 = vand.u32 %v2220, 4294901760
  %2461 = vmatpush.msra.mxu0 %v2460
  %v2462 = vand.u32 %v2219, 4294901760
  %2463 = vmatpush.msra.mxu0 %v2462
  %v2464 = vand.u32 %v2440, 4294901760
  %v2465 = vsub.f32 %v2440, %v2464
  %v2466 = vand.u32 %v2465, 4294901760
  %v2467 = vsub.f32 %v2465, %v2466
  %v2468 = vand.u32 %v2467, 4294901760
  %2469 = vmatmul.f32.gmra.mxu0 %v2468
  %v2470 = vpop.f32.mrf.mxu0
  %v2471 = vadd.f32 0.0, %v2470
  %v2472 = vand.u32 %v2443, 4294901760
  %v2473 = vsub.f32 %v2443, %v2472
  %v2474 = vand.u32 %v2473, 4294901760
  %v2475 = vsub.f32 %v2473, %v2474
  %v2476 = vand.u32 %v2475, 4294901760
  %2477 = vmatmul.f32.gmra.mxu0 %v2476
  %v2478 = vpop.f32.mrf.mxu0
  %v2479 = vadd.f32 0.0, %v2478
  %2480 = vdwg.mxu0
  %2481 = vmatpush.msra.mxu0 0.0
  %2482 = vmatpush.msra.mxu0 0.0
  %2483 = vmatpush.msra.mxu0 0.0
  %2484 = vmatpush.msra.mxu0 0.0
  %2485 = vmatpush.msra.mxu0 0.0
  %2486 = vmatpush.msra.mxu0 0.0
  %2487 = vmatpush.msra.mxu0 0.0
  %2488 = vmatpush.msra.mxu0 0.0
  %2489 = vmatpush.msra.mxu0 0.0
  %2490 = vmatpush.msra.mxu0 0.0
  %2491 = vmatpush.msra.mxu0 0.0
  %2492 = vmatpush.msra.mxu0 0.0
  %2493 = vmatpush.msra.mxu0 0.0
  %v2494 = vand.u32 %v2221, 4294901760
  %v2495 = vsub.f32 %v2221, %v2494
  %v2496 = vand.u32 %v2495, 4294901760
  %v2497 = vsub.f32 %v2495, %v2496
  %v2498 = vand.u32 %v2497, 4294901760
  %2499 = vmatpush.msra.mxu0 %v2498
  %v2500 = vand.u32 %v2220, 4294901760
  %v2501 = vsub.f32 %v2220, %v2500
  %v2502 = vand.u32 %v2501, 4294901760
  %v2503 = vsub.f32 %v2501, %v2502
  %v2504 = vand.u32 %v2503, 4294901760
  %2505 = vmatpush.msra.mxu0 %v2504
  %v2506 = vand.u32 %v2219, 4294901760
  %v2507 = vsub.f32 %v2219, %v2506
  %v2508 = vand.u32 %v2507, 4294901760
  %v2509 = vsub.f32 %v2507, %v2508
  %v2510 = vand.u32 %v2509, 4294901760
  %2511 = vmatpush.msra.mxu0 %v2510
  %v2512 = vand.u32 %v2440, 4294901760
  %2513 = vmatmul.f32.gmra.mxu0 %v2512
  %v2514 = vpop.f32.mrf.mxu0
  %v2515 = vadd.f32 %v2471, %v2514
  %v2516 = vand.u32 %v2443, 4294901760
  %2517 = vmatmul.f32.gmra.mxu0 %v2516
  %v2518 = vpop.f32.mrf.mxu0
  %v2519 = vadd.f32 %v2479, %v2518
  %2520 = vdwg.mxu0
  %2521 = vmatpush.msra.mxu0 0.0
  %2522 = vmatpush.msra.mxu0 0.0
  %2523 = vmatpush.msra.mxu0 0.0
  %2524 = vmatpush.msra.mxu0 0.0
  %2525 = vmatpush.msra.mxu0 0.0
  %2526 = vmatpush.msra.mxu0 0.0
  %2527 = vmatpush.msra.mxu0 0.0
  %2528 = vmatpush.msra.mxu0 0.0
  %2529 = vmatpush.msra.mxu0 0.0
  %2530 = vmatpush.msra.mxu0 0.0
  %2531 = vmatpush.msra.mxu0 0.0
  %2532 = vmatpush.msra.mxu0 0.0
  %2533 = vmatpush.msra.mxu0 0.0
  %v2534 = vand.u32 %v2221, 4294901760
  %v2535 = vsub.f32 %v2221, %v2534
  %2536 = vmatpush.msra.mxu0 %v2535
  %v2537 = vand.u32 %v2220, 4294901760
  %v2538 = vsub.f32 %v2220, %v2537
  %2539 = vmatpush.msra.mxu0 %v2538
  %v2540 = vand.u32 %v2219, 4294901760
  %v2541 = vsub.f32 %v2219, %v2540
  %2542 = vmatpush.msra.mxu0 %v2541
  %v2543 = vand.u32 %v2440, 4294901760
  %v2544 = vsub.f32 %v2440, %v2543
  %2545 = vmatmul.f32.gmra.mxu0 %v2544
  %v2546 = vpop.f32.mrf.mxu0
  %v2547 = vadd.f32 %v2515, %v2546
  %v2548 = vand.u32 %v2443, 4294901760
  %v2549 = vsub.f32 %v2443, %v2548
  %2550 = vmatmul.f32.gmra.mxu0 %v2549
  %v2551 = vpop.f32.mrf.mxu0
  %v2552 = vadd.f32 %v2519, %v2551
  %2553 = vdwg.mxu0
  %2554 = vmatpush.msra.mxu0 0.0
  %2555 = vmatpush.msra.mxu0 0.0
  %2556 = vmatpush.msra.mxu0 0.0
  %2557 = vmatpush.msra.mxu0 0.0
  %2558 = vmatpush.msra.mxu0 0.0
  %2559 = vmatpush.msra.mxu0 0.0
  %2560 = vmatpush.msra.mxu0 0.0
  %2561 = vmatpush.msra.mxu0 0.0
  %2562 = vmatpush.msra.mxu0 0.0
  %2563 = vmatpush.msra.mxu0 0.0
  %2564 = vmatpush.msra.mxu0 0.0
  %2565 = vmatpush.msra.mxu0 0.0
  %2566 = vmatpush.msra.mxu0 0.0
  %v2567 = vand.u32 %v2221, 4294901760
  %2568 = vmatpush.msra.mxu0 %v2567
  %v2569 = vand.u32 %v2220, 4294901760
  %2570 = vmatpush.msra.mxu0 %v2569
  %v2571 = vand.u32 %v2219, 4294901760
  %2572 = vmatpush.msra.mxu0 %v2571
  %v2573 = vand.u32 %v2440, 4294901760
  %v2574 = vsub.f32 %v2440, %v2573
  %v2575 = vand.u32 %v2574, 4294901760
  %2576 = vmatmul.f32.gmra.mxu0 %v2575
  %v2577 = vpop.f32.mrf.mxu0
  %v2578 = vadd.f32 %v2547, %v2577
  %v2579 = vand.u32 %v2443, 4294901760
  %v2580 = vsub.f32 %v2443, %v2579
  %v2581 = vand.u32 %v2580, 4294901760
  %2582 = vmatmul.f32.gmra.mxu0 %v2581
  %v2583 = vpop.f32.mrf.mxu0
  %v2584 = vadd.f32 %v2552, %v2583
  %2585 = vdwg.mxu0
  %2586 = vmatpush.msra.mxu0 0.0
  %2587 = vmatpush.msra.mxu0 0.0
  %2588 = vmatpush.msra.mxu0 0.0
  %2589 = vmatpush.msra.mxu0 0.0
  %2590 = vmatpush.msra.mxu0 0.0
  %2591 = vmatpush.msra.mxu0 0.0
  %2592 = vmatpush.msra.mxu0 0.0
  %2593 = vmatpush.msra.mxu0 0.0
  %2594 = vmatpush.msra.mxu0 0.0
  %2595 = vmatpush.msra.mxu0 0.0
  %2596 = vmatpush.msra.mxu0 0.0
  %2597 = vmatpush.msra.mxu0 0.0
  %2598 = vmatpush.msra.mxu0 0.0
  %v2599 = vand.u32 %v2221, 4294901760
  %v2600 = vsub.f32 %v2221, %v2599
  %v2601 = vand.u32 %v2600, 4294901760
  %2602 = vmatpush.msra.mxu0 %v2601
  %v2603 = vand.u32 %v2220, 4294901760
  %v2604 = vsub.f32 %v2220, %v2603
  %v2605 = vand.u32 %v2604, 4294901760
  %2606 = vmatpush.msra.mxu0 %v2605
  %v2607 = vand.u32 %v2219, 4294901760
  %v2608 = vsub.f32 %v2219, %v2607
  %v2609 = vand.u32 %v2608, 4294901760
  %2610 = vmatpush.msra.mxu0 %v2609
  %v2611 = vand.u32 %v2440, 4294901760
  %2612 = vmatmul.f32.gmra.mxu0 %v2611
  %v2613 = vpop.f32.mrf.mxu0
  %v2614 = vadd.f32 %v2578, %v2613
  %v2615 = vand.u32 %v2443, 4294901760
  %2616 = vmatmul.f32.gmra.mxu0 %v2615
  %v2617 = vpop.f32.mrf.mxu0
  %v2618 = vadd.f32 %v2584, %v2617
  %2619 = vdwg.mxu0
  %2620 = vmatpush.msra.mxu0 0.0
  %2621 = vmatpush.msra.mxu0 0.0
  %2622 = vmatpush.msra.mxu0 0.0
  %2623 = vmatpush.msra.mxu0 0.0
  %2624 = vmatpush.msra.mxu0 0.0
  %2625 = vmatpush.msra.mxu0 0.0
  %2626 = vmatpush.msra.mxu0 0.0
  %2627 = vmatpush.msra.mxu0 0.0
  %2628 = vmatpush.msra.mxu0 0.0
  %2629 = vmatpush.msra.mxu0 0.0
  %2630 = vmatpush.msra.mxu0 0.0
  %2631 = vmatpush.msra.mxu0 0.0
  %2632 = vmatpush.msra.mxu0 0.0
  %v2633 = vand.u32 %v2221, 4294901760
  %2634 = vmatpush.msra.mxu0 %v2633
  %v2635 = vand.u32 %v2220, 4294901760
  %2636 = vmatpush.msra.mxu0 %v2635
  %v2637 = vand.u32 %v2219, 4294901760
  %2638 = vmatpush.msra.mxu0 %v2637
  %v2639 = vand.u32 %v2440, 4294901760
  %2640 = vmatmul.f32.gmra.mxu0 %v2639
  %v2641 = vpop.f32.mrf.mxu0
  %v2642 = vadd.f32 %v2614, %v2641
  %v2643 = vand.u32 %v2443, 4294901760
  %2644 = vmatmul.f32.gmra.mxu0 %v2643
  %v2645 = vpop.f32.mrf.mxu0
  %v2646 = vadd.f32 %v2618, %v2645
  %2647 = vdwg.mxu0
  %v2648 = vmax.f32 %v2431, %v2642
  %v2649 = vmax.f32 %v2435, %v2646
  %v2650 = vld [vmem:[%s15] sm:$0xff]
  %v2651 = vld [vmem:[%s15 + $0x8] sm:$0xff]
  %v2652 = vld [vmem:[%s15 + $0x10] sm:$0xff]
  %v2653 = vld [vmem:[%s15 + $0x18] sm:$0xff]
  %v2654 = vld [vmem:[%s15 + $0x20] sm:$0xff]
  %v2655 = vld [vmem:[%s15 + $0x28] sm:$0xff]
  %v2656 = vld [vmem:[%s15 + $0x30] sm:$0xff]
  %v2657 = vld [vmem:[%s15 + $0x38] sm:$0xff]
  %v2658 = vld [vmem:[%s15 + $0x40] sm:$0xff]
  %v2659 = vld [vmem:[%s15 + $0x48] sm:$0xff]
  %v2660 = vld [vmem:[%s15 + $0x50] sm:$0xff]
  %v2661 = vld [vmem:[%s15 + $0x58] sm:$0xff]
  %v2662 = vld [vmem:[%s15 + $0x60] sm:$0xff]
  %v2663 = vld [vmem:[%s15 + $0x68] sm:$0xff]
  %v2664 = vld [vmem:[%s15 + $0x70] sm:$0xff]
  %v2665 = vld [vmem:[%s15 + $0x78] sm:$0xff]
  %v2666 = vand.u32 %v2665, 4294901760
  %2667 = vmatpush.msra.mxu0 %v2666
  %v2668 = vand.u32 %v2664, 4294901760
  %2669 = vmatpush.msra.mxu0 %v2668
  %v2670 = vand.u32 %v2663, 4294901760
  %2671 = vmatpush.msra.mxu0 %v2670
  %v2672 = vand.u32 %v2662, 4294901760
  %2673 = vmatpush.msra.mxu0 %v2672
  %v2674 = vand.u32 %v2661, 4294901760
  %2675 = vmatpush.msra.mxu0 %v2674
  %v2676 = vand.u32 %v2660, 4294901760
  %2677 = vmatpush.msra.mxu0 %v2676
  %v2678 = vand.u32 %v2659, 4294901760
  %2679 = vmatpush.msra.mxu0 %v2678
  %v2680 = vand.u32 %v2658, 4294901760
  %2681 = vmatpush.msra.mxu0 %v2680
  %v2682 = vand.u32 %v2657, 4294901760
  %2683 = vmatpush.msra.mxu0 %v2682
  %v2684 = vand.u32 %v2656, 4294901760
  %2685 = vmatpush.msra.mxu0 %v2684
  %v2686 = vand.u32 %v2655, 4294901760
  %2687 = vmatpush.msra.mxu0 %v2686
  %v2688 = vand.u32 %v2654, 4294901760
  %2689 = vmatpush.msra.mxu0 %v2688
  %v2690 = vand.u32 %v2653, 4294901760
  %2691 = vmatpush.msra.mxu0 %v2690
  %v2692 = vand.u32 %v2652, 4294901760
  %2693 = vmatpush.msra.mxu0 %v2692
  %v2694 = vand.u32 %v2651, 4294901760
  %2695 = vmatpush.msra.mxu0 %v2694
  %v2696 = vand.u32 %v2650, 4294901760
  %2697 = vmatpush.msra.mxu0 %v2696
  %v2698 = vand.u32 %v2648, 4294901760
  %v2699 = vsub.f32 %v2648, %v2698
  %v2700 = vand.u32 %v2699, 4294901760
  %v2701 = vsub.f32 %v2699, %v2700
  %v2702 = vand.u32 %v2701, 4294901760
  %2703 = vmatmul.f32.gmra.mxu0 %v2702
  %v2704 = vpop.f32.mrf.mxu0
  %v2705 = vadd.f32 0.0, %v2704
  %v2706 = vand.u32 %v2649, 4294901760
  %v2707 = vsub.f32 %v2649, %v2706
  %v2708 = vand.u32 %v2707, 4294901760
  %v2709 = vsub.f32 %v2707, %v2708
  %v2710 = vand.u32 %v2709, 4294901760
  %2711 = vmatmul.f32.gmra.mxu0 %v2710
  %v2712 = vpop.f32.mrf.mxu0
  %v2713 = vadd.f32 0.0, %v2712
  %2714 = vdwg.mxu0
  %v2715 = vand.u32 %v2665, 4294901760
  %v2716 = vsub.f32 %v2665, %v2715
  %v2717 = vand.u32 %v2716, 4294901760
  %v2718 = vsub.f32 %v2716, %v2717
  %v2719 = vand.u32 %v2718, 4294901760
  %2720 = vmatpush.msra.mxu0 %v2719
  %v2721 = vand.u32 %v2664, 4294901760
  %v2722 = vsub.f32 %v2664, %v2721
  %v2723 = vand.u32 %v2722, 4294901760
  %v2724 = vsub.f32 %v2722, %v2723
  %v2725 = vand.u32 %v2724, 4294901760
  %2726 = vmatpush.msra.mxu0 %v2725
  %v2727 = vand.u32 %v2663, 4294901760
  %v2728 = vsub.f32 %v2663, %v2727
  %v2729 = vand.u32 %v2728, 4294901760
  %v2730 = vsub.f32 %v2728, %v2729
  %v2731 = vand.u32 %v2730, 4294901760
  %2732 = vmatpush.msra.mxu0 %v2731
  %v2733 = vand.u32 %v2662, 4294901760
  %v2734 = vsub.f32 %v2662, %v2733
  %v2735 = vand.u32 %v2734, 4294901760
  %v2736 = vsub.f32 %v2734, %v2735
  %v2737 = vand.u32 %v2736, 4294901760
  %2738 = vmatpush.msra.mxu0 %v2737
  %v2739 = vand.u32 %v2661, 4294901760
  %v2740 = vsub.f32 %v2661, %v2739
  %v2741 = vand.u32 %v2740, 4294901760
  %v2742 = vsub.f32 %v2740, %v2741
  %v2743 = vand.u32 %v2742, 4294901760
  %2744 = vmatpush.msra.mxu0 %v2743
  %v2745 = vand.u32 %v2660, 4294901760
  %v2746 = vsub.f32 %v2660, %v2745
  %v2747 = vand.u32 %v2746, 4294901760
  %v2748 = vsub.f32 %v2746, %v2747
  %v2749 = vand.u32 %v2748, 4294901760
  %2750 = vmatpush.msra.mxu0 %v2749
  %v2751 = vand.u32 %v2659, 4294901760
  %v2752 = vsub.f32 %v2659, %v2751
  %v2753 = vand.u32 %v2752, 4294901760
  %v2754 = vsub.f32 %v2752, %v2753
  %v2755 = vand.u32 %v2754, 4294901760
  %2756 = vmatpush.msra.mxu0 %v2755
  %v2757 = vand.u32 %v2658, 4294901760
  %v2758 = vsub.f32 %v2658, %v2757
  %v2759 = vand.u32 %v2758, 4294901760
  %v2760 = vsub.f32 %v2758, %v2759
  %v2761 = vand.u32 %v2760, 4294901760
  %2762 = vmatpush.msra.mxu0 %v2761
  %v2763 = vand.u32 %v2657, 4294901760
  %v2764 = vsub.f32 %v2657, %v2763
  %v2765 = vand.u32 %v2764, 4294901760
  %v2766 = vsub.f32 %v2764, %v2765
  %v2767 = vand.u32 %v2766, 4294901760
  %2768 = vmatpush.msra.mxu0 %v2767
  %v2769 = vand.u32 %v2656, 4294901760
  %v2770 = vsub.f32 %v2656, %v2769
  %v2771 = vand.u32 %v2770, 4294901760
  %v2772 = vsub.f32 %v2770, %v2771
  %v2773 = vand.u32 %v2772, 4294901760
  %2774 = vmatpush.msra.mxu0 %v2773
  %v2775 = vand.u32 %v2655, 4294901760
  %v2776 = vsub.f32 %v2655, %v2775
  %v2777 = vand.u32 %v2776, 4294901760
  %v2778 = vsub.f32 %v2776, %v2777
  %v2779 = vand.u32 %v2778, 4294901760
  %2780 = vmatpush.msra.mxu0 %v2779
  %v2781 = vand.u32 %v2654, 4294901760
  %v2782 = vsub.f32 %v2654, %v2781
  %v2783 = vand.u32 %v2782, 4294901760
  %v2784 = vsub.f32 %v2782, %v2783
  %v2785 = vand.u32 %v2784, 4294901760
  %2786 = vmatpush.msra.mxu0 %v2785
  %v2787 = vand.u32 %v2653, 4294901760
  %v2788 = vsub.f32 %v2653, %v2787
  %v2789 = vand.u32 %v2788, 4294901760
  %v2790 = vsub.f32 %v2788, %v2789
  %v2791 = vand.u32 %v2790, 4294901760
  %2792 = vmatpush.msra.mxu0 %v2791
  %v2793 = vand.u32 %v2652, 4294901760
  %v2794 = vsub.f32 %v2652, %v2793
  %v2795 = vand.u32 %v2794, 4294901760
  %v2796 = vsub.f32 %v2794, %v2795
  %v2797 = vand.u32 %v2796, 4294901760
  %2798 = vmatpush.msra.mxu0 %v2797
  %v2799 = vand.u32 %v2651, 4294901760
  %v2800 = vsub.f32 %v2651, %v2799
  %v2801 = vand.u32 %v2800, 4294901760
  %v2802 = vsub.f32 %v2800, %v2801
  %v2803 = vand.u32 %v2802, 4294901760
  %2804 = vmatpush.msra.mxu0 %v2803
  %v2805 = vand.u32 %v2650, 4294901760
  %v2806 = vsub.f32 %v2650, %v2805
  %v2807 = vand.u32 %v2806, 4294901760
  %v2808 = vsub.f32 %v2806, %v2807
  %v2809 = vand.u32 %v2808, 4294901760
  %2810 = vmatpush.msra.mxu0 %v2809
  %v2811 = vand.u32 %v2648, 4294901760
  %2812 = vmatmul.f32.gmra.mxu0 %v2811
  %v2813 = vpop.f32.mrf.mxu0
  %v2814 = vadd.f32 %v2705, %v2813
  %v2815 = vand.u32 %v2649, 4294901760
  %2816 = vmatmul.f32.gmra.mxu0 %v2815
  %v2817 = vpop.f32.mrf.mxu0
  %v2818 = vadd.f32 %v2713, %v2817
  %2819 = vdwg.mxu0
  %v2820 = vand.u32 %v2665, 4294901760
  %v2821 = vsub.f32 %v2665, %v2820
  %2822 = vmatpush.msra.mxu0 %v2821
  %v2823 = vand.u32 %v2664, 4294901760
  %v2824 = vsub.f32 %v2664, %v2823
  %2825 = vmatpush.msra.mxu0 %v2824
  %v2826 = vand.u32 %v2663, 4294901760
  %v2827 = vsub.f32 %v2663, %v2826
  %2828 = vmatpush.msra.mxu0 %v2827
  %v2829 = vand.u32 %v2662, 4294901760
  %v2830 = vsub.f32 %v2662, %v2829
  %2831 = vmatpush.msra.mxu0 %v2830
  %v2832 = vand.u32 %v2661, 4294901760
  %v2833 = vsub.f32 %v2661, %v2832
  %2834 = vmatpush.msra.mxu0 %v2833
  %v2835 = vand.u32 %v2660, 4294901760
  %v2836 = vsub.f32 %v2660, %v2835
  %2837 = vmatpush.msra.mxu0 %v2836
  %v2838 = vand.u32 %v2659, 4294901760
  %v2839 = vsub.f32 %v2659, %v2838
  %2840 = vmatpush.msra.mxu0 %v2839
  %v2841 = vand.u32 %v2658, 4294901760
  %v2842 = vsub.f32 %v2658, %v2841
  %2843 = vmatpush.msra.mxu0 %v2842
  %v2844 = vand.u32 %v2657, 4294901760
  %v2845 = vsub.f32 %v2657, %v2844
  %2846 = vmatpush.msra.mxu0 %v2845
  %v2847 = vand.u32 %v2656, 4294901760
  %v2848 = vsub.f32 %v2656, %v2847
  %2849 = vmatpush.msra.mxu0 %v2848
  %v2850 = vand.u32 %v2655, 4294901760
  %v2851 = vsub.f32 %v2655, %v2850
  %2852 = vmatpush.msra.mxu0 %v2851
  %v2853 = vand.u32 %v2654, 4294901760
  %v2854 = vsub.f32 %v2654, %v2853
  %2855 = vmatpush.msra.mxu0 %v2854
  %v2856 = vand.u32 %v2653, 4294901760
  %v2857 = vsub.f32 %v2653, %v2856
  %2858 = vmatpush.msra.mxu0 %v2857
  %v2859 = vand.u32 %v2652, 4294901760
  %v2860 = vsub.f32 %v2652, %v2859
  %2861 = vmatpush.msra.mxu0 %v2860
  %v2862 = vand.u32 %v2651, 4294901760
  %v2863 = vsub.f32 %v2651, %v2862
  %2864 = vmatpush.msra.mxu0 %v2863
  %v2865 = vand.u32 %v2650, 4294901760
  %v2866 = vsub.f32 %v2650, %v2865
  %2867 = vmatpush.msra.mxu0 %v2866
  %v2868 = vand.u32 %v2648, 4294901760
  %v2869 = vsub.f32 %v2648, %v2868
  %2870 = vmatmul.f32.gmra.mxu0 %v2869
  %v2871 = vpop.f32.mrf.mxu0
  %v2872 = vadd.f32 %v2814, %v2871
  %v2873 = vand.u32 %v2649, 4294901760
  %v2874 = vsub.f32 %v2649, %v2873
  %2875 = vmatmul.f32.gmra.mxu0 %v2874
  %v2876 = vpop.f32.mrf.mxu0
  %v2877 = vadd.f32 %v2818, %v2876
  %2878 = vdwg.mxu0
  %v2879 = vand.u32 %v2665, 4294901760
  %2880 = vmatpush.msra.mxu0 %v2879
  %v2881 = vand.u32 %v2664, 4294901760
  %2882 = vmatpush.msra.mxu0 %v2881
  %v2883 = vand.u32 %v2663, 4294901760
  %2884 = vmatpush.msra.mxu0 %v2883
  %v2885 = vand.u32 %v2662, 4294901760
  %2886 = vmatpush.msra.mxu0 %v2885
  %v2887 = vand.u32 %v2661, 4294901760
  %2888 = vmatpush.msra.mxu0 %v2887
  %v2889 = vand.u32 %v2660, 4294901760
  %2890 = vmatpush.msra.mxu0 %v2889
  %v2891 = vand.u32 %v2659, 4294901760
  %2892 = vmatpush.msra.mxu0 %v2891
  %v2893 = vand.u32 %v2658, 4294901760
  %2894 = vmatpush.msra.mxu0 %v2893
  %v2895 = vand.u32 %v2657, 4294901760
  %2896 = vmatpush.msra.mxu0 %v2895
  %v2897 = vand.u32 %v2656, 4294901760
  %2898 = vmatpush.msra.mxu0 %v2897
  %v2899 = vand.u32 %v2655, 4294901760
  %2900 = vmatpush.msra.mxu0 %v2899
  %v2901 = vand.u32 %v2654, 4294901760
  %2902 = vmatpush.msra.mxu0 %v2901
  %v2903 = vand.u32 %v2653, 4294901760
  %2904 = vmatpush.msra.mxu0 %v2903
  %v2905 = vand.u32 %v2652, 4294901760
  %2906 = vmatpush.msra.mxu0 %v2905
  %v2907 = vand.u32 %v2651, 4294901760
  %2908 = vmatpush.msra.mxu0 %v2907
  %v2909 = vand.u32 %v2650, 4294901760
  %2910 = vmatpush.msra.mxu0 %v2909
  %v2911 = vand.u32 %v2648, 4294901760
  %v2912 = vsub.f32 %v2648, %v2911
  %v2913 = vand.u32 %v2912, 4294901760
  %2914 = vmatmul.f32.gmra.mxu0 %v2913
  %v2915 = vpop.f32.mrf.mxu0
  %v2916 = vadd.f32 %v2872, %v2915
  %v2917 = vand.u32 %v2649, 4294901760
  %v2918 = vsub.f32 %v2649, %v2917
  %v2919 = vand.u32 %v2918, 4294901760
  %2920 = vmatmul.f32.gmra.mxu0 %v2919
  %v2921 = vpop.f32.mrf.mxu0
  %v2922 = vadd.f32 %v2877, %v2921
  %2923 = vdwg.mxu0
  %v2924 = vand.u32 %v2665, 4294901760
  %v2925 = vsub.f32 %v2665, %v2924
  %v2926 = vand.u32 %v2925, 4294901760
  %2927 = vmatpush.msra.mxu0 %v2926
  %v2928 = vand.u32 %v2664, 4294901760
  %v2929 = vsub.f32 %v2664, %v2928
  %v2930 = vand.u32 %v2929, 4294901760
  %2931 = vmatpush.msra.mxu0 %v2930
  %v2932 = vand.u32 %v2663, 4294901760
  %v2933 = vsub.f32 %v2663, %v2932
  %v2934 = vand.u32 %v2933, 4294901760
  %2935 = vmatpush.msra.mxu0 %v2934
  %v2936 = vand.u32 %v2662, 4294901760
  %v2937 = vsub.f32 %v2662, %v2936
  %v2938 = vand.u32 %v2937, 4294901760
  %2939 = vmatpush.msra.mxu0 %v2938
  %v2940 = vand.u32 %v2661, 4294901760
  %v2941 = vsub.f32 %v2661, %v2940
  %v2942 = vand.u32 %v2941, 4294901760
  %2943 = vmatpush.msra.mxu0 %v2942
  %v2944 = vand.u32 %v2660, 4294901760
  %v2945 = vsub.f32 %v2660, %v2944
  %v2946 = vand.u32 %v2945, 4294901760
  %2947 = vmatpush.msra.mxu0 %v2946
  %v2948 = vand.u32 %v2659, 4294901760
  %v2949 = vsub.f32 %v2659, %v2948
  %v2950 = vand.u32 %v2949, 4294901760
  %2951 = vmatpush.msra.mxu0 %v2950
  %v2952 = vand.u32 %v2658, 4294901760
  %v2953 = vsub.f32 %v2658, %v2952
  %v2954 = vand.u32 %v2953, 4294901760
  %2955 = vmatpush.msra.mxu0 %v2954
  %v2956 = vand.u32 %v2657, 4294901760
  %v2957 = vsub.f32 %v2657, %v2956
  %v2958 = vand.u32 %v2957, 4294901760
  %2959 = vmatpush.msra.mxu0 %v2958
  %v2960 = vand.u32 %v2656, 4294901760
  %v2961 = vsub.f32 %v2656, %v2960
  %v2962 = vand.u32 %v2961, 4294901760
  %2963 = vmatpush.msra.mxu0 %v2962
  %v2964 = vand.u32 %v2655, 4294901760
  %v2965 = vsub.f32 %v2655, %v2964
  %v2966 = vand.u32 %v2965, 4294901760
  %2967 = vmatpush.msra.mxu0 %v2966
  %v2968 = vand.u32 %v2654, 4294901760
  %v2969 = vsub.f32 %v2654, %v2968
  %v2970 = vand.u32 %v2969, 4294901760
  %2971 = vmatpush.msra.mxu0 %v2970
  %v2972 = vand.u32 %v2653, 4294901760
  %v2973 = vsub.f32 %v2653, %v2972
  %v2974 = vand.u32 %v2973, 4294901760
  %2975 = vmatpush.msra.mxu0 %v2974
  %v2976 = vand.u32 %v2652, 4294901760
  %v2977 = vsub.f32 %v2652, %v2976
  %v2978 = vand.u32 %v2977, 4294901760
  %2979 = vmatpush.msra.mxu0 %v2978
  %v2980 = vand.u32 %v2651, 4294901760
  %v2981 = vsub.f32 %v2651, %v2980
  %v2982 = vand.u32 %v2981, 4294901760
  %2983 = vmatpush.msra.mxu0 %v2982
  %v2984 = vand.u32 %v2650, 4294901760
  %v2985 = vsub.f32 %v2650, %v2984
  %v2986 = vand.u32 %v2985, 4294901760
  %2987 = vmatpush.msra.mxu0 %v2986
  %v2988 = vand.u32 %v2648, 4294901760
  %2989 = vmatmul.f32.gmra.mxu0 %v2988
  %v2990 = vpop.f32.mrf.mxu0
  %v2991 = vadd.f32 %v2916, %v2990
  %v2992 = vand.u32 %v2649, 4294901760
  %2993 = vmatmul.f32.gmra.mxu0 %v2992
  %v2994 = vpop.f32.mrf.mxu0
  %v2995 = vadd.f32 %v2922, %v2994
  %2996 = vdwg.mxu0
  %v2997 = vand.u32 %v2665, 4294901760
  %2998 = vmatpush.msra.mxu0 %v2997
  %v2999 = vand.u32 %v2664, 4294901760
  %3000 = vmatpush.msra.mxu0 %v2999
  %v3001 = vand.u32 %v2663, 4294901760
  %3002 = vmatpush.msra.mxu0 %v3001
  %v3003 = vand.u32 %v2662, 4294901760
  %3004 = vmatpush.msra.mxu0 %v3003
  %v3005 = vand.u32 %v2661, 4294901760
  %3006 = vmatpush.msra.mxu0 %v3005
  %v3007 = vand.u32 %v2660, 4294901760
  %3008 = vmatpush.msra.mxu0 %v3007
  %v3009 = vand.u32 %v2659, 4294901760
  %3010 = vmatpush.msra.mxu0 %v3009
  %v3011 = vand.u32 %v2658, 4294901760
  %3012 = vmatpush.msra.mxu0 %v3011
  %v3013 = vand.u32 %v2657, 4294901760
  %3014 = vmatpush.msra.mxu0 %v3013
  %v3015 = vand.u32 %v2656, 4294901760
  %3016 = vmatpush.msra.mxu0 %v3015
  %v3017 = vand.u32 %v2655, 4294901760
  %3018 = vmatpush.msra.mxu0 %v3017
  %v3019 = vand.u32 %v2654, 4294901760
  %3020 = vmatpush.msra.mxu0 %v3019
  %v3021 = vand.u32 %v2653, 4294901760
  %3022 = vmatpush.msra.mxu0 %v3021
  %v3023 = vand.u32 %v2652, 4294901760
  %3024 = vmatpush.msra.mxu0 %v3023
  %v3025 = vand.u32 %v2651, 4294901760
  %3026 = vmatpush.msra.mxu0 %v3025
  %v3027 = vand.u32 %v2650, 4294901760
  %3028 = vmatpush.msra.mxu0 %v3027
  %v3029 = vand.u32 %v2648, 4294901760
  %3030 = vmatmul.f32.gmra.mxu0 %v3029
  %v3031 = vpop.f32.mrf.mxu0
  %v3032 = vadd.f32 %v2991, %v3031
  %v3033 = vand.u32 %v2649, 4294901760
  %3034 = vmatmul.f32.gmra.mxu0 %v3033
  %v3035 = vpop.f32.mrf.mxu0
  %v3036 = vadd.f32 %v2995, %v3035
  %3037 = vdwg.mxu0
  %v3038 = vld [vmem:[%s16] sm:$0xff]
  %v3039 = vld [vmem:[%s16 + $0x8] sm:$0xff]
  %v3040 = vld [vmem:[%s16 + $0x10] sm:$0xff]
  %v3041 = vld [vmem:[%s16 + $0x18] sm:$0xff]
  %v3042 = vld [vmem:[%s16 + $0x20] sm:$0xff]
  %v3043 = vld [vmem:[%s16 + $0x28] sm:$0xff]
  %v3044 = vld [vmem:[%s16 + $0x30] sm:$0xff]
  %v3045 = vld [vmem:[%s16 + $0x38] sm:$0xff]
  %v3046 = vld [vmem:[%s16 + $0x40] sm:$0xff]
  %v3047 = vld [vmem:[%s16 + $0x48] sm:$0xff]
  %v3048 = vld [vmem:[%s16 + $0x50] sm:$0xff]
  %v3049 = vld [vmem:[%s16 + $0x58] sm:$0xff]
  %v3050 = vld [vmem:[%s16 + $0x60] sm:$0xff]
  %v3051 = vld [vmem:[%s16 + $0x68] sm:$0xff]
  %v3052 = vld [vmem:[%s16 + $0x70] sm:$0xff]
  %v3053 = vld [vmem:[%s16 + $0x78] sm:$0xff]
  %v3054 = vand.u32 %v3053, 4294901760
  %3055 = vmatpush.msra.mxu0 %v3054
  %v3056 = vand.u32 %v3052, 4294901760
  %3057 = vmatpush.msra.mxu0 %v3056
  %v3058 = vand.u32 %v3051, 4294901760
  %3059 = vmatpush.msra.mxu0 %v3058
  %v3060 = vand.u32 %v3050, 4294901760
  %3061 = vmatpush.msra.mxu0 %v3060
  %v3062 = vand.u32 %v3049, 4294901760
  %3063 = vmatpush.msra.mxu0 %v3062
  %v3064 = vand.u32 %v3048, 4294901760
  %3065 = vmatpush.msra.mxu0 %v3064
  %v3066 = vand.u32 %v3047, 4294901760
  %3067 = vmatpush.msra.mxu0 %v3066
  %v3068 = vand.u32 %v3046, 4294901760
  %3069 = vmatpush.msra.mxu0 %v3068
  %v3070 = vand.u32 %v3045, 4294901760
  %3071 = vmatpush.msra.mxu0 %v3070
  %v3072 = vand.u32 %v3044, 4294901760
  %3073 = vmatpush.msra.mxu0 %v3072
  %v3074 = vand.u32 %v3043, 4294901760
  %3075 = vmatpush.msra.mxu0 %v3074
  %v3076 = vand.u32 %v3042, 4294901760
  %3077 = vmatpush.msra.mxu0 %v3076
  %v3078 = vand.u32 %v3041, 4294901760
  %3079 = vmatpush.msra.mxu0 %v3078
  %v3080 = vand.u32 %v3040, 4294901760
  %3081 = vmatpush.msra.mxu0 %v3080
  %v3082 = vand.u32 %v3039, 4294901760
  %3083 = vmatpush.msra.mxu0 %v3082
  %v3084 = vand.u32 %v3038, 4294901760
  %3085 = vmatpush.msra.mxu0 %v3084
  %v3086 = vand.u32 %v2648, 4294901760
  %v3087 = vsub.f32 %v2648, %v3086
  %v3088 = vand.u32 %v3087, 4294901760
  %v3089 = vsub.f32 %v3087, %v3088
  %v3090 = vand.u32 %v3089, 4294901760
  %3091 = vmatmul.f32.gmra.mxu0 %v3090
  %v3092 = vpop.f32.mrf.mxu0
  %v3093 = vadd.f32 0.0, %v3092
  %v3094 = vand.u32 %v2649, 4294901760
  %v3095 = vsub.f32 %v2649, %v3094
  %v3096 = vand.u32 %v3095, 4294901760
  %v3097 = vsub.f32 %v3095, %v3096
  %v3098 = vand.u32 %v3097, 4294901760
  %3099 = vmatmul.f32.gmra.mxu0 %v3098
  %v3100 = vpop.f32.mrf.mxu0
  %v3101 = vadd.f32 0.0, %v3100
  %3102 = vdwg.mxu0
  %v3103 = vand.u32 %v3053, 4294901760
  %v3104 = vsub.f32 %v3053, %v3103
  %v3105 = vand.u32 %v3104, 4294901760
  %v3106 = vsub.f32 %v3104, %v3105
  %v3107 = vand.u32 %v3106, 4294901760
  %3108 = vmatpush.msra.mxu0 %v3107
  %v3109 = vand.u32 %v3052, 4294901760
  %v3110 = vsub.f32 %v3052, %v3109
  %v3111 = vand.u32 %v3110, 4294901760
  %v3112 = vsub.f32 %v3110, %v3111
  %v3113 = vand.u32 %v3112, 4294901760
  %3114 = vmatpush.msra.mxu0 %v3113
  %v3115 = vand.u32 %v3051, 4294901760
  %v3116 = vsub.f32 %v3051, %v3115
  %v3117 = vand.u32 %v3116, 4294901760
  %v3118 = vsub.f32 %v3116, %v3117
  %v3119 = vand.u32 %v3118, 4294901760
  %3120 = vmatpush.msra.mxu0 %v3119
  %v3121 = vand.u32 %v3050, 4294901760
  %v3122 = vsub.f32 %v3050, %v3121
  %v3123 = vand.u32 %v3122, 4294901760
  %v3124 = vsub.f32 %v3122, %v3123
  %v3125 = vand.u32 %v3124, 4294901760
  %3126 = vmatpush.msra.mxu0 %v3125
  %v3127 = vand.u32 %v3049, 4294901760
  %v3128 = vsub.f32 %v3049, %v3127
  %v3129 = vand.u32 %v3128, 4294901760
  %v3130 = vsub.f32 %v3128, %v3129
  %v3131 = vand.u32 %v3130, 4294901760
  %3132 = vmatpush.msra.mxu0 %v3131
  %v3133 = vand.u32 %v3048, 4294901760
  %v3134 = vsub.f32 %v3048, %v3133
  %v3135 = vand.u32 %v3134, 4294901760
  %v3136 = vsub.f32 %v3134, %v3135
  %v3137 = vand.u32 %v3136, 4294901760
  %3138 = vmatpush.msra.mxu0 %v3137
  %v3139 = vand.u32 %v3047, 4294901760
  %v3140 = vsub.f32 %v3047, %v3139
  %v3141 = vand.u32 %v3140, 4294901760
  %v3142 = vsub.f32 %v3140, %v3141
  %v3143 = vand.u32 %v3142, 4294901760
  %3144 = vmatpush.msra.mxu0 %v3143
  %v3145 = vand.u32 %v3046, 4294901760
  %v3146 = vsub.f32 %v3046, %v3145
  %v3147 = vand.u32 %v3146, 4294901760
  %v3148 = vsub.f32 %v3146, %v3147
  %v3149 = vand.u32 %v3148, 4294901760
  %3150 = vmatpush.msra.mxu0 %v3149
  %v3151 = vand.u32 %v3045, 4294901760
  %v3152 = vsub.f32 %v3045, %v3151
  %v3153 = vand.u32 %v3152, 4294901760
  %v3154 = vsub.f32 %v3152, %v3153
  %v3155 = vand.u32 %v3154, 4294901760
  %3156 = vmatpush.msra.mxu0 %v3155
  %v3157 = vand.u32 %v3044, 4294901760
  %v3158 = vsub.f32 %v3044, %v3157
  %v3159 = vand.u32 %v3158, 4294901760
  %v3160 = vsub.f32 %v3158, %v3159
  %v3161 = vand.u32 %v3160, 4294901760
  %3162 = vmatpush.msra.mxu0 %v3161
  %v3163 = vand.u32 %v3043, 4294901760
  %v3164 = vsub.f32 %v3043, %v3163
  %v3165 = vand.u32 %v3164, 4294901760
  %v3166 = vsub.f32 %v3164, %v3165
  %v3167 = vand.u32 %v3166, 4294901760
  %3168 = vmatpush.msra.mxu0 %v3167
  %v3169 = vand.u32 %v3042, 4294901760
  %v3170 = vsub.f32 %v3042, %v3169
  %v3171 = vand.u32 %v3170, 4294901760
  %v3172 = vsub.f32 %v3170, %v3171
  %v3173 = vand.u32 %v3172, 4294901760
  %3174 = vmatpush.msra.mxu0 %v3173
  %v3175 = vand.u32 %v3041, 4294901760
  %v3176 = vsub.f32 %v3041, %v3175
  %v3177 = vand.u32 %v3176, 4294901760
  %v3178 = vsub.f32 %v3176, %v3177
  %v3179 = vand.u32 %v3178, 4294901760
  %3180 = vmatpush.msra.mxu0 %v3179
  %v3181 = vand.u32 %v3040, 4294901760
  %v3182 = vsub.f32 %v3040, %v3181
  %v3183 = vand.u32 %v3182, 4294901760
  %v3184 = vsub.f32 %v3182, %v3183
  %v3185 = vand.u32 %v3184, 4294901760
  %3186 = vmatpush.msra.mxu0 %v3185
  %v3187 = vand.u32 %v3039, 4294901760
  %v3188 = vsub.f32 %v3039, %v3187
  %v3189 = vand.u32 %v3188, 4294901760
  %v3190 = vsub.f32 %v3188, %v3189
  %v3191 = vand.u32 %v3190, 4294901760
  %3192 = vmatpush.msra.mxu0 %v3191
  %v3193 = vand.u32 %v3038, 4294901760
  %v3194 = vsub.f32 %v3038, %v3193
  %v3195 = vand.u32 %v3194, 4294901760
  %v3196 = vsub.f32 %v3194, %v3195
  %v3197 = vand.u32 %v3196, 4294901760
  %3198 = vmatpush.msra.mxu0 %v3197
  %v3199 = vand.u32 %v2648, 4294901760
  %3200 = vmatmul.f32.gmra.mxu0 %v3199
  %v3201 = vpop.f32.mrf.mxu0
  %v3202 = vadd.f32 %v3093, %v3201
  %v3203 = vand.u32 %v2649, 4294901760
  %3204 = vmatmul.f32.gmra.mxu0 %v3203
  %v3205 = vpop.f32.mrf.mxu0
  %v3206 = vadd.f32 %v3101, %v3205
  %3207 = vdwg.mxu0
  %v3208 = vand.u32 %v3053, 4294901760
  %v3209 = vsub.f32 %v3053, %v3208
  %3210 = vmatpush.msra.mxu0 %v3209
  %v3211 = vand.u32 %v3052, 4294901760
  %v3212 = vsub.f32 %v3052, %v3211
  %3213 = vmatpush.msra.mxu0 %v3212
  %v3214 = vand.u32 %v3051, 4294901760
  %v3215 = vsub.f32 %v3051, %v3214
  %3216 = vmatpush.msra.mxu0 %v3215
  %v3217 = vand.u32 %v3050, 4294901760
  %v3218 = vsub.f32 %v3050, %v3217
  %3219 = vmatpush.msra.mxu0 %v3218
  %v3220 = vand.u32 %v3049, 4294901760
  %v3221 = vsub.f32 %v3049, %v3220
  %3222 = vmatpush.msra.mxu0 %v3221
  %v3223 = vand.u32 %v3048, 4294901760
  %v3224 = vsub.f32 %v3048, %v3223
  %3225 = vmatpush.msra.mxu0 %v3224
  %v3226 = vand.u32 %v3047, 4294901760
  %v3227 = vsub.f32 %v3047, %v3226
  %3228 = vmatpush.msra.mxu0 %v3227
  %v3229 = vand.u32 %v3046, 4294901760
  %v3230 = vsub.f32 %v3046, %v3229
  %3231 = vmatpush.msra.mxu0 %v3230
  %v3232 = vand.u32 %v3045, 4294901760
  %v3233 = vsub.f32 %v3045, %v3232
  %3234 = vmatpush.msra.mxu0 %v3233
  %v3235 = vand.u32 %v3044, 4294901760
  %v3236 = vsub.f32 %v3044, %v3235
  %3237 = vmatpush.msra.mxu0 %v3236
  %v3238 = vand.u32 %v3043, 4294901760
  %v3239 = vsub.f32 %v3043, %v3238
  %3240 = vmatpush.msra.mxu0 %v3239
  %v3241 = vand.u32 %v3042, 4294901760
  %v3242 = vsub.f32 %v3042, %v3241
  %3243 = vmatpush.msra.mxu0 %v3242
  %v3244 = vand.u32 %v3041, 4294901760
  %v3245 = vsub.f32 %v3041, %v3244
  %3246 = vmatpush.msra.mxu0 %v3245
  %v3247 = vand.u32 %v3040, 4294901760
  %v3248 = vsub.f32 %v3040, %v3247
  %3249 = vmatpush.msra.mxu0 %v3248
  %v3250 = vand.u32 %v3039, 4294901760
  %v3251 = vsub.f32 %v3039, %v3250
  %3252 = vmatpush.msra.mxu0 %v3251
  %v3253 = vand.u32 %v3038, 4294901760
  %v3254 = vsub.f32 %v3038, %v3253
  %3255 = vmatpush.msra.mxu0 %v3254
  %v3256 = vand.u32 %v2648, 4294901760
  %v3257 = vsub.f32 %v2648, %v3256
  %3258 = vmatmul.f32.gmra.mxu0 %v3257
  %v3259 = vpop.f32.mrf.mxu0
  %v3260 = vadd.f32 %v3202, %v3259
  %v3261 = vand.u32 %v2649, 4294901760
  %v3262 = vsub.f32 %v2649, %v3261
  %3263 = vmatmul.f32.gmra.mxu0 %v3262
  %v3264 = vpop.f32.mrf.mxu0
  %v3265 = vadd.f32 %v3206, %v3264
  %3266 = vdwg.mxu0
  %v3267 = vand.u32 %v3053, 4294901760
  %3268 = vmatpush.msra.mxu0 %v3267
  %v3269 = vand.u32 %v3052, 4294901760
  %3270 = vmatpush.msra.mxu0 %v3269
  %v3271 = vand.u32 %v3051, 4294901760
  %3272 = vmatpush.msra.mxu0 %v3271
  %v3273 = vand.u32 %v3050, 4294901760
  %3274 = vmatpush.msra.mxu0 %v3273
  %v3275 = vand.u32 %v3049, 4294901760
  %3276 = vmatpush.msra.mxu0 %v3275
  %v3277 = vand.u32 %v3048, 4294901760
  %3278 = vmatpush.msra.mxu0 %v3277
  %v3279 = vand.u32 %v3047, 4294901760
  %3280 = vmatpush.msra.mxu0 %v3279
  %v3281 = vand.u32 %v3046, 4294901760
  %3282 = vmatpush.msra.mxu0 %v3281
  %v3283 = vand.u32 %v3045, 4294901760
  %3284 = vmatpush.msra.mxu0 %v3283
  %v3285 = vand.u32 %v3044, 4294901760
  %3286 = vmatpush.msra.mxu0 %v3285
  %v3287 = vand.u32 %v3043, 4294901760
  %3288 = vmatpush.msra.mxu0 %v3287
  %v3289 = vand.u32 %v3042, 4294901760
  %3290 = vmatpush.msra.mxu0 %v3289
  %v3291 = vand.u32 %v3041, 4294901760
  %3292 = vmatpush.msra.mxu0 %v3291
  %v3293 = vand.u32 %v3040, 4294901760
  %3294 = vmatpush.msra.mxu0 %v3293
  %v3295 = vand.u32 %v3039, 4294901760
  %3296 = vmatpush.msra.mxu0 %v3295
  %v3297 = vand.u32 %v3038, 4294901760
  %3298 = vmatpush.msra.mxu0 %v3297
  %v3299 = vand.u32 %v2648, 4294901760
  %v3300 = vsub.f32 %v2648, %v3299
  %v3301 = vand.u32 %v3300, 4294901760
  %3302 = vmatmul.f32.gmra.mxu0 %v3301
  %v3303 = vpop.f32.mrf.mxu0
  %v3304 = vadd.f32 %v3260, %v3303
  %v3305 = vand.u32 %v2649, 4294901760
  %v3306 = vsub.f32 %v2649, %v3305
  %v3307 = vand.u32 %v3306, 4294901760
  %3308 = vmatmul.f32.gmra.mxu0 %v3307
  %v3309 = vpop.f32.mrf.mxu0
  %v3310 = vadd.f32 %v3265, %v3309
  %3311 = vdwg.mxu0
  %v3312 = vand.u32 %v3053, 4294901760
  %v3313 = vsub.f32 %v3053, %v3312
  %v3314 = vand.u32 %v3313, 4294901760
  %3315 = vmatpush.msra.mxu0 %v3314
  %v3316 = vand.u32 %v3052, 4294901760
  %v3317 = vsub.f32 %v3052, %v3316
  %v3318 = vand.u32 %v3317, 4294901760
  %3319 = vmatpush.msra.mxu0 %v3318
  %v3320 = vand.u32 %v3051, 4294901760
  %v3321 = vsub.f32 %v3051, %v3320
  %v3322 = vand.u32 %v3321, 4294901760
  %3323 = vmatpush.msra.mxu0 %v3322
  %v3324 = vand.u32 %v3050, 4294901760
  %v3325 = vsub.f32 %v3050, %v3324
  %v3326 = vand.u32 %v3325, 4294901760
  %3327 = vmatpush.msra.mxu0 %v3326
  %v3328 = vand.u32 %v3049, 4294901760
  %v3329 = vsub.f32 %v3049, %v3328
  %v3330 = vand.u32 %v3329, 4294901760
  %3331 = vmatpush.msra.mxu0 %v3330
  %v3332 = vand.u32 %v3048, 4294901760
  %v3333 = vsub.f32 %v3048, %v3332
  %v3334 = vand.u32 %v3333, 4294901760
  %3335 = vmatpush.msra.mxu0 %v3334
  %v3336 = vand.u32 %v3047, 4294901760
  %v3337 = vsub.f32 %v3047, %v3336
  %v3338 = vand.u32 %v3337, 4294901760
  %3339 = vmatpush.msra.mxu0 %v3338
  %v3340 = vand.u32 %v3046, 4294901760
  %v3341 = vsub.f32 %v3046, %v3340
  %v3342 = vand.u32 %v3341, 4294901760
  %3343 = vmatpush.msra.mxu0 %v3342
  %v3344 = vand.u32 %v3045, 4294901760
  %v3345 = vsub.f32 %v3045, %v3344
  %v3346 = vand.u32 %v3345, 4294901760
  %3347 = vmatpush.msra.mxu0 %v3346
  %v3348 = vand.u32 %v3044, 4294901760
  %v3349 = vsub.f32 %v3044, %v3348
  %v3350 = vand.u32 %v3349, 4294901760
  %3351 = vmatpush.msra.mxu0 %v3350
  %v3352 = vand.u32 %v3043, 4294901760
  %v3353 = vsub.f32 %v3043, %v3352
  %v3354 = vand.u32 %v3353, 4294901760
  %3355 = vmatpush.msra.mxu0 %v3354
  %v3356 = vand.u32 %v3042, 4294901760
  %v3357 = vsub.f32 %v3042, %v3356
  %v3358 = vand.u32 %v3357, 4294901760
  %3359 = vmatpush.msra.mxu0 %v3358
  %v3360 = vand.u32 %v3041, 4294901760
  %v3361 = vsub.f32 %v3041, %v3360
  %v3362 = vand.u32 %v3361, 4294901760
  %3363 = vmatpush.msra.mxu0 %v3362
  %v3364 = vand.u32 %v3040, 4294901760
  %v3365 = vsub.f32 %v3040, %v3364
  %v3366 = vand.u32 %v3365, 4294901760
  %3367 = vmatpush.msra.mxu0 %v3366
  %v3368 = vand.u32 %v3039, 4294901760
  %v3369 = vsub.f32 %v3039, %v3368
  %v3370 = vand.u32 %v3369, 4294901760
  %3371 = vmatpush.msra.mxu0 %v3370
  %v3372 = vand.u32 %v3038, 4294901760
  %v3373 = vsub.f32 %v3038, %v3372
  %v3374 = vand.u32 %v3373, 4294901760
  %3375 = vmatpush.msra.mxu0 %v3374
  %v3376 = vand.u32 %v2648, 4294901760
  %3377 = vmatmul.f32.gmra.mxu0 %v3376
  %v3378 = vpop.f32.mrf.mxu0
  %v3379 = vadd.f32 %v3304, %v3378
  %v3380 = vand.u32 %v2649, 4294901760
  %3381 = vmatmul.f32.gmra.mxu0 %v3380
  %v3382 = vpop.f32.mrf.mxu0
  %v3383 = vadd.f32 %v3310, %v3382
  %3384 = vdwg.mxu0
  %v3385 = vand.u32 %v3053, 4294901760
  %3386 = vmatpush.msra.mxu0 %v3385
  %v3387 = vand.u32 %v3052, 4294901760
  %3388 = vmatpush.msra.mxu0 %v3387
  %v3389 = vand.u32 %v3051, 4294901760
  %3390 = vmatpush.msra.mxu0 %v3389
  %v3391 = vand.u32 %v3050, 4294901760
  %3392 = vmatpush.msra.mxu0 %v3391
  %v3393 = vand.u32 %v3049, 4294901760
  %3394 = vmatpush.msra.mxu0 %v3393
  %v3395 = vand.u32 %v3048, 4294901760
  %3396 = vmatpush.msra.mxu0 %v3395
  %v3397 = vand.u32 %v3047, 4294901760
  %3398 = vmatpush.msra.mxu0 %v3397
  %v3399 = vand.u32 %v3046, 4294901760
  %3400 = vmatpush.msra.mxu0 %v3399
  %v3401 = vand.u32 %v3045, 4294901760
  %3402 = vmatpush.msra.mxu0 %v3401
  %v3403 = vand.u32 %v3044, 4294901760
  %3404 = vmatpush.msra.mxu0 %v3403
  %v3405 = vand.u32 %v3043, 4294901760
  %3406 = vmatpush.msra.mxu0 %v3405
  %v3407 = vand.u32 %v3042, 4294901760
  %3408 = vmatpush.msra.mxu0 %v3407
  %v3409 = vand.u32 %v3041, 4294901760
  %3410 = vmatpush.msra.mxu0 %v3409
  %v3411 = vand.u32 %v3040, 4294901760
  %3412 = vmatpush.msra.mxu0 %v3411
  %v3413 = vand.u32 %v3039, 4294901760
  %3414 = vmatpush.msra.mxu0 %v3413
  %v3415 = vand.u32 %v3038, 4294901760
  %3416 = vmatpush.msra.mxu0 %v3415
  %v3417 = vand.u32 %v2648, 4294901760
  %3418 = vmatmul.f32.gmra.mxu0 %v3417
  %v3419 = vpop.f32.mrf.mxu0
  %v3420 = vadd.f32 %v3379, %v3419
  %v3421 = vand.u32 %v2649, 4294901760
  %3422 = vmatmul.f32.gmra.mxu0 %v3421
  %v3423 = vpop.f32.mrf.mxu0
  %v3424 = vadd.f32 %v3383, %v3423
  %3425 = vdwg.mxu0
  %v3426 = vmax.f32 %v3032, %v3420
  %v3427 = vmax.f32 %v3036, %v3424
  %3428 = vst [vmem:[%s18] sm:$0xff] %v3426
  %3429 = vst [vmem:[%s18 + $0x8] sm:$0xf] %v3427
  // Predicated region
  $region70: #{unet_down_block.1} parent=0 // pred_check
    _
  $region71: #{unet_down_block.1} parent=0 // pred_check_branch
    %3431 = sbr.rel (0) target = $region73
  $region72: #{unet_down_block.1} parent=0 // pred_region
    _
  $region73: #{unet_down_block.1} parent=0 // pred_fallthru
    _
  // Predicated region
  $region74: #{unet_down_block.1} parent=0 // pred_check
    _
  $region75: #{unet_down_block.1} parent=0 // pred_check_branch
    %3433 = sbr.rel (0) target = $region77
  $region76: #{unet_down_block.1} parent=0 // pred_region
    _
  $region77: #{unet_down_block.1} parent=0 // pred_fallthru
    _
  // Predicated region
  $region78: #{unet_down_block.1} parent=0 // pred_check
    _
  $region79: #{unet_down_block.1} parent=0 // pred_check_branch
    %3435 = sbr.rel (0) target = $region81
  $region80: #{unet_down_block.1} parent=0 // pred_region
    _
  $region81: #{unet_down_block.1} parent=0 // pred_fallthru
    _
  // Predicated region
  $region82: #{unet_down_block.1} parent=0 // pred_check
    _
  $region83: #{unet_down_block.1} parent=0 // pred_check_branch
    %3437 = sbr.rel (0) target = $region85
  $region84: #{unet_down_block.1} parent=0 // pred_region
    _
  $region85: #{unet_down_block.1} parent=0 // pred_fallthru
    _

</llo_original>
